<compile_context>
chip_gen: v5e
topology: v5e:2x2
jax: 0.10.0
libtpu: 0.0.40
codegen_flags: <defaults>
</compile_context>

<pallas_src>
import numpy as np

import jax
import jax.numpy as jnp
from jax.experimental import pallas as pl
from jax.experimental.pallas import tpu as pltpu


# ------------------------------- Pallas kernel ------------------------------- #

def _mnist_fused_kernel(x_ref,
                        te1_ref, to1_ref, bp1_ref, re1_ref, ro1_ref,
                        te2_ref, to2_ref, bp2_ref, re2_ref, ro2_ref,
                        w2_ref, b2_ref, w3_ref, b3_ref,
                        o_ref,
                        y1_ref, y2_ref):
    """Entire MNISTNet forward for one image.

    x_ref  : (1, 28, 28)            input image
    te*/to*: (3, Win*Cin, Wop*Cout) banded conv weights (even / odd conv columns)
    bp*    : (1, Wop*Cout)          conv bias tiled per pooled column
    re*/ro*: (Hop, Ho)              0/1 selectors of even / odd conv rows (height pool)
    w2_ref : (5, 320, 128)          fc2 weight split per pooled row (flatten absorbed)
    b2_ref : (1, 128)   w3_ref: (128, 10)   b3_ref: (1, 10)
    o_ref  : (1, 1, 10)             logits
    y1_ref : (13, 416) VMEM scratch (conv1 pooled map, (h, w*32+c) layout)
    y2_ref : (5, 320)  VMEM scratch (conv2 pooled map, (h, w*64+c) layout)
    """
    kh = te1_ref.shape[0]                                    # 3 (static)

    # ---------------- conv1 + bias + ReLU + 2x2 maxpool ---------------- #
    ho1 = re1_ref.shape[1]                                   # 26
    acc_e = jnp.zeros((ho1, te1_ref.shape[2]), jnp.float32)
    acc_o = jnp.zeros((ho1, to1_ref.shape[2]), jnp.float32)
    for dh in range(kh):                                     # static unroll
        xs = x_ref[0, dh:dh + ho1, :]                        # (26, 28), static slice
        acc_e += jnp.dot(xs, te1_ref[dh], preferred_element_type=jnp.float32)
        acc_o += jnp.dot(xs, to1_ref[dh], preferred_element_type=jnp.float32)
    b1 = bp1_ref[...]
    zw1 = jnp.maximum(jnp.maximum(acc_e + b1, 0.0),
                      jnp.maximum(acc_o + b1, 0.0))          # relu + width-pool, (26, 416)
    y1_ref[...] = jnp.maximum(                               # height-pool -> (13, 416)
        jnp.dot(re1_ref[...], zw1, preferred_element_type=jnp.float32),
        jnp.dot(ro1_ref[...], zw1, preferred_element_type=jnp.float32))

    # ---------------- conv2 + bias + ReLU + 2x2 maxpool ---------------- #
    ho2 = re2_ref.shape[1]                                   # 11
    acc_e = jnp.zeros((ho2, te2_ref.shape[2]), jnp.float32)
    acc_o = jnp.zeros((ho2, to2_ref.shape[2]), jnp.float32)
    for dh in range(kh):
        ys = y1_ref[dh:dh + ho2, :]                          # (11, 416), static slice
        acc_e += jnp.dot(ys, te2_ref[dh], preferred_element_type=jnp.float32)
        acc_o += jnp.dot(ys, to2_ref[dh], preferred_element_type=jnp.float32)
    b2c = bp2_ref[...]
    zw2 = jnp.maximum(jnp.maximum(acc_e + b2c, 0.0),
                      jnp.maximum(acc_o + b2c, 0.0))         # (11, 320)
    y2_ref[...] = jnp.maximum(                               # (5, 320)
        jnp.dot(re2_ref[...], zw2, preferred_element_type=jnp.float32),
        jnp.dot(ro2_ref[...], zw2, preferred_element_type=jnp.float32))

    # ---------------- flatten + fc2 + ReLU + fc3 ---------------- #
    hop2 = re2_ref.shape[0]                                  # 5 pooled rows
    h = b2_ref[...]                                          # (1, 128)
    for r in range(hop2):                                    # flatten folded into the sum
        h = h + jnp.dot(y2_ref[r:r + 1, :], w2_ref[r],
                        preferred_element_type=jnp.float32)
    h = jnp.maximum(h, 0.0)
    o_ref[0] = (jnp.dot(h, w3_ref[...], preferred_element_type=jnp.float32)
                + b3_ref[...]).astype(o_ref.dtype)


# ------------------------------- Forward wrapper ------------------------------ #

def mnist_net_forward(x_nchw, prep):
    n = x_nchw.shape[0]
    # Cin == 1, so the NCHW (N,1,28,28) buffer is already the (N, H, W*Cin) layout.
    x = x_nchw.reshape(n, 28, 28)
    c1, c2, fc = prep["conv1"], prep["conv2"], prep["fc"]

    hop1, wopc1 = c1["re"].shape[0], c1["te"].shape[2]       # 13, 416
    hop2, wopc2 = c2["re"].shape[0], c2["te"].shape[2]       # 5, 320
    n_out = fc["w3"].shape[1]                                # 10

    out = pl.pallas_call(
        _mnist_fused_kernel,
        out_shape=jax.ShapeDtypeStruct((n, 1, n_out), jnp.float32),
        grid=(n,),
        in_specs=[
            pl.BlockSpec((1, 28, 28), lambda i: (i, 0, 0)),          # one image per step
            pl.BlockSpec(c1["te"].shape, lambda i: (0, 0, 0)),       # weights: VMEM-resident
            pl.BlockSpec(c1["to"].shape, lambda i: (0, 0, 0)),
            pl.BlockSpec(c1["bp"].shape, lambda i: (0, 0)),
            pl.BlockSpec(c1["re"].shape, lambda i: (0, 0)),
            pl.BlockSpec(c1["ro"].shape, lambda i: (0, 0)),
            pl.BlockSpec(c2["te"].shape, lambda i: (0, 0, 0)),
            pl.BlockSpec(c2["to"].shape, lambda i: (0, 0, 0)),
            pl.BlockSpec(c2["bp"].shape, lambda i: (0, 0)),
            pl.BlockSpec(c2["re"].shape, lambda i: (0, 0)),
            pl.BlockSpec(c2["ro"].shape, lambda i: (0, 0)),
            pl.BlockSpec(fc["w2"].shape, lambda i: (0, 0, 0)),
            pl.BlockSpec(fc["b2"].shape, lambda i: (0, 0)),
            pl.BlockSpec(fc["w3"].shape, lambda i: (0, 0)),
            pl.BlockSpec(fc["b3"].shape, lambda i: (0, 0)),
        ],
        out_specs=pl.BlockSpec((1, 1, n_out), lambda i: (i, 0, 0)),
        scratch_shapes=[
            pltpu.VMEM((hop1, wopc1), jnp.float32),                  # conv1 pooled map
            pltpu.VMEM((hop2, wopc2), jnp.float32),                  # conv2 pooled map
        ],
        compiler_params=pltpu.CompilerParams(
            dimension_semantics=("parallel",),
            vmem_limit_bytes=32 << 20),
    )(x,
      c1["te"], c1["to"], c1["bp"], c1["re"], c1["ro"],
      c2["te"], c2["to"], c2["bp"], c2["re"], c2["ro"],
      fc["w2"], fc["b2"], fc["w3"], fc["b3"])
    return out.reshape(n, n_out)


# ----------------------- One-time parameter preprocessing ---------------------- #

def _pooled_toeplitz(w_oihw, w_in, parity):
    """Banded matrix mapping image rows to the parity-selected conv output columns.

    T[dh, wi*Cin + ci, j*Cout + co] = W[co, ci, dh, wi - (2j+parity)]   (0 <= . < KW)
    so that  sum_dh  x[h+dh, :] @ T[dh]  ==  conv(x)[h, 2j+parity, :]   for j < Wo//2.
    """
    cout, cin, kh, kw = w_oihw.shape
    wo = w_in - kw + 1
    wop = wo // 2
    t = np.zeros((kh, w_in * cin, wop * cout), np.float32)
    for dh in range(kh):
        for j in range(wop):
            for dw in range(kw):
                wi = 2 * j + parity + dw
                t[dh, wi * cin:(wi + 1) * cin, j * cout:(j + 1) * cout] = \
                    w_oihw[:, :, dh, dw].T
    return t


def _row_selector(ho, parity):
    hop = ho // 2
    r = np.zeros((hop, ho), np.float32)
    r[np.arange(hop), 2 * np.arange(hop) + parity] = 1.0
    return r


def _prep_conv(w_oihw, b, w_in):
    w = np.asarray(w_oihw, np.float32)
    cout, _, kh, _ = w.shape
    ho = w_in - kh + 1            # square images: Ho == Wo
    wop = ho // 2
    return dict(
        te=jnp.asarray(_pooled_toeplitz(w, w_in, 0)),
        to=jnp.asarray(_pooled_toeplitz(w, w_in, 1)),
        bp=jnp.asarray(np.tile(np.asarray(b, np.float32), wop).reshape(1, wop * cout)),
        re=jnp.asarray(_row_selector(ho, 0)),
        ro=jnp.asarray(_row_selector(ho, 1)),
    )


def prepare_params(params):
    """One-time weight-layout prep (hoisted out of the forward pass)."""
    conv1 = _prep_conv(params["w1"], params["b1"], 28)
    conv2 = _prep_conv(params["w2"], params["b2"], 13)

    # fc2: permute its 1600 input features from PyTorch's NCHW-flatten order (c*25+h*5+w)
    # to the (h, w, c) order of conv2's pooled map, transpose to (in, out), and split per
    # pooled row -> (5, 320, 128).  This absorbs Flatten entirely into the weight layout.
    idx = np.arange(5 * 5 * 64)
    h, rem = idx // 320, idx % 320
    w, c = rem // 64, rem % 64
    perm = c * 25 + h * 5 + w
    w_fc2 = np.asarray(params["w_fc2"], np.float32)[:, perm].T.reshape(5, 5 * 64, 128)
    w_fc3 = np.asarray(params["w_fc3"], np.float32).T              # (128, 10)
    fc = dict(
        w2=jnp.asarray(w_fc2),
        b2=jnp.asarray(params["b_fc2"], dtype=jnp.float32).reshape(1, -1),
        w3=jnp.asarray(w_fc3),
        b3=jnp.asarray(params["b_fc3"], dtype=jnp.float32).reshape(1, -1),
    )
    return dict(conv1=conv1, conv2=conv2, fc=fc)


# ----------------------------- Deterministic params ---------------------------- #

def init_params(key):
    def uni(k, shape, fan_in):
        bound = 1.0 / float(fan_in) ** 0.5
        return jax.random.uniform(k, shape, jnp.float32, -bound, bound)

    ks = jax.random.split(key, 8)
    return {
        "w1": uni(ks[0], (32, 1, 3, 3), 1 * 9),        # PyTorch OIHW
        "b1": uni(ks[1], (32,), 1 * 9),
        "w2": uni(ks[2], (64, 32, 3, 3), 32 * 9),
        "b2": uni(ks[3], (64,), 32 * 9),
        "w_fc2": uni(ks[4], (128, 1600), 1600),        # PyTorch (out, in)
        "b_fc2": uni(ks[5], (128,), 1600),
        "w_fc3": uni(ks[6], (10, 128), 128),
        "b_fc3": uni(ks[7], (10,), 128),
    }


# -------------------------------- Pure-JAX ref --------------------------------- #

def reference_forward(x_nchw, params):
    hp = jax.lax.Precision.HIGHEST
    dn = ("NCHW", "OIHW", "NCHW")
    y = jax.lax.conv_general_dilated(x_nchw, params["w1"], (1, 1), "VALID",
                                     dimension_numbers=dn, precision=hp)
    y = jax.nn.relu(y + params["b1"][None, :, None, None])
    y = jax.lax.reduce_window(y, -jnp.inf, jax.lax.max, (1, 1, 2, 2), (1, 1, 2, 2), "VALID")
    y = jax.lax.conv_general_dilated(y, params["w2"], (1, 1), "VALID",
                                     dimension_numbers=dn, precision=hp)
    y = jax.nn.relu(y + params["b2"][None, :, None, None])
    y = jax.lax.reduce_window(y, -jnp.inf, jax.lax.max, (1, 1, 2, 2), (1, 1, 2, 2), "VALID")
    flat = y.reshape(y.shape[0], -1)
    h = jax.nn.relu(jnp.dot(flat, params["w_fc2"].T, precision=hp) + params["b_fc2"])
    return jnp.dot(h, params["w_fc3"].T, precision=hp) + params["b_fc3"]


if __name__ == "__main__":
    key = jax.random.PRNGKey(0)
    pkey, xkey = jax.random.split(key)
    params = init_params(pkey)
    prep = prepare_params(params)     # one-time weight layout prep (hoisted)

    # MNIST-shaped input (28x28 is forced by fc2's 1600 = 64*5*5 input features).
    x = jax.random.normal(xkey, (2, 1, 28, 28), jnp.float32)

    fwd = jax.jit(mnist_net_forward)
    out = jax.block_until_ready(fwd(x, prep))
    ref = jax.block_until_ready(reference_forward(x, params))

    assert out.shape == (2, 10), out.shape
    assert jnp.allclose(out, ref, atol=2e-2, rtol=2e-2), (out, ref)
    print("KERNEL_OK")
</pallas_src>

<mosaic_0001>
module attributes {stable_mosaic.version = 11 : i64} {
  func.func @_mnist_fused_kernel(%arg0: i32, %arg1: memref<1x28x28xf32, #tpu.memory_space<vmem>>, %arg2: memref<3x28x416xf32, #tpu.memory_space<vmem>>, %arg3: memref<3x28x416xf32, #tpu.memory_space<vmem>>, %arg4: memref<1x416xf32, #tpu.memory_space<vmem>>, %arg5: memref<13x26xf32, #tpu.memory_space<vmem>>, %arg6: memref<13x26xf32, #tpu.memory_space<vmem>>, %arg7: memref<3x416x320xf32, #tpu.memory_space<vmem>>, %arg8: memref<3x416x320xf32, #tpu.memory_space<vmem>>, %arg9: memref<1x320xf32, #tpu.memory_space<vmem>>, %arg10: memref<5x11xf32, #tpu.memory_space<vmem>>, %arg11: memref<5x11xf32, #tpu.memory_space<vmem>>, %arg12: memref<5x320x128xf32, #tpu.memory_space<vmem>>, %arg13: memref<1x128xf32, #tpu.memory_space<vmem>>, %arg14: memref<128x10xf32, #tpu.memory_space<vmem>>, %arg15: memref<1x10xf32, #tpu.memory_space<vmem>>, %arg16: memref<1x1x10xf32, #tpu.memory_space<vmem>>, %arg17: memref<13x416xf32, #tpu.memory_space<vmem>>, %arg18: memref<5x320xf32, #tpu.memory_space<vmem>>) attributes {dimension_semantics = [#tpu.dimension_semantics<parallel>], iteration_bounds = array<i64: 2>, scalar_prefetch = 0 : i64, scratch_operands = 2 : i64, tpu.core_type = #tpu.core_type<tc>, window_params = [{transform_indices = @transform_0, window_bounds = array<i64: 1, 28, 28>}, {pipeline_mode = #tpu.pipeline_mode<synchronous>, transform_indices = @transform_1, window_bounds = array<i64: 3, 28, 416>}, {pipeline_mode = #tpu.pipeline_mode<synchronous>, transform_indices = @transform_2, window_bounds = array<i64: 3, 28, 416>}, {pipeline_mode = #tpu.pipeline_mode<synchronous>, transform_indices = @transform_3, window_bounds = array<i64: 1, 416>}, {pipeline_mode = #tpu.pipeline_mode<synchronous>, transform_indices = @transform_4, window_bounds = array<i64: 13, 26>}, {pipeline_mode = #tpu.pipeline_mode<synchronous>, transform_indices = @transform_5, window_bounds = array<i64: 13, 26>}, {pipeline_mode = #tpu.pipeline_mode<synchronous>, transform_indices = @transform_6, window_bounds = array<i64: 3, 416, 320>}, {pipeline_mode = #tpu.pipeline_mode<synchronous>, transform_indices = @transform_7, window_bounds = array<i64: 3, 416, 320>}, {pipeline_mode = #tpu.pipeline_mode<synchronous>, transform_indices = @transform_8, window_bounds = array<i64: 1, 320>}, {pipeline_mode = #tpu.pipeline_mode<synchronous>, transform_indices = @transform_9, window_bounds = array<i64: 5, 11>}, {pipeline_mode = #tpu.pipeline_mode<synchronous>, transform_indices = @transform_10, window_bounds = array<i64: 5, 11>}, {pipeline_mode = #tpu.pipeline_mode<synchronous>, transform_indices = @transform_11, window_bounds = array<i64: 5, 320, 128>}, {pipeline_mode = #tpu.pipeline_mode<synchronous>, transform_indices = @transform_12, window_bounds = array<i64: 1, 128>}, {pipeline_mode = #tpu.pipeline_mode<synchronous>, transform_indices = @transform_13, window_bounds = array<i64: 128, 10>}, {pipeline_mode = #tpu.pipeline_mode<synchronous>, transform_indices = @transform_14, window_bounds = array<i64: 1, 10>}, {transform_indices = @transform_15, window_bounds = array<i64: 1, 1, 10>}]} {
    %cst = arith.constant 0.000000e+00 : f32
    %0 = vector.broadcast %cst : f32 to vector<26x416xf32>
    %cst_0 = arith.constant 0.000000e+00 : f32
    %1 = vector.broadcast %cst_0 : f32 to vector<26x416xf32>
    %c0 = arith.constant 0 : index
    %c0_1 = arith.constant 0 : index
    %c0_2 = arith.constant 0 : index
    %2 = vector.load %arg1[%c0, %c0_1, %c0_2] : memref<1x28x28xf32, #tpu.memory_space<vmem>>, vector<1x26x28xf32>
    %3 = vector.shape_cast %2 : vector<1x26x28xf32> to vector<26x28xf32>
    %c0_3 = arith.constant 0 : index
    %c0_4 = arith.constant 0 : index
    %c0_5 = arith.constant 0 : index
    %4 = vector.load %arg2[%c0_3, %c0_4, %c0_5] : memref<3x28x416xf32, #tpu.memory_space<vmem>>, vector<1x28x416xf32>
    %5 = vector.shape_cast %4 : vector<1x28x416xf32> to vector<28x416xf32>
    %cst_6 = arith.constant dense<0.000000e+00> : vector<26x416xf32>
    %6 = tpu.matmul %3, %5, %cst_6 {dimension_numbers = #tpu.dot_dimension_numbers<[1], [0], [0], [1], [0, 0, 1, 1], [], []>} : vector<26x28xf32>, vector<28x416xf32>, vector<26x416xf32> -> vector<26x416xf32>
    %7 = arith.addf %0, %6 : vector<26x416xf32>
    %c0_7 = arith.constant 0 : index
    %c0_8 = arith.constant 0 : index
    %c0_9 = arith.constant 0 : index
    %8 = vector.load %arg3[%c0_7, %c0_8, %c0_9] : memref<3x28x416xf32, #tpu.memory_space<vmem>>, vector<1x28x416xf32>
    %9 = vector.shape_cast %8 : vector<1x28x416xf32> to vector<28x416xf32>
    %cst_10 = arith.constant dense<0.000000e+00> : vector<26x416xf32>
    %10 = tpu.matmul %3, %9, %cst_10 {dimension_numbers = #tpu.dot_dimension_numbers<[1], [0], [0], [1], [0, 0, 1, 1], [], []>} : vector<26x28xf32>, vector<28x416xf32>, vector<26x416xf32> -> vector<26x416xf32>
    %11 = arith.addf %1, %10 : vector<26x416xf32>
    %c0_11 = arith.constant 0 : index
    %c1 = arith.constant 1 : index
    %c0_12 = arith.constant 0 : index
    %12 = vector.load %arg1[%c0_11, %c1, %c0_12] : memref<1x28x28xf32, #tpu.memory_space<vmem>>, vector<1x26x28xf32>
    %13 = vector.shape_cast %12 : vector<1x26x28xf32> to vector<26x28xf32>
    %c1_13 = arith.constant 1 : index
    %c0_14 = arith.constant 0 : index
    %c0_15 = arith.constant 0 : index
    %14 = vector.load %arg2[%c1_13, %c0_14, %c0_15] : memref<3x28x416xf32, #tpu.memory_space<vmem>>, vector<1x28x416xf32>
    %15 = vector.shape_cast %14 : vector<1x28x416xf32> to vector<28x416xf32>
    %cst_16 = arith.constant dense<0.000000e+00> : vector<26x416xf32>
    %16 = tpu.matmul %13, %15, %cst_16 {dimension_numbers = #tpu.dot_dimension_numbers<[1], [0], [0], [1], [0, 0, 1, 1], [], []>} : vector<26x28xf32>, vector<28x416xf32>, vector<26x416xf32> -> vector<26x416xf32>
    %17 = arith.addf %7, %16 : vector<26x416xf32>
    %c1_17 = arith.constant 1 : index
    %c0_18 = arith.constant 0 : index
    %c0_19 = arith.constant 0 : index
    %18 = vector.load %arg3[%c1_17, %c0_18, %c0_19] : memref<3x28x416xf32, #tpu.memory_space<vmem>>, vector<1x28x416xf32>
    %19 = vector.shape_cast %18 : vector<1x28x416xf32> to vector<28x416xf32>
    %cst_20 = arith.constant dense<0.000000e+00> : vector<26x416xf32>
    %20 = tpu.matmul %13, %19, %cst_20 {dimension_numbers = #tpu.dot_dimension_numbers<[1], [0], [0], [1], [0, 0, 1, 1], [], []>} : vector<26x28xf32>, vector<28x416xf32>, vector<26x416xf32> -> vector<26x416xf32>
    %21 = arith.addf %11, %20 : vector<26x416xf32>
    %c0_21 = arith.constant 0 : index
    %c2 = arith.constant 2 : index
    %c0_22 = arith.constant 0 : index
    %22 = vector.load %arg1[%c0_21, %c2, %c0_22] : memref<1x28x28xf32, #tpu.memory_space<vmem>>, vector<1x26x28xf32>
    %23 = vector.shape_cast %22 : vector<1x26x28xf32> to vector<26x28xf32>
    %c2_23 = arith.constant 2 : index
    %c0_24 = arith.constant 0 : index
    %c0_25 = arith.constant 0 : index
    %24 = vector.load %arg2[%c2_23, %c0_24, %c0_25] : memref<3x28x416xf32, #tpu.memory_space<vmem>>, vector<1x28x416xf32>
    %25 = vector.shape_cast %24 : vector<1x28x416xf32> to vector<28x416xf32>
    %cst_26 = arith.constant dense<0.000000e+00> : vector<26x416xf32>
    %26 = tpu.matmul %23, %25, %cst_26 {dimension_numbers = #tpu.dot_dimension_numbers<[1], [0], [0], [1], [0, 0, 1, 1], [], []>} : vector<26x28xf32>, vector<28x416xf32>, vector<26x416xf32> -> vector<26x416xf32>
    %27 = arith.addf %17, %26 : vector<26x416xf32>
    %c2_27 = arith.constant 2 : index
    %c0_28 = arith.constant 0 : index
    %c0_29 = arith.constant 0 : index
    %28 = vector.load %arg3[%c2_27, %c0_28, %c0_29] : memref<3x28x416xf32, #tpu.memory_space<vmem>>, vector<1x28x416xf32>
    %29 = vector.shape_cast %28 : vector<1x28x416xf32> to vector<28x416xf32>
    %cst_30 = arith.constant dense<0.000000e+00> : vector<26x416xf32>
    %30 = tpu.matmul %23, %29, %cst_30 {dimension_numbers = #tpu.dot_dimension_numbers<[1], [0], [0], [1], [0, 0, 1, 1], [], []>} : vector<26x28xf32>, vector<28x416xf32>, vector<26x416xf32> -> vector<26x416xf32>
    %31 = arith.addf %21, %30 : vector<26x416xf32>
    %c0_31 = arith.constant 0 : index
    %c0_32 = arith.constant 0 : index
    %32 = vector.load %arg4[%c0_31, %c0_32] : memref<1x416xf32, #tpu.memory_space<vmem>>, vector<1x416xf32>
    %33 = vector.broadcast %32 : vector<1x416xf32> to vector<26x416xf32>
    %34 = arith.addf %27, %33 : vector<26x416xf32>
    %cst_33 = arith.constant 0.000000e+00 : f32
    %35 = vector.broadcast %cst_33 : f32 to vector<26x416xf32>
    %36 = arith.maximumf %34, %35 : vector<26x416xf32>
    %37 = vector.broadcast %32 : vector<1x416xf32> to vector<26x416xf32>
    %38 = arith.addf %31, %37 : vector<26x416xf32>
    %cst_34 = arith.constant 0.000000e+00 : f32
    %39 = vector.broadcast %cst_34 : f32 to vector<26x416xf32>
    %40 = arith.maximumf %38, %39 : vector<26x416xf32>
    %41 = arith.maximumf %36, %40 : vector<26x416xf32>
    %c0_35 = arith.constant 0 : index
    %c0_36 = arith.constant 0 : index
    %42 = vector.load %arg5[%c0_35, %c0_36] : memref<13x26xf32, #tpu.memory_space<vmem>>, vector<13x26xf32>
    %cst_37 = arith.constant dense<0.000000e+00> : vector<13x416xf32>
    %43 = tpu.matmul %42, %41, %cst_37 {dimension_numbers = #tpu.dot_dimension_numbers<[1], [0], [0], [1], [0, 0, 1, 1], [], []>} : vector<13x26xf32>, vector<26x416xf32>, vector<13x416xf32> -> vector<13x416xf32>
    %c0_38 = arith.constant 0 : index
    %c0_39 = arith.constant 0 : index
    %44 = vector.load %arg6[%c0_38, %c0_39] : memref<13x26xf32, #tpu.memory_space<vmem>>, vector<13x26xf32>
    %cst_40 = arith.constant dense<0.000000e+00> : vector<13x416xf32>
    %45 = tpu.matmul %44, %41, %cst_40 {dimension_numbers = #tpu.dot_dimension_numbers<[1], [0], [0], [1], [0, 0, 1, 1], [], []>} : vector<13x26xf32>, vector<26x416xf32>, vector<13x416xf32> -> vector<13x416xf32>
    %46 = arith.maximumf %43, %45 : vector<13x416xf32>
    %c0_41 = arith.constant 0 : index
    %c0_42 = arith.constant 0 : index
    %47 = vector.load %arg17[%c0_41, %c0_42] : memref<13x416xf32, #tpu.memory_space<vmem>>, vector<13x416xf32>
    tpu.vector_store %arg17[%c0_41, %c0_42], %46 {strides = array<i32>} : memref<13x416xf32, #tpu.memory_space<vmem>>, vector<13x416xf32>,
    %cst_43 = arith.constant 0.000000e+00 : f32
    %48 = vector.broadcast %cst_43 : f32 to vector<11x320xf32>
    %cst_44 = arith.constant 0.000000e+00 : f32
    %49 = vector.broadcast %cst_44 : f32 to vector<11x320xf32>
    %c0_45 = arith.constant 0 : index
    %c0_46 = arith.constant 0 : index
    %50 = vector.load %arg17[%c0_45, %c0_46] : memref<13x416xf32, #tpu.memory_space<vmem>>, vector<11x416xf32>
    %c0_47 = arith.constant 0 : index
    %c0_48 = arith.constant 0 : index
    %c0_49 = arith.constant 0 : index
    %51 = vector.load %arg7[%c0_47, %c0_48, %c0_49] : memref<3x416x320xf32, #tpu.memory_space<vmem>>, vector<1x416x320xf32>
    %52 = vector.shape_cast %51 : vector<1x416x320xf32> to vector<416x320xf32>
    %cst_50 = arith.constant dense<0.000000e+00> : vector<11x320xf32>
    %53 = tpu.matmul %50, %52, %cst_50 {dimension_numbers = #tpu.dot_dimension_numbers<[1], [0], [0], [1], [0, 0, 1, 1], [], []>} : vector<11x416xf32>, vector<416x320xf32>, vector<11x320xf32> -> vector<11x320xf32>
    %54 = arith.addf %48, %53 : vector<11x320xf32>
    %c0_51 = arith.constant 0 : index
    %c0_52 = arith.constant 0 : index
    %c0_53 = arith.constant 0 : index
    %55 = vector.load %arg8[%c0_51, %c0_52, %c0_53] : memref<3x416x320xf32, #tpu.memory_space<vmem>>, vector<1x416x320xf32>
    %56 = vector.shape_cast %55 : vector<1x416x320xf32> to vector<416x320xf32>
    %cst_54 = arith.constant dense<0.000000e+00> : vector<11x320xf32>
    %57 = tpu.matmul %50, %56, %cst_54 {dimension_numbers = #tpu.dot_dimension_numbers<[1], [0], [0], [1], [0, 0, 1, 1], [], []>} : vector<11x416xf32>, vector<416x320xf32>, vector<11x320xf32> -> vector<11x320xf32>
    %58 = arith.addf %49, %57 : vector<11x320xf32>
    %c1_55 = arith.constant 1 : index
    %c0_56 = arith.constant 0 : index
    %59 = vector.load %arg17[%c1_55, %c0_56] : memref<13x416xf32, #tpu.memory_space<vmem>>, vector<11x416xf32>
    %c1_57 = arith.constant 1 : index
    %c0_58 = arith.constant 0 : index
    %c0_59 = arith.constant 0 : index
    %60 = vector.load %arg7[%c1_57, %c0_58, %c0_59] : memref<3x416x320xf32, #tpu.memory_space<vmem>>, vector<1x416x320xf32>
    %61 = vector.shape_cast %60 : vector<1x416x320xf32> to vector<416x320xf32>
    %cst_60 = arith.constant dense<0.000000e+00> : vector<11x320xf32>
    %62 = tpu.matmul %59, %61, %cst_60 {dimension_numbers = #tpu.dot_dimension_numbers<[1], [0], [0], [1], [0, 0, 1, 1], [], []>} : vector<11x416xf32>, vector<416x320xf32>, vector<11x320xf32> -> vector<11x320xf32>
    %63 = arith.addf %54, %62 : vector<11x320xf32>
    %c1_61 = arith.constant 1 : index
    %c0_62 = arith.constant 0 : index
    %c0_63 = arith.constant 0 : index
    %64 = vector.load %arg8[%c1_61, %c0_62, %c0_63] : memref<3x416x320xf32, #tpu.memory_space<vmem>>, vector<1x416x320xf32>
    %65 = vector.shape_cast %64 : vector<1x416x320xf32> to vector<416x320xf32>
    %cst_64 = arith.constant dense<0.000000e+00> : vector<11x320xf32>
    %66 = tpu.matmul %59, %65, %cst_64 {dimension_numbers = #tpu.dot_dimension_numbers<[1], [0], [0], [1], [0, 0, 1, 1], [], []>} : vector<11x416xf32>, vector<416x320xf32>, vector<11x320xf32> -> vector<11x320xf32>
    %67 = arith.addf %58, %66 : vector<11x320xf32>
    %c2_65 = arith.constant 2 : index
    %c0_66 = arith.constant 0 : index
    %68 = vector.load %arg17[%c2_65, %c0_66] : memref<13x416xf32, #tpu.memory_space<vmem>>, vector<11x416xf32>
    %c2_67 = arith.constant 2 : index
    %c0_68 = arith.constant 0 : index
    %c0_69 = arith.constant 0 : index
    %69 = vector.load %arg7[%c2_67, %c0_68, %c0_69] : memref<3x416x320xf32, #tpu.memory_space<vmem>>, vector<1x416x320xf32>
    %70 = vector.shape_cast %69 : vector<1x416x320xf32> to vector<416x320xf32>
    %cst_70 = arith.constant dense<0.000000e+00> : vector<11x320xf32>
    %71 = tpu.matmul %68, %70, %cst_70 {dimension_numbers = #tpu.dot_dimension_numbers<[1], [0], [0], [1], [0, 0, 1, 1], [], []>} : vector<11x416xf32>, vector<416x320xf32>, vector<11x320xf32> -> vector<11x320xf32>
    %72 = arith.addf %63, %71 : vector<11x320xf32>
    %c2_71 = arith.constant 2 : index
    %c0_72 = arith.constant 0 : index
    %c0_73 = arith.constant 0 : index
    %73 = vector.load %arg8[%c2_71, %c0_72, %c0_73] : memref<3x416x320xf32, #tpu.memory_space<vmem>>, vector<1x416x320xf32>
    %74 = vector.shape_cast %73 : vector<1x416x320xf32> to vector<416x320xf32>
    %cst_74 = arith.constant dense<0.000000e+00> : vector<11x320xf32>
    %75 = tpu.matmul %68, %74, %cst_74 {dimension_numbers = #tpu.dot_dimension_numbers<[1], [0], [0], [1], [0, 0, 1, 1], [], []>} : vector<11x416xf32>, vector<416x320xf32>, vector<11x320xf32> -> vector<11x320xf32>
    %76 = arith.addf %67, %75 : vector<11x320xf32>
    %c0_75 = arith.constant 0 : index
    %c0_76 = arith.constant 0 : index
    %77 = vector.load %arg9[%c0_75, %c0_76] : memref<1x320xf32, #tpu.memory_space<vmem>>, vector<1x320xf32>
    %78 = vector.broadcast %77 : vector<1x320xf32> to vector<11x320xf32>
    %79 = arith.addf %72, %78 : vector<11x320xf32>
    %cst_77 = arith.constant 0.000000e+00 : f32
    %80 = vector.broadcast %cst_77 : f32 to vector<11x320xf32>
    %81 = arith.maximumf %79, %80 : vector<11x320xf32>
    %82 = vector.broadcast %77 : vector<1x320xf32> to vector<11x320xf32>
    %83 = arith.addf %76, %82 : vector<11x320xf32>
    %cst_78 = arith.constant 0.000000e+00 : f32
    %84 = vector.broadcast %cst_78 : f32 to vector<11x320xf32>
    %85 = arith.maximumf %83, %84 : vector<11x320xf32>
    %86 = arith.maximumf %81, %85 : vector<11x320xf32>
    %c0_79 = arith.constant 0 : index
    %c0_80 = arith.constant 0 : index
    %87 = vector.load %arg10[%c0_79, %c0_80] : memref<5x11xf32, #tpu.memory_space<vmem>>, vector<5x11xf32>
    %cst_81 = arith.constant dense<0.000000e+00> : vector<5x320xf32>
    %88 = tpu.matmul %87, %86, %cst_81 {dimension_numbers = #tpu.dot_dimension_numbers<[1], [0], [0], [1], [0, 0, 1, 1], [], []>} : vector<5x11xf32>, vector<11x320xf32>, vector<5x320xf32> -> vector<5x320xf32>
    %c0_82 = arith.constant 0 : index
    %c0_83 = arith.constant 0 : index
    %89 = vector.load %arg11[%c0_82, %c0_83] : memref<5x11xf32, #tpu.memory_space<vmem>>, vector<5x11xf32>
    %cst_84 = arith.constant dense<0.000000e+00> : vector<5x320xf32>
    %90 = tpu.matmul %89, %86, %cst_84 {dimension_numbers = #tpu.dot_dimension_numbers<[1], [0], [0], [1], [0, 0, 1, 1], [], []>} : vector<5x11xf32>, vector<11x320xf32>, vector<5x320xf32> -> vector<5x320xf32>
    %91 = arith.maximumf %88, %90 : vector<5x320xf32>
    %c0_85 = arith.constant 0 : index
    %c0_86 = arith.constant 0 : index
    %92 = vector.load %arg18[%c0_85, %c0_86] : memref<5x320xf32, #tpu.memory_space<vmem>>, vector<5x320xf32>
    tpu.vector_store %arg18[%c0_85, %c0_86], %91 {strides = array<i32>} : memref<5x320xf32, #tpu.memory_space<vmem>>, vector<5x320xf32>,
    %c0_87 = arith.constant 0 : index
    %c0_88 = arith.constant 0 : index
    %93 = vector.load %arg13[%c0_87, %c0_88] : memref<1x128xf32, #tpu.memory_space<vmem>>, vector<1x128xf32>
    %c0_89 = arith.constant 0 : index
    %c0_90 = arith.constant 0 : index
    %94 = vector.load %arg18[%c0_89, %c0_90] : memref<5x320xf32, #tpu.memory_space<vmem>>, vector<1x320xf32>
    %c0_91 = arith.constant 0 : index
    %c0_92 = arith.constant 0 : index
    %c0_93 = arith.constant 0 : index
    %95 = vector.load %arg12[%c0_91, %c0_92, %c0_93] : memref<5x320x128xf32, #tpu.memory_space<vmem>>, vector<1x320x128xf32>
    %96 = vector.shape_cast %95 : vector<1x320x128xf32> to vector<320x128xf32>
    %cst_94 = arith.constant dense<0.000000e+00> : vector<1x128xf32>
    %97 = tpu.matmul %94, %96, %cst_94 {dimension_numbers = #tpu.dot_dimension_numbers<[1], [0], [0], [1], [0, 0, 1, 1], [], []>} : vector<1x320xf32>, vector<320x128xf32>, vector<1x128xf32> -> vector<1x128xf32>
    %98 = arith.addf %93, %97 : vector<1x128xf32>
    %c1_95 = arith.constant 1 : index
    %c0_96 = arith.constant 0 : index
    %99 = vector.load %arg18[%c1_95, %c0_96] : memref<5x320xf32, #tpu.memory_space<vmem>>, vector<1x320xf32>
    %c1_97 = arith.constant 1 : index
    %c0_98 = arith.constant 0 : index
    %c0_99 = arith.constant 0 : index
    %100 = vector.load %arg12[%c1_97, %c0_98, %c0_99] : memref<5x320x128xf32, #tpu.memory_space<vmem>>, vector<1x320x128xf32>
    %101 = vector.shape_cast %100 : vector<1x320x128xf32> to vector<320x128xf32>
    %cst_100 = arith.constant dense<0.000000e+00> : vector<1x128xf32>
    %102 = tpu.matmul %99, %101, %cst_100 {dimension_numbers = #tpu.dot_dimension_numbers<[1], [0], [0], [1], [0, 0, 1, 1], [], []>} : vector<1x320xf32>, vector<320x128xf32>, vector<1x128xf32> -> vector<1x128xf32>
    %103 = arith.addf %98, %102 : vector<1x128xf32>
    %c2_101 = arith.constant 2 : index
    %c0_102 = arith.constant 0 : index
    %104 = vector.load %arg18[%c2_101, %c0_102] : memref<5x320xf32, #tpu.memory_space<vmem>>, vector<1x320xf32>
    %c2_103 = arith.constant 2 : index
    %c0_104 = arith.constant 0 : index
    %c0_105 = arith.constant 0 : index
    %105 = vector.load %arg12[%c2_103, %c0_104, %c0_105] : memref<5x320x128xf32, #tpu.memory_space<vmem>>, vector<1x320x128xf32>
    %106 = vector.shape_cast %105 : vector<1x320x128xf32> to vector<320x128xf32>
    %cst_106 = arith.constant dense<0.000000e+00> : vector<1x128xf32>
    %107 = tpu.matmul %104, %106, %cst_106 {dimension_numbers = #tpu.dot_dimension_numbers<[1], [0], [0], [1], [0, 0, 1, 1], [], []>} : vector<1x320xf32>, vector<320x128xf32>, vector<1x128xf32> -> vector<1x128xf32>
    %108 = arith.addf %103, %107 : vector<1x128xf32>
    %c3 = arith.constant 3 : index
    %c0_107 = arith.constant 0 : index
    %109 = vector.load %arg18[%c3, %c0_107] : memref<5x320xf32, #tpu.memory_space<vmem>>, vector<1x320xf32>
    %c3_108 = arith.constant 3 : index
    %c0_109 = arith.constant 0 : index
    %c0_110 = arith.constant 0 : index
    %110 = vector.load %arg12[%c3_108, %c0_109, %c0_110] : memref<5x320x128xf32, #tpu.memory_space<vmem>>, vector<1x320x128xf32>
    %111 = vector.shape_cast %110 : vector<1x320x128xf32> to vector<320x128xf32>
    %cst_111 = arith.constant dense<0.000000e+00> : vector<1x128xf32>
    %112 = tpu.matmul %109, %111, %cst_111 {dimension_numbers = #tpu.dot_dimension_numbers<[1], [0], [0], [1], [0, 0, 1, 1], [], []>} : vector<1x320xf32>, vector<320x128xf32>, vector<1x128xf32> -> vector<1x128xf32>
    %113 = arith.addf %108, %112 : vector<1x128xf32>
    %c4 = arith.constant 4 : index
    %c0_112 = arith.constant 0 : index
    %114 = vector.load %arg18[%c4, %c0_112] : memref<5x320xf32, #tpu.memory_space<vmem>>, vector<1x320xf32>
    %c4_113 = arith.constant 4 : index
    %c0_114 = arith.constant 0 : index
    %c0_115 = arith.constant 0 : index
    %115 = vector.load %arg12[%c4_113, %c0_114, %c0_115] : memref<5x320x128xf32, #tpu.memory_space<vmem>>, vector<1x320x128xf32>
    %116 = vector.shape_cast %115 : vector<1x320x128xf32> to vector<320x128xf32>
    %cst_116 = arith.constant dense<0.000000e+00> : vector<1x128xf32>
    %117 = tpu.matmul %114, %116, %cst_116 {dimension_numbers = #tpu.dot_dimension_numbers<[1], [0], [0], [1], [0, 0, 1, 1], [], []>} : vector<1x320xf32>, vector<320x128xf32>, vector<1x128xf32> -> vector<1x128xf32>
    %118 = arith.addf %113, %117 : vector<1x128xf32>
    %cst_117 = arith.constant 0.000000e+00 : f32
    %119 = vector.broadcast %cst_117 : f32 to vector<1x128xf32>
    %120 = arith.maximumf %118, %119 : vector<1x128xf32>
    %c0_118 = arith.constant 0 : index
    %c0_119 = arith.constant 0 : index
    %121 = vector.load %arg14[%c0_118, %c0_119] : memref<128x10xf32, #tpu.memory_space<vmem>>, vector<128x10xf32>
    %cst_120 = arith.constant dense<0.000000e+00> : vector<1x10xf32>
    %122 = tpu.matmul %120, %121, %cst_120 {dimension_numbers = #tpu.dot_dimension_numbers<[1], [0], [0], [1], [0, 0, 1, 1], [], []>} : vector<1x128xf32>, vector<128x10xf32>, vector<1x10xf32> -> vector<1x10xf32>
    %c0_121 = arith.constant 0 : index
    %c0_122 = arith.constant 0 : index
    %123 = vector.load %arg15[%c0_121, %c0_122] : memref<1x10xf32, #tpu.memory_space<vmem>>, vector<1x10xf32>
    %124 = arith.addf %122, %123 : vector<1x10xf32>
    %c0_123 = arith.constant 0 : index
    %c0_124 = arith.constant 0 : index
    %c0_125 = arith.constant 0 : index
    %125 = vector.load %arg16[%c0_123, %c0_124, %c0_125] : memref<1x1x10xf32, #tpu.memory_space<vmem>>, vector<1x1x10xf32>
    %126 = vector.shape_cast %125 : vector<1x1x10xf32> to vector<1x10xf32>
    %127 = vector.shape_cast %124 : vector<1x10xf32> to vector<1x1x10xf32>
    tpu.vector_store %arg16[%c0_123, %c0_124, %c0_125], %127 {strides = array<i32>} : memref<1x1x10xf32, #tpu.memory_space<vmem>>, vector<1x1x10xf32>,
    return
  }
  func.func @transform_0(%arg0: i32) -> (i32, i32, i32) {
    %c0_i32 = arith.constant 0 : i32
    %c0_i32_0 = arith.constant 0 : i32
    %c0_i32_1 = arith.constant 0 : i32
    return %arg0, %c0_i32, %c0_i32_0 : i32, i32, i32
  }
  func.func @transform_1(%arg0: i32) -> (i32, i32, i32) {
    %c0_i32 = arith.constant 0 : i32
    %c0_i32_0 = arith.constant 0 : i32
    %c0_i32_1 = arith.constant 0 : i32
    %c0_i32_2 = arith.constant 0 : i32
    return %c0_i32, %c0_i32_0, %c0_i32_1 : i32, i32, i32
  }
  func.func @transform_2(%arg0: i32) -> (i32, i32, i32) {
    %c0_i32 = arith.constant 0 : i32
    %c0_i32_0 = arith.constant 0 : i32
    %c0_i32_1 = arith.constant 0 : i32
    %c0_i32_2 = arith.constant 0 : i32
    return %c0_i32, %c0_i32_0, %c0_i32_1 : i32, i32, i32
  }
  func.func @transform_3(%arg0: i32) -> (i32, i32) {
    %c0_i32 = arith.constant 0 : i32
    %c0_i32_0 = arith.constant 0 : i32
    %c0_i32_1 = arith.constant 0 : i32
    return %c0_i32, %c0_i32_0 : i32, i32
  }
  func.func @transform_4(%arg0: i32) -> (i32, i32) {
    %c0_i32 = arith.constant 0 : i32
    %c0_i32_0 = arith.constant 0 : i32
    %c0_i32_1 = arith.constant 0 : i32
    return %c0_i32, %c0_i32_0 : i32, i32
  }
  func.func @transform_5(%arg0: i32) -> (i32, i32) {
    %c0_i32 = arith.constant 0 : i32
    %c0_i32_0 = arith.constant 0 : i32
    %c0_i32_1 = arith.constant 0 : i32
    return %c0_i32, %c0_i32_0 : i32, i32
  }
  func.func @transform_6(%arg0: i32) -> (i32, i32, i32) {
    %c0_i32 = arith.constant 0 : i32
    %c0_i32_0 = arith.constant 0 : i32
    %c0_i32_1 = arith.constant 0 : i32
    %c0_i32_2 = arith.constant 0 : i32
    return %c0_i32, %c0_i32_0, %c0_i32_1 : i32, i32, i32
  }
  func.func @transform_7(%arg0: i32) -> (i32, i32, i32) {
    %c0_i32 = arith.constant 0 : i32
    %c0_i32_0 = arith.constant 0 : i32
    %c0_i32_1 = arith.constant 0 : i32
    %c0_i32_2 = arith.constant 0 : i32
    return %c0_i32, %c0_i32_0, %c0_i32_1 : i32, i32, i32
  }
  func.func @transform_8(%arg0: i32) -> (i32, i32) {
    %c0_i32 = arith.constant 0 : i32
    %c0_i32_0 = arith.constant 0 : i32
    %c0_i32_1 = arith.constant 0 : i32
    return %c0_i32, %c0_i32_0 : i32, i32
  }
  func.func @transform_9(%arg0: i32) -> (i32, i32) {
    %c0_i32 = arith.constant 0 : i32
    %c0_i32_0 = arith.constant 0 : i32
    %c0_i32_1 = arith.constant 0 : i32
    return %c0_i32, %c0_i32_0 : i32, i32
  }
  func.func @transform_10(%arg0: i32) -> (i32, i32) {
    %c0_i32 = arith.constant 0 : i32
    %c0_i32_0 = arith.constant 0 : i32
    %c0_i32_1 = arith.constant 0 : i32
    return %c0_i32, %c0_i32_0 : i32, i32
  }
  func.func @transform_11(%arg0: i32) -> (i32, i32, i32) {
    %c0_i32 = arith.constant 0 : i32
    %c0_i32_0 = arith.constant 0 : i32
    %c0_i32_1 = arith.constant 0 : i32
    %c0_i32_2 = arith.constant 0 : i32
    return %c0_i32, %c0_i32_0, %c0_i32_1 : i32, i32, i32
  }
  func.func @transform_12(%arg0: i32) -> (i32, i32) {
    %c0_i32 = arith.constant 0 : i32
    %c0_i32_0 = arith.constant 0 : i32
    %c0_i32_1 = arith.constant 0 : i32
    return %c0_i32, %c0_i32_0 : i32, i32
  }
  func.func @transform_13(%arg0: i32) -> (i32, i32) {
    %c0_i32 = arith.constant 0 : i32
    %c0_i32_0 = arith.constant 0 : i32
    %c0_i32_1 = arith.constant 0 : i32
    return %c0_i32, %c0_i32_0 : i32, i32
  }
  func.func @transform_14(%arg0: i32) -> (i32, i32) {
    %c0_i32 = arith.constant 0 : i32
    %c0_i32_0 = arith.constant 0 : i32
    %c0_i32_1 = arith.constant 0 : i32
    return %c0_i32, %c0_i32_0 : i32, i32
  }
  func.func @transform_15(%arg0: i32) -> (i32, i32, i32) {
    %c0_i32 = arith.constant 0 : i32
    %c0_i32_0 = arith.constant 0 : i32
    %c0_i32_1 = arith.constant 0 : i32
    return %arg0, %c0_i32, %c0_i32_0 : i32, i32, i32
  }
}

</mosaic_0001>

<llo_original>
// kernel: mnist_net_forward.1
$region0: #{mnist_net_forward.1}
  #allocation0 [shape = 'u32[]', space=smem, size = 0x4, offset = 0x4, fixed_abs, tag = 'smem constant byte address 0x4 - core index']
  #allocation1 [shape = 'u32[72,128]{1,0:T(1,128)}', space=vmem, size = 0x9000, scoped, tag = 'internal scratch']
  #allocation2 [shape = 'f32[13,416]{1,0:T(8,128)}', space=vmem, size = 0x8000, scoped, tag = 'scratch operand']
  #allocation3 [shape = 'f32[5,320]{1,0:T(8,128)}', space=vmem, size = 0x3000, scoped, tag = 'scratch operand']
  %s0 = inlined_call_operand.vmem [shape: f32[2,28,28], index: 0, kind: input, shape index: {}]
  %s1 = inlined_call_operand.hbm [shape: f32[3,28,416], index: 1, kind: input, shape index: {}]
  %s2 = inlined_call_operand.hbm [shape: f32[3,28,416], index: 2, kind: input, shape index: {}]
  %s3 = inlined_call_operand.hbm [shape: f32[1,416], index: 3, kind: input, shape index: {}]
  %s4 = inlined_call_operand.hbm [shape: f32[13,26], index: 4, kind: input, shape index: {}]
  %s5 = inlined_call_operand.hbm [shape: f32[13,26], index: 5, kind: input, shape index: {}]
  %s6 = inlined_call_operand.hbm [shape: f32[3,416,320], index: 6, kind: input, shape index: {}]
  %s7 = inlined_call_operand.hbm [shape: f32[3,416,320], index: 7, kind: input, shape index: {}]
  %s8 = inlined_call_operand.hbm [shape: f32[1,320], index: 8, kind: input, shape index: {}]
  %s9 = inlined_call_operand.hbm [shape: f32[5,11], index: 9, kind: input, shape index: {}]
  %s10 = inlined_call_operand.hbm [shape: f32[5,11], index: 10, kind: input, shape index: {}]
  %s11 = inlined_call_operand.hbm [shape: f32[5,320,128], index: 11, kind: input, shape index: {}]
  %s12 = inlined_call_operand.hbm [shape: f32[1,128], index: 12, kind: input, shape index: {}]
  %s13 = inlined_call_operand.vmem [shape: f32[128,10], index: 13, kind: input, shape index: {}]
  %s14 = inlined_call_operand.hbm [shape: f32[1,10], index: 14, kind: input, shape index: {}]
  %s15 = inlined_call_operand.hbm [shape: f32[2,1,10], index: 15, kind: output, shape index: {}]
  %s16 = sld [smem:[#allocation0]]
  $region145: #{mnist_net_forward.1} parent=0
    _
  %s18 = ssub.s32 1, %s16
  %s19 = scalar_select 0, %s18, %s16
  $region1: #{mnist_net_forward.1} parent=0
    #allocation4 [shape = 'u8[196608]{0}', space=vmem, size = 0x30000, scoped, tag = 'input window, operand 1, single buffered']
    #allocation5 [shape = 's32[2]{0}', space=sflag, size = 0x8, scoped, tag = 'scoped memory for mnist_net_forward.1']
    #allocation6 [shape = 's32[2]{0}', space=sflag, size = 0x8, scoped, tag = 'scoped memory for mnist_net_forward.1']
    #allocation7 [shape = 'u8[196608]{0}', space=vmem, size = 0x30000, scoped, tag = 'input window, operand 2, single buffered']
    #allocation8 [shape = 's32[1]{0}', space=sflag, size = 0x4, scoped, tag = 'scoped memory for mnist_net_forward.1']
    #allocation9 [shape = 'u8[2048]{0}', space=vmem, size = 0x800, scoped, tag = 'input window, operand 3, single buffered']
    #allocation10 [shape = 'u8[8192]{0}', space=vmem, size = 0x2000, scoped, tag = 'input window, operand 4, single buffered']
    #allocation11 [shape = 's32[1]{0}', space=sflag, size = 0x4, scoped, tag = 'scoped memory for mnist_net_forward.1']
    #allocation12 [shape = 'u8[8192]{0}', space=vmem, size = 0x2000, scoped, tag = 'input window, operand 5, single buffered']
    #allocation13 [shape = 'u8[1916928]{0}', space=vmem, size = 0x1d4000, scoped, tag = 'input window, operand 6, single buffered']
    #allocation14 [shape = 's32[1]{0}', space=sflag, size = 0x4, scoped, tag = 'scoped memory for mnist_net_forward.1']
    #allocation15 [shape = 'u8[1916928]{0}', space=vmem, size = 0x1d4000, scoped, tag = 'input window, operand 7, single buffered']
    #allocation16 [shape = 'u8[1536]{0}', space=vmem, size = 0x800, scoped, tag = 'input window, operand 8, single buffered']
    #allocation17 [shape = 's32[1]{0}', space=sflag, size = 0x4, scoped, tag = 'scoped memory for mnist_net_forward.1']
    #allocation18 [shape = 'u8[4096]{0}', space=vmem, size = 0x1000, scoped, tag = 'input window, operand 9, single buffered']
    #allocation19 [shape = 'u8[4096]{0}', space=vmem, size = 0x1000, scoped, tag = 'input window, operand 10, single buffered']
    #allocation20 [shape = 's32[1]{0}', space=sflag, size = 0x4, scoped, tag = 'scoped memory for mnist_net_forward.1']
    #allocation21 [shape = 'u8[819200]{0}', space=vmem, size = 0xc8000, scoped, tag = 'input window, operand 11, single buffered']
    #allocation22 [shape = 'u8[512]{0}', space=vmem, size = 0x400, scoped, tag = 'input window, operand 12, single buffered']
    #allocation23 [shape = 's32[1]{0}', space=sflag, size = 0x4, scoped, tag = 'scoped memory for mnist_net_forward.1']
    #allocation24 [shape = 'u8[512]{0}', space=vmem, size = 0x400, scoped, tag = 'input window, operand 14, single buffered']
    #allocation25 [shape = 'u8[1024]{0}', space=vmem, size = 0x400, scoped, tag = 'output window, operand 0']
    %20 = vsyncpa [#allocation5], 0
    %21 = vsyncpa [#allocation8], 0
    %22 = vsyncpa [#allocation11], 0
    %23 = vsyncpa [#allocation14], 0
    %24 = vsyncpa [#allocation17], 0
    %25 = vsyncpa [#allocation20], 0
    %26 = vsyncpa [#allocation23], 0
    %27 = vsyncpa [#allocation6], 0
    %s28 = scalar_lea.sflag [#allocation6], 1
    %29 = vsyncpa %s28, 0
    loop: start=0, step=1, limit=4
    $region2: #{mnist_net_forward.1} parent=1 // loop_pre_header
      _
    $region3: #{mnist_net_forward.1} parent=1 // loop_header
      %s31 = sphi 0, %s35
      %p32 = scmp.ge.s32.totalorder %s31, 4
      %s41 = sphi 0, %s43
      %s44 = sphi 0, %s41
      %s45 = sphi 0, %s44
      %s61 = sphi 0, %s45
      %s65 = sphi 0, %s65
      %s67 = sphi 0, %s65
      %s68 = sphi 0, %s67
      %s82 = sphi 0, %s68
      %s86 = sphi 0, %s86
      %s88 = sphi 0, %s86
      %s89 = sphi 0, %s88
      %s103 = sphi 0, %s89
      %s107 = sphi 0, %s107
      %s109 = sphi 0, %s107
      %s110 = sphi 0, %s109
      %s124 = sphi 0, %s110
      %s128 = sphi 0, %s128
      %s130 = sphi 0, %s128
      %s131 = sphi 0, %s130
      %s145 = sphi 0, %s131
      %s149 = sphi 0, %s149
      %s151 = sphi 0, %s149
      %s152 = sphi 0, %s151
      %s166 = sphi 0, %s152
      %s170 = sphi 0, %s170
      %s172 = sphi 0, %s170
      %s173 = sphi 0, %s172
      %s187 = sphi 0, %s173
      %s191 = sphi 0, %s191
      %s193 = sphi 0, %s191
      %s194 = sphi 0, %s193
      %s208 = sphi 0, %s194
      %s212 = sphi 0, %s212
      %s214 = sphi 0, %s212
      %s215 = sphi 0, %s214
      %s229 = sphi 0, %s215
      %s233 = sphi 0, %s233
      %s235 = sphi 0, %s233
      %s236 = sphi 0, %s235
      %s250 = sphi 0, %s236
      %s254 = sphi 0, %s254
      %s256 = sphi 0, %s254
      %s257 = sphi 0, %s256
      %s271 = sphi 0, %s257
      %s275 = sphi 0, %s275
      %s277 = sphi 0, %s275
      %s278 = sphi 0, %s277
      %s292 = sphi 0, %s278
      %s296 = sphi 0, %s296
      %s298 = sphi 0, %s296
      %s299 = sphi 0, %s298
      %s313 = sphi 0, %s299
      %s317 = sphi 0, %s317
      %s319 = sphi 0, %s317
      %s320 = sphi 0, %s319
      %s334 = sphi 0, %s320
      %s338 = sphi 0, %s338
      %s340 = sphi 0, %s338
      %s341 = sphi 0, %s340
      %s355 = sphi 0, %s341
      %s361 = sphi 0, %s363
      %s364 = sphi 0, %s361
      %s365 = sphi 0, %s364
      %s381 = sphi 0, %s365
    $region4: #{mnist_net_forward.1} parent=1 // loop_header_branch
      %34 = sbr.rel (%p32) target = $region8
    $region5: #{mnist_net_forward.1} parent=1 // loop_body
      %s36 = ssub.s32 %s31, 1
      %s37 = ssub.s32 %s31, 2
      %s38 = sadd.s32 %s31, 1
      %s39 = ssub.s32 %s31, %s38
      %p40 = scmp.eq.s32.totalorder %s39, 0
      %s42 = sadd.s32 %s41, 1
      %s43 = scalar_select %p40, %s41, %s42
      %p46 = pneg %p40
      %p47 = scmp.eq.s32.totalorder %s31, 1
      %p48 = por %p46, %p47
      %p49 = scmp.ne.s32.totalorder %s41, %s44
      %p50 = scmp.eq.s32.totalorder %s31, 0
      %p51 = por %p49, %p50
      %p52 = scmp.ne.s32.totalorder %s41, %s44
      %p53 = scmp.eq.s32.totalorder %s36, 1
      %p54 = por %p52, %p53
      %p55 = scmp.ne.s32.totalorder %s44, %s45
      %p56 = scmp.eq.s32.totalorder %s36, 0
      %p57 = por %p55, %p56
      %p58 = scmp.ne.s32.totalorder %s44, %s45
      %p59 = scmp.eq.s32.totalorder %s37, 1
      %p60 = por %p58, %p59
      %p62 = scmp.ne.s32.totalorder %s45, %s61
      %p63 = scmp.eq.s32.totalorder %s37, 0
      %p64 = por %p62, %p63
      %s66 = sadd.s32 %s65, 1
      %p69 = scmp.eq.s32.totalorder %s31, 1
      %p70 = scmp.ne.s32.totalorder %s65, %s67
      %p71 = scmp.eq.s32.totalorder %s31, 0
      %p72 = por %p70, %p71
      %p73 = scmp.ne.s32.totalorder %s65, %s67
      %p74 = scmp.eq.s32.totalorder %s36, 1
      %p75 = por %p73, %p74
      %p76 = scmp.ne.s32.totalorder %s67, %s68
      %p77 = scmp.eq.s32.totalorder %s36, 0
      %p78 = por %p76, %p77
      %p79 = scmp.ne.s32.totalorder %s67, %s68
      %p80 = scmp.eq.s32.totalorder %s37, 1
      %p81 = por %p79, %p80
      %p83 = scmp.ne.s32.totalorder %s68, %s82
      %p84 = scmp.eq.s32.totalorder %s37, 0
      %p85 = por %p83, %p84
      %s87 = sadd.s32 %s86, 1
      %p90 = scmp.eq.s32.totalorder %s31, 1
      %p91 = scmp.ne.s32.totalorder %s86, %s88
      %p92 = scmp.eq.s32.totalorder %s31, 0
      %p93 = por %p91, %p92
      %p94 = scmp.ne.s32.totalorder %s86, %s88
      %p95 = scmp.eq.s32.totalorder %s36, 1
      %p96 = por %p94, %p95
      %p97 = scmp.ne.s32.totalorder %s88, %s89
      %p98 = scmp.eq.s32.totalorder %s36, 0
      %p99 = por %p97, %p98
      %p100 = scmp.ne.s32.totalorder %s88, %s89
      %p101 = scmp.eq.s32.totalorder %s37, 1
      %p102 = por %p100, %p101
      %p104 = scmp.ne.s32.totalorder %s89, %s103
      %p105 = scmp.eq.s32.totalorder %s37, 0
      %p106 = por %p104, %p105
      %s108 = sadd.s32 %s107, 1
      %p111 = scmp.eq.s32.totalorder %s31, 1
      %p112 = scmp.ne.s32.totalorder %s107, %s109
      %p113 = scmp.eq.s32.totalorder %s31, 0
      %p114 = por %p112, %p113
      %p115 = scmp.ne.s32.totalorder %s107, %s109
      %p116 = scmp.eq.s32.totalorder %s36, 1
      %p117 = por %p115, %p116
      %p118 = scmp.ne.s32.totalorder %s109, %s110
      %p119 = scmp.eq.s32.totalorder %s36, 0
      %p120 = por %p118, %p119
      %p121 = scmp.ne.s32.totalorder %s109, %s110
      %p122 = scmp.eq.s32.totalorder %s37, 1
      %p123 = por %p121, %p122
      %p125 = scmp.ne.s32.totalorder %s110, %s124
      %p126 = scmp.eq.s32.totalorder %s37, 0
      %p127 = por %p125, %p126
      %s129 = sadd.s32 %s128, 1
      %p132 = scmp.eq.s32.totalorder %s31, 1
      %p133 = scmp.ne.s32.totalorder %s128, %s130
      %p134 = scmp.eq.s32.totalorder %s31, 0
      %p135 = por %p133, %p134
      %p136 = scmp.ne.s32.totalorder %s128, %s130
      %p137 = scmp.eq.s32.totalorder %s36, 1
      %p138 = por %p136, %p137
      %p139 = scmp.ne.s32.totalorder %s130, %s131
      %p140 = scmp.eq.s32.totalorder %s36, 0
      %p141 = por %p139, %p140
      %p142 = scmp.ne.s32.totalorder %s130, %s131
      %p143 = scmp.eq.s32.totalorder %s37, 1
      %p144 = por %p142, %p143
      %p146 = scmp.ne.s32.totalorder %s131, %s145
      %p147 = scmp.eq.s32.totalorder %s37, 0
      %p148 = por %p146, %p147
      %s150 = sadd.s32 %s149, 1
      %p153 = scmp.eq.s32.totalorder %s31, 1
      %p154 = scmp.ne.s32.totalorder %s149, %s151
      %p155 = scmp.eq.s32.totalorder %s31, 0
      %p156 = por %p154, %p155
      %p157 = scmp.ne.s32.totalorder %s149, %s151
      %p158 = scmp.eq.s32.totalorder %s36, 1
      %p159 = por %p157, %p158
      %p160 = scmp.ne.s32.totalorder %s151, %s152
      %p161 = scmp.eq.s32.totalorder %s36, 0
      %p162 = por %p160, %p161
      %p163 = scmp.ne.s32.totalorder %s151, %s152
      %p164 = scmp.eq.s32.totalorder %s37, 1
      %p165 = por %p163, %p164
      %p167 = scmp.ne.s32.totalorder %s152, %s166
      %p168 = scmp.eq.s32.totalorder %s37, 0
      %p169 = por %p167, %p168
      %s171 = sadd.s32 %s170, 1
      %p174 = scmp.eq.s32.totalorder %s31, 1
      %p175 = scmp.ne.s32.totalorder %s170, %s172
      %p176 = scmp.eq.s32.totalorder %s31, 0
      %p177 = por %p175, %p176
      %p178 = scmp.ne.s32.totalorder %s170, %s172
      %p179 = scmp.eq.s32.totalorder %s36, 1
      %p180 = por %p178, %p179
      %p181 = scmp.ne.s32.totalorder %s172, %s173
      %p182 = scmp.eq.s32.totalorder %s36, 0
      %p183 = por %p181, %p182
      %p184 = scmp.ne.s32.totalorder %s172, %s173
      %p185 = scmp.eq.s32.totalorder %s37, 1
      %p186 = por %p184, %p185
      %p188 = scmp.ne.s32.totalorder %s173, %s187
      %p189 = scmp.eq.s32.totalorder %s37, 0
      %p190 = por %p188, %p189
      %s192 = sadd.s32 %s191, 1
      %p195 = scmp.eq.s32.totalorder %s31, 1
      %p196 = scmp.ne.s32.totalorder %s191, %s193
      %p197 = scmp.eq.s32.totalorder %s31, 0
      %p198 = por %p196, %p197
      %p199 = scmp.ne.s32.totalorder %s191, %s193
      %p200 = scmp.eq.s32.totalorder %s36, 1
      %p201 = por %p199, %p200
      %p202 = scmp.ne.s32.totalorder %s193, %s194
      %p203 = scmp.eq.s32.totalorder %s36, 0
      %p204 = por %p202, %p203
      %p205 = scmp.ne.s32.totalorder %s193, %s194
      %p206 = scmp.eq.s32.totalorder %s37, 1
      %p207 = por %p205, %p206
      %p209 = scmp.ne.s32.totalorder %s194, %s208
      %p210 = scmp.eq.s32.totalorder %s37, 0
      %p211 = por %p209, %p210
      %s213 = sadd.s32 %s212, 1
      %p216 = scmp.eq.s32.totalorder %s31, 1
      %p217 = scmp.ne.s32.totalorder %s212, %s214
      %p218 = scmp.eq.s32.totalorder %s31, 0
      %p219 = por %p217, %p218
      %p220 = scmp.ne.s32.totalorder %s212, %s214
      %p221 = scmp.eq.s32.totalorder %s36, 1
      %p222 = por %p220, %p221
      %p223 = scmp.ne.s32.totalorder %s214, %s215
      %p224 = scmp.eq.s32.totalorder %s36, 0
      %p225 = por %p223, %p224
      %p226 = scmp.ne.s32.totalorder %s214, %s215
      %p227 = scmp.eq.s32.totalorder %s37, 1
      %p228 = por %p226, %p227
      %p230 = scmp.ne.s32.totalorder %s215, %s229
      %p231 = scmp.eq.s32.totalorder %s37, 0
      %p232 = por %p230, %p231
      %s234 = sadd.s32 %s233, 1
      %p237 = scmp.eq.s32.totalorder %s31, 1
      %p238 = scmp.ne.s32.totalorder %s233, %s235
      %p239 = scmp.eq.s32.totalorder %s31, 0
      %p240 = por %p238, %p239
      %p241 = scmp.ne.s32.totalorder %s233, %s235
      %p242 = scmp.eq.s32.totalorder %s36, 1
      %p243 = por %p241, %p242
      %p244 = scmp.ne.s32.totalorder %s235, %s236
      %p245 = scmp.eq.s32.totalorder %s36, 0
      %p246 = por %p244, %p245
      %p247 = scmp.ne.s32.totalorder %s235, %s236
      %p248 = scmp.eq.s32.totalorder %s37, 1
      %p249 = por %p247, %p248
      %p251 = scmp.ne.s32.totalorder %s236, %s250
      %p252 = scmp.eq.s32.totalorder %s37, 0
      %p253 = por %p251, %p252
      %s255 = sadd.s32 %s254, 1
      %p258 = scmp.eq.s32.totalorder %s31, 1
      %p259 = scmp.ne.s32.totalorder %s254, %s256
      %p260 = scmp.eq.s32.totalorder %s31, 0
      %p261 = por %p259, %p260
      %p262 = scmp.ne.s32.totalorder %s254, %s256
      %p263 = scmp.eq.s32.totalorder %s36, 1
      %p264 = por %p262, %p263
      %p265 = scmp.ne.s32.totalorder %s256, %s257
      %p266 = scmp.eq.s32.totalorder %s36, 0
      %p267 = por %p265, %p266
      %p268 = scmp.ne.s32.totalorder %s256, %s257
      %p269 = scmp.eq.s32.totalorder %s37, 1
      %p270 = por %p268, %p269
      %p272 = scmp.ne.s32.totalorder %s257, %s271
      %p273 = scmp.eq.s32.totalorder %s37, 0
      %p274 = por %p272, %p273
      %s276 = sadd.s32 %s275, 1
      %p279 = scmp.eq.s32.totalorder %s31, 1
      %p280 = scmp.ne.s32.totalorder %s275, %s277
      %p281 = scmp.eq.s32.totalorder %s31, 0
      %p282 = por %p280, %p281
      %p283 = scmp.ne.s32.totalorder %s275, %s277
      %p284 = scmp.eq.s32.totalorder %s36, 1
      %p285 = por %p283, %p284
      %p286 = scmp.ne.s32.totalorder %s277, %s278
      %p287 = scmp.eq.s32.totalorder %s36, 0
      %p288 = por %p286, %p287
      %p289 = scmp.ne.s32.totalorder %s277, %s278
      %p290 = scmp.eq.s32.totalorder %s37, 1
      %p291 = por %p289, %p290
      %p293 = scmp.ne.s32.totalorder %s278, %s292
      %p294 = scmp.eq.s32.totalorder %s37, 0
      %p295 = por %p293, %p294
      %s297 = sadd.s32 %s296, 1
      %p300 = scmp.eq.s32.totalorder %s31, 1
      %p301 = scmp.ne.s32.totalorder %s296, %s298
      %p302 = scmp.eq.s32.totalorder %s31, 0
      %p303 = por %p301, %p302
      %p304 = scmp.ne.s32.totalorder %s296, %s298
      %p305 = scmp.eq.s32.totalorder %s36, 1
      %p306 = por %p304, %p305
      %p307 = scmp.ne.s32.totalorder %s298, %s299
      %p308 = scmp.eq.s32.totalorder %s36, 0
      %p309 = por %p307, %p308
      %p310 = scmp.ne.s32.totalorder %s298, %s299
      %p311 = scmp.eq.s32.totalorder %s37, 1
      %p312 = por %p310, %p311
      %p314 = scmp.ne.s32.totalorder %s299, %s313
      %p315 = scmp.eq.s32.totalorder %s37, 0
      %p316 = por %p314, %p315
      %s318 = sadd.s32 %s317, 1
      %p321 = scmp.eq.s32.totalorder %s31, 1
      %p322 = scmp.ne.s32.totalorder %s317, %s319
      %p323 = scmp.eq.s32.totalorder %s31, 0
      %p324 = por %p322, %p323
      %p325 = scmp.ne.s32.totalorder %s317, %s319
      %p326 = scmp.eq.s32.totalorder %s36, 1
      %p327 = por %p325, %p326
      %p328 = scmp.ne.s32.totalorder %s319, %s320
      %p329 = scmp.eq.s32.totalorder %s36, 0
      %p330 = por %p328, %p329
      %p331 = scmp.ne.s32.totalorder %s319, %s320
      %p332 = scmp.eq.s32.totalorder %s37, 1
      %p333 = por %p331, %p332
      %p335 = scmp.ne.s32.totalorder %s320, %s334
      %p336 = scmp.eq.s32.totalorder %s37, 0
      %p337 = por %p335, %p336
      %s339 = sadd.s32 %s338, 1
      %p342 = scmp.eq.s32.totalorder %s31, 1
      %p343 = scmp.ne.s32.totalorder %s338, %s340
      %p344 = scmp.eq.s32.totalorder %s31, 0
      %p345 = por %p343, %p344
      %p346 = scmp.ne.s32.totalorder %s338, %s340
      %p347 = scmp.eq.s32.totalorder %s36, 1
      %p348 = por %p346, %p347
      %p349 = scmp.ne.s32.totalorder %s340, %s341
      %p350 = scmp.eq.s32.totalorder %s36, 0
      %p351 = por %p349, %p350
      %p352 = scmp.ne.s32.totalorder %s340, %s341
      %p353 = scmp.eq.s32.totalorder %s37, 1
      %p354 = por %p352, %p353
      %p356 = scmp.ne.s32.totalorder %s341, %s355
      %p357 = scmp.eq.s32.totalorder %s37, 0
      %p358 = por %p356, %p357
      %s359 = ssub.s32 %s31, %s38
      %p360 = scmp.eq.s32.totalorder %s359, 0
      %s362 = sadd.s32 %s361, 1
      %s363 = scalar_select %p360, %s361, %s362
      %p366 = pneg %p360
      %p367 = scmp.eq.s32.totalorder %s31, 1
      %p368 = por %p366, %p367
      %p369 = scmp.ne.s32.totalorder %s361, %s364
      %p370 = scmp.eq.s32.totalorder %s31, 0
      %p371 = por %p369, %p370
      %p372 = scmp.ne.s32.totalorder %s361, %s364
      %p373 = scmp.eq.s32.totalorder %s36, 1
      %p374 = por %p372, %p373
      %p375 = scmp.ne.s32.totalorder %s364, %s365
      %p376 = scmp.eq.s32.totalorder %s36, 0
      %p377 = por %p375, %p376
      %p378 = scmp.ne.s32.totalorder %s364, %s365
      %p379 = scmp.eq.s32.totalorder %s37, 1
      %p380 = por %p378, %p379
      %p382 = scmp.ne.s32.totalorder %s365, %s381
      %p383 = scmp.eq.s32.totalorder %s37, 0
      %p384 = por %p382, %p383
      %p385 = scmp.le.s32.totalorder 1, %s31
      %p386 = scmp.lt.s32.totalorder %s31, 3
      %p387 = pnand %p385, %p386
      %p388 = pneg %p387
      // Predicated region
      $region9: #{mnist_net_forward.1} parent=5 // pred_check
        _
      $region10: #{mnist_net_forward.1} parent=5 // pred_check_branch
        %390 = sbr.rel (%p387) target = $region12
      $region11: #{mnist_net_forward.1} parent=5 // pred_region
        %s391 = ssub.s32 %s31, 1
        // Predicated region
        $region13: #{mnist_net_forward.1} parent=11 // pred_check
          %p392 = pneg %p78
        $region14: #{mnist_net_forward.1} parent=11 // pred_check_branch
          %394 = sbr.rel (%p392) target = $region16
        $region15: #{mnist_net_forward.1} parent=11 // pred_region
          %396 = vsyncadd [#allocation5], 0
          %s397 = sshll.u32 %s1, 4
          %s398 = int_to_ptr.hbm [resolvable:$true] %s397
          %s399 = sshll.u32 [#allocation4], 4
          %s400 = int_to_ptr.vmem [resolvable:$true] %s399
          %405 = dma.hbm_to_vmem [thread:$0]  %s398, 6144, %s400, [#allocation5], 512, 512, 32
        $region16: #{mnist_net_forward.1} parent=11 // pred_fallthru
          _
        // Predicated region
        $region17: #{mnist_net_forward.1} parent=11 // pred_check
          %p406 = pneg %p99
        $region18: #{mnist_net_forward.1} parent=11 // pred_check_branch
          %408 = sbr.rel (%p406) target = $region20
        $region19: #{mnist_net_forward.1} parent=11 // pred_region
          %410 = vsyncadd [#allocation8], 0
          %s411 = sshll.u32 %s2, 4
          %s412 = int_to_ptr.hbm [resolvable:$true] %s411
          %s413 = sshll.u32 [#allocation7], 4
          %s414 = int_to_ptr.vmem [resolvable:$true] %s413
          %419 = dma.hbm_to_vmem [thread:$0]  %s412, 6144, %s414, [#allocation8], 512, 512, 32
        $region20: #{mnist_net_forward.1} parent=11 // pred_fallthru
          _
        // Predicated region
        $region21: #{mnist_net_forward.1} parent=11 // pred_check
          %p420 = pneg %p120
        $region22: #{mnist_net_forward.1} parent=11 // pred_check_branch
          %422 = sbr.rel (%p420) target = $region24
        $region23: #{mnist_net_forward.1} parent=11 // pred_region
          %424 = vsyncadd [#allocation8], 0
          %s426 = sshll.u32 %s3, 4
          %s427 = int_to_ptr.hbm [resolvable:$true] %s426
          %s428 = sshll.u32 [#allocation9], 4
          %s429 = int_to_ptr.vmem [resolvable:$true] %s428
          %431 = dma.hbm_to_vmem [thread:$0]  %s427, 64, %s429, [#allocation8]
        $region24: #{mnist_net_forward.1} parent=11 // pred_fallthru
          _
        // Predicated region
        $region25: #{mnist_net_forward.1} parent=11 // pred_check
          %p432 = pneg %p141
        $region26: #{mnist_net_forward.1} parent=11 // pred_check_branch
          %434 = sbr.rel (%p432) target = $region28
        $region27: #{mnist_net_forward.1} parent=11 // pred_region
          %436 = vsyncadd [#allocation11], 0
          %s437 = sshll.u32 %s4, 4
          %s438 = int_to_ptr.hbm [resolvable:$true] %s437
          %s439 = sshll.u32 [#allocation10], 4
          %s440 = int_to_ptr.vmem [resolvable:$true] %s439
          %445 = dma.hbm_to_vmem [thread:$0]  %s438, 256, %s440, [#allocation11], 128, 128, 8
        $region28: #{mnist_net_forward.1} parent=11 // pred_fallthru
          _
        // Predicated region
        $region29: #{mnist_net_forward.1} parent=11 // pred_check
          %p446 = pneg %p162
        $region30: #{mnist_net_forward.1} parent=11 // pred_check_branch
          %448 = sbr.rel (%p446) target = $region32
        $region31: #{mnist_net_forward.1} parent=11 // pred_region
          %450 = vsyncadd [#allocation11], 0
          %s451 = sshll.u32 %s5, 4
          %s452 = int_to_ptr.hbm [resolvable:$true] %s451
          %s453 = sshll.u32 [#allocation12], 4
          %s454 = int_to_ptr.vmem [resolvable:$true] %s453
          %459 = dma.hbm_to_vmem [thread:$0]  %s452, 256, %s454, [#allocation11], 128, 128, 8
        $region32: #{mnist_net_forward.1} parent=11 // pred_fallthru
          _
        // Predicated region
        $region33: #{mnist_net_forward.1} parent=11 // pred_check
          %p460 = pneg %p183
        $region34: #{mnist_net_forward.1} parent=11 // pred_check_branch
          %462 = sbr.rel (%p460) target = $region36
        $region35: #{mnist_net_forward.1} parent=11 // pred_region
          %464 = vsyncadd [#allocation14], 0
          %s465 = sshll.u32 %s6, 4
          %s466 = int_to_ptr.hbm [resolvable:$true] %s465
          %s467 = sshll.u32 [#allocation13], 4
          %s468 = int_to_ptr.vmem [resolvable:$true] %s467
          %473 = dma.hbm_to_vmem [thread:$0]  %s466, 59904, %s468, [#allocation14], 384, 384, 24
        $region36: #{mnist_net_forward.1} parent=11 // pred_fallthru
          _
        // Predicated region
        $region37: #{mnist_net_forward.1} parent=11 // pred_check
          %p474 = pneg %p204
        $region38: #{mnist_net_forward.1} parent=11 // pred_check_branch
          %476 = sbr.rel (%p474) target = $region40
        $region39: #{mnist_net_forward.1} parent=11 // pred_region
          %478 = vsyncadd [#allocation14], 0
          %s479 = sshll.u32 %s7, 4
          %s480 = int_to_ptr.hbm [resolvable:$true] %s479
          %s481 = sshll.u32 [#allocation15], 4
          %s482 = int_to_ptr.vmem [resolvable:$true] %s481
          %487 = dma.hbm_to_vmem [thread:$0]  %s480, 59904, %s482, [#allocation14], 384, 384, 24
        $region40: #{mnist_net_forward.1} parent=11 // pred_fallthru
          _
        // Predicated region
        $region41: #{mnist_net_forward.1} parent=11 // pred_check
          %p488 = pneg %p225
        $region42: #{mnist_net_forward.1} parent=11 // pred_check_branch
          %490 = sbr.rel (%p488) target = $region44
        $region43: #{mnist_net_forward.1} parent=11 // pred_region
          %492 = vsyncadd [#allocation17], 0
          %s494 = sshll.u32 %s8, 4
          %s495 = int_to_ptr.hbm [resolvable:$true] %s494
          %s496 = sshll.u32 [#allocation16], 4
          %s497 = int_to_ptr.vmem [resolvable:$true] %s496
          %499 = dma.hbm_to_vmem [thread:$0]  %s495, 48, %s497, [#allocation17]
        $region44: #{mnist_net_forward.1} parent=11 // pred_fallthru
          _
        // Predicated region
        $region45: #{mnist_net_forward.1} parent=11 // pred_check
          %p500 = pneg %p246
        $region46: #{mnist_net_forward.1} parent=11 // pred_check_branch
          %502 = sbr.rel (%p500) target = $region48
        $region47: #{mnist_net_forward.1} parent=11 // pred_region
          %504 = vsyncadd [#allocation17], 0
          %s506 = sshll.u32 %s9, 4
          %s507 = int_to_ptr.hbm [resolvable:$true] %s506
          %s508 = sshll.u32 [#allocation18], 4
          %s509 = int_to_ptr.vmem [resolvable:$true] %s508
          %511 = dma.hbm_to_vmem [thread:$0]  %s507, 128, %s509, [#allocation17]
        $region48: #{mnist_net_forward.1} parent=11 // pred_fallthru
          _
        // Predicated region
        $region49: #{mnist_net_forward.1} parent=11 // pred_check
          %p512 = pneg %p267
        $region50: #{mnist_net_forward.1} parent=11 // pred_check_branch
          %514 = sbr.rel (%p512) target = $region52
        $region51: #{mnist_net_forward.1} parent=11 // pred_region
          %516 = vsyncadd [#allocation20], 0
          %s518 = sshll.u32 %s10, 4
          %s519 = int_to_ptr.hbm [resolvable:$true] %s518
          %s520 = sshll.u32 [#allocation19], 4
          %s521 = int_to_ptr.vmem [resolvable:$true] %s520
          %523 = dma.hbm_to_vmem [thread:$0]  %s519, 128, %s521, [#allocation20]
        $region52: #{mnist_net_forward.1} parent=11 // pred_fallthru
          _
        // Predicated region
        $region53: #{mnist_net_forward.1} parent=11 // pred_check
          %p524 = pneg %p288
        $region54: #{mnist_net_forward.1} parent=11 // pred_check_branch
          %526 = sbr.rel (%p524) target = $region56
        $region55: #{mnist_net_forward.1} parent=11 // pred_region
          %528 = vsyncadd [#allocation20], 0
          %s529 = sshll.u32 %s11, 4
          %s530 = int_to_ptr.hbm [resolvable:$true] %s529
          %s531 = sshll.u32 [#allocation21], 4
          %s532 = int_to_ptr.vmem [resolvable:$true] %s531
          %537 = dma.hbm_to_vmem [thread:$0]  %s530, 25600, %s532, [#allocation20], 128, 128, 8
        $region56: #{mnist_net_forward.1} parent=11 // pred_fallthru
          _
        // Predicated region
        $region57: #{mnist_net_forward.1} parent=11 // pred_check
          %p538 = pneg %p309
        $region58: #{mnist_net_forward.1} parent=11 // pred_check_branch
          %540 = sbr.rel (%p538) target = $region60
        $region59: #{mnist_net_forward.1} parent=11 // pred_region
          %542 = vsyncadd [#allocation23], 0
          %s544 = sshll.u32 %s12, 4
          %s545 = int_to_ptr.hbm [resolvable:$true] %s544
          %s546 = sshll.u32 [#allocation22], 4
          %s547 = int_to_ptr.vmem [resolvable:$true] %s546
          %549 = dma.hbm_to_vmem [thread:$0]  %s545, 16, %s547, [#allocation23]
        $region60: #{mnist_net_forward.1} parent=11 // pred_fallthru
          _
        // Predicated region
        $region61: #{mnist_net_forward.1} parent=11 // pred_check
          %p550 = pneg %p330
        $region62: #{mnist_net_forward.1} parent=11 // pred_check_branch
          %552 = sbr.rel (%p550) target = $region64
        $region63: #{mnist_net_forward.1} parent=11 // pred_region
          _
        $region64: #{mnist_net_forward.1} parent=11 // pred_fallthru
          _
        // Predicated region
        $region65: #{mnist_net_forward.1} parent=11 // pred_check
          %p553 = pneg %p351
        $region66: #{mnist_net_forward.1} parent=11 // pred_check_branch
          %555 = sbr.rel (%p553) target = $region68
        $region67: #{mnist_net_forward.1} parent=11 // pred_region
          %557 = vsyncadd [#allocation23], 0
          %s559 = sshll.u32 %s14, 4
          %s560 = int_to_ptr.hbm [resolvable:$true] %s559
          %s561 = sshll.u32 [#allocation24], 4
          %s562 = int_to_ptr.vmem [resolvable:$true] %s561
          %564 = dma.hbm_to_vmem [thread:$0]  %s560, 16, %s562, [#allocation23]
        $region68: #{mnist_net_forward.1} parent=11 // pred_fallthru
          _
      $region12: #{mnist_net_forward.1} parent=5 // pred_fallthru
        _
      %p565 = scmp.lt.s32.totalorder %s31, 2
      // Predicated region
      $region69: #{mnist_net_forward.1} parent=5 // pred_check
        %p566 = pneg %p565
      $region70: #{mnist_net_forward.1} parent=5 // pred_check_branch
        %568 = sbr.rel (%p566) target = $region72
      $region71: #{mnist_net_forward.1} parent=5 // pred_region
        // Predicated region
        $region73: #{mnist_net_forward.1} parent=71 // pred_check
          %p569 = pneg %p51
        $region74: #{mnist_net_forward.1} parent=71 // pred_check_branch
          %571 = sbr.rel (%p569) target = $region76
        $region75: #{mnist_net_forward.1} parent=71 // pred_region
          %p572 = scmp.lt.s32.totalorder %s31, 1
          %s573 = scalar_select %p572, %s31, 1
          %s574 = smul.addr %s573, 4
          %s575 = smul.addr %s574, 8
          %s576 = scalar_lea.vmem %s0, %s575
        $region76: #{mnist_net_forward.1} parent=71 // pred_fallthru
          _
      $region72: #{mnist_net_forward.1} parent=5 // pred_fallthru
        _
      %p577 = scmp.le.s32.totalorder 1, %s31
      %p578 = scmp.lt.s32.totalorder %s31, 3
      %p579 = pnand %p577, %p578
      %p580 = pneg %p579
      // Predicated region
      $region77: #{mnist_net_forward.1} parent=5 // pred_check
        _
      $region78: #{mnist_net_forward.1} parent=5 // pred_check_branch
        %582 = sbr.rel (%p579) target = $region80
      $region79: #{mnist_net_forward.1} parent=5 // pred_region
        %s583 = ssub.s32 %s31, 1
        // Predicated region
        $region81: #{mnist_net_forward.1} parent=79 // pred_check
          %p584 = pneg %p78
        $region82: #{mnist_net_forward.1} parent=79 // pred_check_branch
          %586 = sbr.rel (%p584) target = $region84
        $region83: #{mnist_net_forward.1} parent=79 // pred_region
          %588 = dma.done [#allocation5], 6144
        $region84: #{mnist_net_forward.1} parent=79 // pred_fallthru
          _
        // Predicated region
        $region85: #{mnist_net_forward.1} parent=79 // pred_check
          %p589 = pneg %p99
        $region86: #{mnist_net_forward.1} parent=79 // pred_check_branch
          %591 = sbr.rel (%p589) target = $region88
        $region87: #{mnist_net_forward.1} parent=79 // pred_region
          %593 = dma.done [#allocation8], 6144
        $region88: #{mnist_net_forward.1} parent=79 // pred_fallthru
          _
        // Predicated region
        $region89: #{mnist_net_forward.1} parent=79 // pred_check
          %p594 = pneg %p120
        $region90: #{mnist_net_forward.1} parent=79 // pred_check_branch
          %596 = sbr.rel (%p594) target = $region92
        $region91: #{mnist_net_forward.1} parent=79 // pred_region
          %598 = dma.done [#allocation8], 64
        $region92: #{mnist_net_forward.1} parent=79 // pred_fallthru
          _
        // Predicated region
        $region93: #{mnist_net_forward.1} parent=79 // pred_check
          %p599 = pneg %p141
        $region94: #{mnist_net_forward.1} parent=79 // pred_check_branch
          %601 = sbr.rel (%p599) target = $region96
        $region95: #{mnist_net_forward.1} parent=79 // pred_region
          %603 = dma.done [#allocation11], 256
        $region96: #{mnist_net_forward.1} parent=79 // pred_fallthru
          _
        // Predicated region
        $region97: #{mnist_net_forward.1} parent=79 // pred_check
          %p604 = pneg %p162
        $region98: #{mnist_net_forward.1} parent=79 // pred_check_branch
          %606 = sbr.rel (%p604) target = $region100
        $region99: #{mnist_net_forward.1} parent=79 // pred_region
          %608 = dma.done [#allocation11], 256
        $region100: #{mnist_net_forward.1} parent=79 // pred_fallthru
          _
        // Predicated region
        $region101: #{mnist_net_forward.1} parent=79 // pred_check
          %p609 = pneg %p183
        $region102: #{mnist_net_forward.1} parent=79 // pred_check_branch
          %611 = sbr.rel (%p609) target = $region104
        $region103: #{mnist_net_forward.1} parent=79 // pred_region
          %613 = dma.done [#allocation14], 59904
        $region104: #{mnist_net_forward.1} parent=79 // pred_fallthru
          _
        // Predicated region
        $region105: #{mnist_net_forward.1} parent=79 // pred_check
          %p614 = pneg %p204
        $region106: #{mnist_net_forward.1} parent=79 // pred_check_branch
          %616 = sbr.rel (%p614) target = $region108
        $region107: #{mnist_net_forward.1} parent=79 // pred_region
          %618 = dma.done [#allocation14], 59904
        $region108: #{mnist_net_forward.1} parent=79 // pred_fallthru
          _
        // Predicated region
        $region109: #{mnist_net_forward.1} parent=79 // pred_check
          %p619 = pneg %p225
        $region110: #{mnist_net_forward.1} parent=79 // pred_check_branch
          %621 = sbr.rel (%p619) target = $region112
        $region111: #{mnist_net_forward.1} parent=79 // pred_region
          %623 = dma.done [#allocation17], 48
        $region112: #{mnist_net_forward.1} parent=79 // pred_fallthru
          _
        // Predicated region
        $region113: #{mnist_net_forward.1} parent=79 // pred_check
          %p624 = pneg %p246
        $region114: #{mnist_net_forward.1} parent=79 // pred_check_branch
          %626 = sbr.rel (%p624) target = $region116
        $region115: #{mnist_net_forward.1} parent=79 // pred_region
          %628 = dma.done [#allocation17], 128
        $region116: #{mnist_net_forward.1} parent=79 // pred_fallthru
          _
        // Predicated region
        $region117: #{mnist_net_forward.1} parent=79 // pred_check
          %p629 = pneg %p267
        $region118: #{mnist_net_forward.1} parent=79 // pred_check_branch
          %631 = sbr.rel (%p629) target = $region120
        $region119: #{mnist_net_forward.1} parent=79 // pred_region
          %633 = dma.done [#allocation20], 128
        $region120: #{mnist_net_forward.1} parent=79 // pred_fallthru
          _
        // Predicated region
        $region121: #{mnist_net_forward.1} parent=79 // pred_check
          %p634 = pneg %p288
        $region122: #{mnist_net_forward.1} parent=79 // pred_check_branch
          %636 = sbr.rel (%p634) target = $region124
        $region123: #{mnist_net_forward.1} parent=79 // pred_region
          %638 = dma.done [#allocation20], 25600
        $region124: #{mnist_net_forward.1} parent=79 // pred_fallthru
          _
        // Predicated region
        $region125: #{mnist_net_forward.1} parent=79 // pred_check
          %p639 = pneg %p309
        $region126: #{mnist_net_forward.1} parent=79 // pred_check_branch
          %641 = sbr.rel (%p639) target = $region128
        $region127: #{mnist_net_forward.1} parent=79 // pred_region
          %643 = dma.done [#allocation23], 16
        $region128: #{mnist_net_forward.1} parent=79 // pred_fallthru
          _
        // Predicated region
        $region129: #{mnist_net_forward.1} parent=79 // pred_check
          %p644 = pneg %p351
        $region130: #{mnist_net_forward.1} parent=79 // pred_check_branch
          %646 = sbr.rel (%p644) target = $region132
        $region131: #{mnist_net_forward.1} parent=79 // pred_region
          %648 = dma.done [#allocation23], 16
        $region132: #{mnist_net_forward.1} parent=79 // pred_fallthru
          _
        %p649 = scmp.lt.s32.totalorder %s36, 1
        %s650 = scalar_select %p649, %s36, 1
        %s651 = smul.addr %s650, 4
        %s652 = smul.addr %s651, 8
        %s653 = scalar_lea.vmem %s0, %s652
        %p654 = pneg %p57
        %p655 = pneg %p54
        %p656 = pneg %p78
        %p657 = pneg %p75
        %p658 = pneg %p99
        %p659 = pneg %p96
        %p660 = pneg %p120
        %p661 = pneg %p117
        %p662 = pneg %p141
        %p663 = pneg %p138
        %p664 = pneg %p162
        %p665 = pneg %p159
        %p666 = pneg %p183
        %p667 = pneg %p180
        %p668 = pneg %p204
        %p669 = pneg %p201
        %p670 = pneg %p225
        %p671 = pneg %p222
        %p672 = pneg %p246
        %p673 = pneg %p243
        %p674 = pneg %p267
        %p675 = pneg %p264
        %p676 = pneg %p288
        %p677 = pneg %p285
        %p678 = pneg %p309
        %p679 = pneg %p306
        %p680 = pneg %p330
        %p681 = pneg %p327
        %p682 = pneg %p351
        %p683 = pneg %p348
        %p684 = pneg %p377
        %p685 = pneg %p374
        %s686 = sand.u32 %s364, 1
        %s687 = scalar_lea.sflag [#allocation6], %s686
        %s688 = sand.u32 %s364, 1
        %s689 = scalar_lea.vmem [#allocation25], %s688
        %p690 = scmp.lt.s32.totalorder %s36, 1
        %s691 = scalar_select %p690, %s36, 1
        %s692 = smul.addr %s691, 4
        %s693 = smul.addr %s692, 8
        %s694 = scalar_lea.vmem %s0, %s693
        %v695 = vld [vmem:[%s694] sm:$0xff]
        %v696 = vld [vmem:[%s694 + $0x8] sm:$0xff]
        %v697 = vld [vmem:[%s694 + $0x10] sm:$0xff]
        %v698 = vld [vmem:[%s694 + $0x18] sm:$0x3]
        %v699 = vld [vmem:[#allocation4] sm:$0xff]
        %v700 = vld [vmem:[#allocation4 + $0x8] sm:$0xff]
        %v701 = vld [vmem:[#allocation4 + $0x10] sm:$0xff]
        %v702 = vld [vmem:[#allocation4 + $0x18] sm:$0xff]
        %v703 = vld [vmem:[#allocation4 + $0x20] sm:$0xff]
        %v704 = vld [vmem:[#allocation4 + $0x28] sm:$0xff]
        %v705 = vld [vmem:[#allocation4 + $0x30] sm:$0xff]
        %v706 = vld [vmem:[#allocation4 + $0x38] sm:$0xff]
        %v707 = vld [vmem:[#allocation4 + $0x40] sm:$0xff]
        %v708 = vld [vmem:[#allocation4 + $0x48] sm:$0xff]
        %v709 = vld [vmem:[#allocation4 + $0x50] sm:$0xff]
        %v710 = vld [vmem:[#allocation4 + $0x58] sm:$0xff]
        %v711 = vld [vmem:[#allocation4 + $0x60] sm:$0xf]
        %v712 = vld [vmem:[#allocation4 + $0x68] sm:$0xf]
        %v713 = vld [vmem:[#allocation4 + $0x70] sm:$0xf]
        %v714 = vld [vmem:[#allocation4 + $0x78] sm:$0xf]
        %v715 = vld [vmem:[#allocation7] sm:$0xff]
        %v716 = vld [vmem:[#allocation7 + $0x8] sm:$0xff]
        %v717 = vld [vmem:[#allocation7 + $0x10] sm:$0xff]
        %v718 = vld [vmem:[#allocation7 + $0x18] sm:$0xff]
        %v719 = vld [vmem:[#allocation7 + $0x20] sm:$0xff]
        %v720 = vld [vmem:[#allocation7 + $0x28] sm:$0xff]
        %v721 = vld [vmem:[#allocation7 + $0x30] sm:$0xff]
        %v722 = vld [vmem:[#allocation7 + $0x38] sm:$0xff]
        %v723 = vld [vmem:[#allocation7 + $0x40] sm:$0xff]
        %v724 = vld [vmem:[#allocation7 + $0x48] sm:$0xff]
        %v725 = vld [vmem:[#allocation7 + $0x50] sm:$0xff]
        %v726 = vld [vmem:[#allocation7 + $0x58] sm:$0xff]
        %v727 = vld [vmem:[#allocation7 + $0x60] sm:$0xf]
        %v728 = vld [vmem:[#allocation7 + $0x68] sm:$0xf]
        %v729 = vld [vmem:[#allocation7 + $0x70] sm:$0xf]
        %v730 = vld [vmem:[#allocation7 + $0x78] sm:$0xf]
        %v731 = vld [vmem:[%s694 + $0x1] sm:$0xff]
        %v732 = vld [vmem:[%s694 + $0x9] sm:$0xff]
        %v733 = vld [vmem:[%s694 + $0x11] sm:$0xff]
        %v734 = vld [vmem:[%s694 + $0x19] sm:$0x3]
        %s735 = scalar_lea.vmem [#allocation4], 128
        %v736 = vld [vmem:[%s735] sm:$0xff]
        %v737 = vld [vmem:[%s735 + $0x8] sm:$0xff]
        %v738 = vld [vmem:[%s735 + $0x10] sm:$0xff]
        %v739 = vld [vmem:[%s735 + $0x18] sm:$0xff]
        %v740 = vld [vmem:[%s735 + $0x20] sm:$0xff]
        %v741 = vld [vmem:[%s735 + $0x28] sm:$0xff]
        %v742 = vld [vmem:[%s735 + $0x30] sm:$0xff]
        %v743 = vld [vmem:[%s735 + $0x38] sm:$0xff]
        %v744 = vld [vmem:[%s735 + $0x40] sm:$0xff]
        %v745 = vld [vmem:[%s735 + $0x48] sm:$0xff]
        %v746 = vld [vmem:[%s735 + $0x50] sm:$0xff]
        %v747 = vld [vmem:[%s735 + $0x58] sm:$0xff]
        %v748 = vld [vmem:[%s735 + $0x60] sm:$0xf]
        %v749 = vld [vmem:[%s735 + $0x68] sm:$0xf]
        %v750 = vld [vmem:[%s735 + $0x70] sm:$0xf]
        %v751 = vld [vmem:[%s735 + $0x78] sm:$0xf]
        %vm752 = vcmask 228352
        %v754 = vsel %vm752, %v731, 0
        %v757 = vsel %vm752, %v732, 0
        %v760 = vsel %vm752, %v733, 0
        %v763 = vsel %vm752, %v734, 0
        %vm765 = vcmask 1043456
        %v767 = vsel %vm765, %v748, 0
        %v770 = vsel %vm765, %v749, 0
        %v773 = vsel %vm765, %v750, 0
        %v776 = vsel %vm765, %v751, 0
        %778 = vmatpush.msra.mxu0 0.0
        %779 = vmatpush.msra.mxu0 0.0
        %780 = vmatpush.msra.mxu0 0.0
        %781 = vmatpush.msra.mxu0 0.0
        %782 = vmatpush.msra.mxu0 0.0
        %783 = vmatpush.msra.mxu0 0.0
        %784 = vmatpush.msra.mxu0 0.0
        %785 = vmatpush.msra.mxu0 0.0
        %786 = vmatpush.msra.mxu0 0.0
        %787 = vmatpush.msra.mxu0 0.0
        %788 = vmatpush.msra.mxu0 0.0
        %789 = vmatpush.msra.mxu0 0.0
        %790 = vmatpush.msra.mxu0 %v767
        %791 = vmatpush.msra.mxu0 %v744
        %792 = vmatpush.msra.mxu0 %v740
        %793 = vmatpush.msra.mxu0 %v736
        %794 = vmatmul.f32.gmra.mxu0 %v754
        %v795 = vpop.f32.mrf.mxu0
        %v796 = vadd.f32 0.0, %v795
        %797 = vmatmul.f32.gmra.mxu0 %v757
        %v798 = vpop.f32.mrf.mxu0
        %v799 = vadd.f32 0.0, %v798
        %800 = vmatmul.f32.gmra.mxu0 %v760
        %v801 = vpop.f32.mrf.mxu0
        %v802 = vadd.f32 0.0, %v801
        %803 = vmatmul.f32.gmra.mxu0 %v763
        %v804 = vpop.f32.mrf.mxu0
        %v805 = vadd.f32 0.0, %v804
        %806 = vdwg.mxu0
        %807 = vmatpush.msra.mxu0 0.0
        %808 = vmatpush.msra.mxu0 0.0
        %809 = vmatpush.msra.mxu0 0.0
        %810 = vmatpush.msra.mxu0 0.0
        %811 = vmatpush.msra.mxu0 0.0
        %812 = vmatpush.msra.mxu0 0.0
        %813 = vmatpush.msra.mxu0 0.0
        %814 = vmatpush.msra.mxu0 0.0
        %815 = vmatpush.msra.mxu0 0.0
        %816 = vmatpush.msra.mxu0 0.0
        %817 = vmatpush.msra.mxu0 0.0
        %818 = vmatpush.msra.mxu0 0.0
        %819 = vmatpush.msra.mxu0 %v770
        %820 = vmatpush.msra.mxu0 %v745
        %821 = vmatpush.msra.mxu0 %v741
        %822 = vmatpush.msra.mxu0 %v737
        %823 = vmatmul.f32.gmra.mxu0 %v754
        %v824 = vpop.f32.mrf.mxu0
        %v825 = vadd.f32 0.0, %v824
        %826 = vmatmul.f32.gmra.mxu0 %v757
        %v827 = vpop.f32.mrf.mxu0
        %v828 = vadd.f32 0.0, %v827
        %829 = vmatmul.f32.gmra.mxu0 %v760
        %v830 = vpop.f32.mrf.mxu0
        %v831 = vadd.f32 0.0, %v830
        %832 = vmatmul.f32.gmra.mxu0 %v763
        %v833 = vpop.f32.mrf.mxu0
        %v834 = vadd.f32 0.0, %v833
        %835 = vdwg.mxu0
        %836 = vmatpush.msra.mxu0 0.0
        %837 = vmatpush.msra.mxu0 0.0
        %838 = vmatpush.msra.mxu0 0.0
        %839 = vmatpush.msra.mxu0 0.0
        %840 = vmatpush.msra.mxu0 0.0
        %841 = vmatpush.msra.mxu0 0.0
        %842 = vmatpush.msra.mxu0 0.0
        %843 = vmatpush.msra.mxu0 0.0
        %844 = vmatpush.msra.mxu0 0.0
        %845 = vmatpush.msra.mxu0 0.0
        %846 = vmatpush.msra.mxu0 0.0
        %847 = vmatpush.msra.mxu0 0.0
        %848 = vmatpush.msra.mxu0 %v773
        %849 = vmatpush.msra.mxu0 %v746
        %850 = vmatpush.msra.mxu0 %v742
        %851 = vmatpush.msra.mxu0 %v738
        %852 = vmatmul.f32.gmra.mxu0 %v754
        %v853 = vpop.f32.mrf.mxu0
        %v854 = vadd.f32 0.0, %v853
        %855 = vmatmul.f32.gmra.mxu0 %v757
        %v856 = vpop.f32.mrf.mxu0
        %v857 = vadd.f32 0.0, %v856
        %858 = vmatmul.f32.gmra.mxu0 %v760
        %v859 = vpop.f32.mrf.mxu0
        %v860 = vadd.f32 0.0, %v859
        %861 = vmatmul.f32.gmra.mxu0 %v763
        %v862 = vpop.f32.mrf.mxu0
        %v863 = vadd.f32 0.0, %v862
        %864 = vdwg.mxu0
        %865 = vmatpush.msra.mxu0 0.0
        %866 = vmatpush.msra.mxu0 0.0
        %867 = vmatpush.msra.mxu0 0.0
        %868 = vmatpush.msra.mxu0 0.0
        %869 = vmatpush.msra.mxu0 0.0
        %870 = vmatpush.msra.mxu0 0.0
        %871 = vmatpush.msra.mxu0 0.0
        %872 = vmatpush.msra.mxu0 0.0
        %873 = vmatpush.msra.mxu0 0.0
        %874 = vmatpush.msra.mxu0 0.0
        %875 = vmatpush.msra.mxu0 0.0
        %876 = vmatpush.msra.mxu0 0.0
        %877 = vmatpush.msra.mxu0 %v776
        %878 = vmatpush.msra.mxu0 %v747
        %879 = vmatpush.msra.mxu0 %v743
        %880 = vmatpush.msra.mxu0 %v739
        %881 = vmatmul.f32.gmra.mxu0 %v754
        %v882 = vpop.f32.mrf.mxu0
        %v883 = vadd.f32 0.0, %v882
        %884 = vmatmul.f32.gmra.mxu0 %v757
        %v885 = vpop.f32.mrf.mxu0
        %v886 = vadd.f32 0.0, %v885
        %887 = vmatmul.f32.gmra.mxu0 %v760
        %v888 = vpop.f32.mrf.mxu0
        %v889 = vadd.f32 0.0, %v888
        %890 = vmatmul.f32.gmra.mxu0 %v763
        %v891 = vpop.f32.mrf.mxu0
        %v892 = vadd.f32 0.0, %v891
        %893 = vdwg.mxu0
        %v895 = vsel %vm752, %v695, 0
        %v898 = vsel %vm752, %v696, 0
        %v901 = vsel %vm752, %v697, 0
        %v904 = vsel %vm752, %v698, 0
        %v907 = vsel %vm765, %v711, 0
        %v910 = vsel %vm765, %v712, 0
        %v913 = vsel %vm765, %v713, 0
        %v916 = vsel %vm765, %v714, 0
        %918 = vmatpush.msra.mxu0 0.0
        %919 = vmatpush.msra.mxu0 0.0
        %920 = vmatpush.msra.mxu0 0.0
        %921 = vmatpush.msra.mxu0 0.0
        %922 = vmatpush.msra.mxu0 0.0
        %923 = vmatpush.msra.mxu0 0.0
        %924 = vmatpush.msra.mxu0 0.0
        %925 = vmatpush.msra.mxu0 0.0
        %926 = vmatpush.msra.mxu0 0.0
        %927 = vmatpush.msra.mxu0 0.0
        %928 = vmatpush.msra.mxu0 0.0
        %929 = vmatpush.msra.mxu0 0.0
        %930 = vmatpush.msra.mxu0 %v907
        %931 = vmatpush.msra.mxu0 %v707
        %932 = vmatpush.msra.mxu0 %v703
        %933 = vmatpush.msra.mxu0 %v699
        %934 = vmatmul.f32.gmra.mxu0 %v895
        %v935 = vpop.f32.mrf.mxu0
        %v936 = vadd.f32 %v796, %v935
        %937 = vmatmul.f32.gmra.mxu0 %v898
        %v938 = vpop.f32.mrf.mxu0
        %v939 = vadd.f32 %v799, %v938
        %940 = vmatmul.f32.gmra.mxu0 %v901
        %v941 = vpop.f32.mrf.mxu0
        %v942 = vadd.f32 %v802, %v941
        %943 = vmatmul.f32.gmra.mxu0 %v904
        %v944 = vpop.f32.mrf.mxu0
        %v945 = vadd.f32 %v805, %v944
        %946 = vdwg.mxu0
        %947 = vmatpush.msra.mxu0 0.0
        %948 = vmatpush.msra.mxu0 0.0
        %949 = vmatpush.msra.mxu0 0.0
        %950 = vmatpush.msra.mxu0 0.0
        %951 = vmatpush.msra.mxu0 0.0
        %952 = vmatpush.msra.mxu0 0.0
        %953 = vmatpush.msra.mxu0 0.0
        %954 = vmatpush.msra.mxu0 0.0
        %955 = vmatpush.msra.mxu0 0.0
        %956 = vmatpush.msra.mxu0 0.0
        %957 = vmatpush.msra.mxu0 0.0
        %958 = vmatpush.msra.mxu0 0.0
        %959 = vmatpush.msra.mxu0 %v910
        %960 = vmatpush.msra.mxu0 %v708
        %961 = vmatpush.msra.mxu0 %v704
        %962 = vmatpush.msra.mxu0 %v700
        %963 = vmatmul.f32.gmra.mxu0 %v895
        %v964 = vpop.f32.mrf.mxu0
        %v965 = vadd.f32 %v825, %v964
        %966 = vmatmul.f32.gmra.mxu0 %v898
        %v967 = vpop.f32.mrf.mxu0
        %v968 = vadd.f32 %v828, %v967
        %969 = vmatmul.f32.gmra.mxu0 %v901
        %v970 = vpop.f32.mrf.mxu0
        %v971 = vadd.f32 %v831, %v970
        %972 = vmatmul.f32.gmra.mxu0 %v904
        %v973 = vpop.f32.mrf.mxu0
        %v974 = vadd.f32 %v834, %v973
        %975 = vdwg.mxu0
        %976 = vmatpush.msra.mxu0 0.0
        %977 = vmatpush.msra.mxu0 0.0
        %978 = vmatpush.msra.mxu0 0.0
        %979 = vmatpush.msra.mxu0 0.0
        %980 = vmatpush.msra.mxu0 0.0
        %981 = vmatpush.msra.mxu0 0.0
        %982 = vmatpush.msra.mxu0 0.0
        %983 = vmatpush.msra.mxu0 0.0
        %984 = vmatpush.msra.mxu0 0.0
        %985 = vmatpush.msra.mxu0 0.0
        %986 = vmatpush.msra.mxu0 0.0
        %987 = vmatpush.msra.mxu0 0.0
        %988 = vmatpush.msra.mxu0 %v913
        %989 = vmatpush.msra.mxu0 %v709
        %990 = vmatpush.msra.mxu0 %v705
        %991 = vmatpush.msra.mxu0 %v701
        %992 = vmatmul.f32.gmra.mxu0 %v895
        %v993 = vpop.f32.mrf.mxu0
        %v994 = vadd.f32 %v854, %v993
        %995 = vmatmul.f32.gmra.mxu0 %v898
        %v996 = vpop.f32.mrf.mxu0
        %v997 = vadd.f32 %v857, %v996
        %998 = vmatmul.f32.gmra.mxu0 %v901
        %v999 = vpop.f32.mrf.mxu0
        %v1000 = vadd.f32 %v860, %v999
        %1001 = vmatmul.f32.gmra.mxu0 %v904
        %v1002 = vpop.f32.mrf.mxu0
        %v1003 = vadd.f32 %v863, %v1002
        %1004 = vdwg.mxu0
        %1005 = vmatpush.msra.mxu0 0.0
        %1006 = vmatpush.msra.mxu0 0.0
        %1007 = vmatpush.msra.mxu0 0.0
        %1008 = vmatpush.msra.mxu0 0.0
        %1009 = vmatpush.msra.mxu0 0.0
        %1010 = vmatpush.msra.mxu0 0.0
        %1011 = vmatpush.msra.mxu0 0.0
        %1012 = vmatpush.msra.mxu0 0.0
        %1013 = vmatpush.msra.mxu0 0.0
        %1014 = vmatpush.msra.mxu0 0.0
        %1015 = vmatpush.msra.mxu0 0.0
        %1016 = vmatpush.msra.mxu0 0.0
        %1017 = vmatpush.msra.mxu0 %v916
        %1018 = vmatpush.msra.mxu0 %v710
        %1019 = vmatpush.msra.mxu0 %v706
        %1020 = vmatpush.msra.mxu0 %v702
        %1021 = vmatmul.f32.gmra.mxu0 %v895
        %v1022 = vpop.f32.mrf.mxu0
        %v1023 = vadd.f32 %v883, %v1022
        %1024 = vmatmul.f32.gmra.mxu0 %v898
        %v1025 = vpop.f32.mrf.mxu0
        %v1026 = vadd.f32 %v886, %v1025
        %1027 = vmatmul.f32.gmra.mxu0 %v901
        %v1028 = vpop.f32.mrf.mxu0
        %v1029 = vadd.f32 %v889, %v1028
        %1030 = vmatmul.f32.gmra.mxu0 %v904
        %v1031 = vpop.f32.mrf.mxu0
        %v1032 = vadd.f32 %v892, %v1031
        %1033 = vdwg.mxu0
        %s1034 = scalar_lea.vmem [#allocation7], 128
        %v1035 = vld [vmem:[%s1034] sm:$0xff]
        %v1036 = vld [vmem:[%s1034 + $0x8] sm:$0xff]
        %v1037 = vld [vmem:[%s1034 + $0x10] sm:$0xff]
        %v1038 = vld [vmem:[%s1034 + $0x18] sm:$0xff]
        %v1039 = vld [vmem:[%s1034 + $0x20] sm:$0xff]
        %v1040 = vld [vmem:[%s1034 + $0x28] sm:$0xff]
        %v1041 = vld [vmem:[%s1034 + $0x30] sm:$0xff]
        %v1042 = vld [vmem:[%s1034 + $0x38] sm:$0xff]
        %v1043 = vld [vmem:[%s1034 + $0x40] sm:$0xff]
        %v1044 = vld [vmem:[%s1034 + $0x48] sm:$0xff]
        %v1045 = vld [vmem:[%s1034 + $0x50] sm:$0xff]
        %v1046 = vld [vmem:[%s1034 + $0x58] sm:$0xff]
        %v1047 = vld [vmem:[%s1034 + $0x60] sm:$0xf]
        %v1048 = vld [vmem:[%s1034 + $0x68] sm:$0xf]
        %v1049 = vld [vmem:[%s1034 + $0x70] sm:$0xf]
        %v1050 = vld [vmem:[%s1034 + $0x78] sm:$0xf]
        %v1052 = vsel %vm765, %v1047, 0
        %v1055 = vsel %vm765, %v1048, 0
        %v1058 = vsel %vm765, %v1049, 0
        %v1061 = vsel %vm765, %v1050, 0
        %1063 = vmatpush.msra.mxu0 0.0
        %1064 = vmatpush.msra.mxu0 0.0
        %1065 = vmatpush.msra.mxu0 0.0
        %1066 = vmatpush.msra.mxu0 0.0
        %1067 = vmatpush.msra.mxu0 0.0
        %1068 = vmatpush.msra.mxu0 0.0
        %1069 = vmatpush.msra.mxu0 0.0
        %1070 = vmatpush.msra.mxu0 0.0
        %1071 = vmatpush.msra.mxu0 0.0
        %1072 = vmatpush.msra.mxu0 0.0
        %1073 = vmatpush.msra.mxu0 0.0
        %1074 = vmatpush.msra.mxu0 0.0
        %1075 = vmatpush.msra.mxu0 %v1052
        %1076 = vmatpush.msra.mxu0 %v1043
        %1077 = vmatpush.msra.mxu0 %v1039
        %1078 = vmatpush.msra.mxu0 %v1035
        %1079 = vmatmul.f32.gmra.mxu0 %v754
        %v1080 = vpop.f32.mrf.mxu0
        %v1081 = vadd.f32 0.0, %v1080
        %1082 = vmatmul.f32.gmra.mxu0 %v757
        %v1083 = vpop.f32.mrf.mxu0
        %v1084 = vadd.f32 0.0, %v1083
        %1085 = vmatmul.f32.gmra.mxu0 %v760
        %v1086 = vpop.f32.mrf.mxu0
        %v1087 = vadd.f32 0.0, %v1086
        %1088 = vmatmul.f32.gmra.mxu0 %v763
        %v1089 = vpop.f32.mrf.mxu0
        %v1090 = vadd.f32 0.0, %v1089
        %1091 = vdwg.mxu0
        %1092 = vmatpush.msra.mxu0 0.0
        %1093 = vmatpush.msra.mxu0 0.0
        %1094 = vmatpush.msra.mxu0 0.0
        %1095 = vmatpush.msra.mxu0 0.0
        %1096 = vmatpush.msra.mxu0 0.0
        %1097 = vmatpush.msra.mxu0 0.0
        %1098 = vmatpush.msra.mxu0 0.0
        %1099 = vmatpush.msra.mxu0 0.0
        %1100 = vmatpush.msra.mxu0 0.0
        %1101 = vmatpush.msra.mxu0 0.0
        %1102 = vmatpush.msra.mxu0 0.0
        %1103 = vmatpush.msra.mxu0 0.0
        %1104 = vmatpush.msra.mxu0 %v1055
        %1105 = vmatpush.msra.mxu0 %v1044
        %1106 = vmatpush.msra.mxu0 %v1040
        %1107 = vmatpush.msra.mxu0 %v1036
        %1108 = vmatmul.f32.gmra.mxu0 %v754
        %v1109 = vpop.f32.mrf.mxu0
        %v1110 = vadd.f32 0.0, %v1109
        %1111 = vmatmul.f32.gmra.mxu0 %v757
        %v1112 = vpop.f32.mrf.mxu0
        %v1113 = vadd.f32 0.0, %v1112
        %1114 = vmatmul.f32.gmra.mxu0 %v760
        %v1115 = vpop.f32.mrf.mxu0
        %v1116 = vadd.f32 0.0, %v1115
        %1117 = vmatmul.f32.gmra.mxu0 %v763
        %v1118 = vpop.f32.mrf.mxu0
        %v1119 = vadd.f32 0.0, %v1118
        %1120 = vdwg.mxu0
        %1121 = vmatpush.msra.mxu0 0.0
        %1122 = vmatpush.msra.mxu0 0.0
        %1123 = vmatpush.msra.mxu0 0.0
        %1124 = vmatpush.msra.mxu0 0.0
        %1125 = vmatpush.msra.mxu0 0.0
        %1126 = vmatpush.msra.mxu0 0.0
        %1127 = vmatpush.msra.mxu0 0.0
        %1128 = vmatpush.msra.mxu0 0.0
        %1129 = vmatpush.msra.mxu0 0.0
        %1130 = vmatpush.msra.mxu0 0.0
        %1131 = vmatpush.msra.mxu0 0.0
        %1132 = vmatpush.msra.mxu0 0.0
        %1133 = vmatpush.msra.mxu0 %v1058
        %1134 = vmatpush.msra.mxu0 %v1045
        %1135 = vmatpush.msra.mxu0 %v1041
        %1136 = vmatpush.msra.mxu0 %v1037
        %1137 = vmatmul.f32.gmra.mxu0 %v754
        %v1138 = vpop.f32.mrf.mxu0
        %v1139 = vadd.f32 0.0, %v1138
        %1140 = vmatmul.f32.gmra.mxu0 %v757
        %v1141 = vpop.f32.mrf.mxu0
        %v1142 = vadd.f32 0.0, %v1141
        %1143 = vmatmul.f32.gmra.mxu0 %v760
        %v1144 = vpop.f32.mrf.mxu0
        %v1145 = vadd.f32 0.0, %v1144
        %1146 = vmatmul.f32.gmra.mxu0 %v763
        %v1147 = vpop.f32.mrf.mxu0
        %v1148 = vadd.f32 0.0, %v1147
        %1149 = vdwg.mxu0
        %1150 = vmatpush.msra.mxu0 0.0
        %1151 = vmatpush.msra.mxu0 0.0
        %1152 = vmatpush.msra.mxu0 0.0
        %1153 = vmatpush.msra.mxu0 0.0
        %1154 = vmatpush.msra.mxu0 0.0
        %1155 = vmatpush.msra.mxu0 0.0
        %1156 = vmatpush.msra.mxu0 0.0
        %1157 = vmatpush.msra.mxu0 0.0
        %1158 = vmatpush.msra.mxu0 0.0
        %1159 = vmatpush.msra.mxu0 0.0
        %1160 = vmatpush.msra.mxu0 0.0
        %1161 = vmatpush.msra.mxu0 0.0
        %1162 = vmatpush.msra.mxu0 %v1061
        %1163 = vmatpush.msra.mxu0 %v1046
        %1164 = vmatpush.msra.mxu0 %v1042
        %1165 = vmatpush.msra.mxu0 %v1038
        %1166 = vmatmul.f32.gmra.mxu0 %v754
        %v1167 = vpop.f32.mrf.mxu0
        %v1168 = vadd.f32 0.0, %v1167
        %1169 = vmatmul.f32.gmra.mxu0 %v757
        %v1170 = vpop.f32.mrf.mxu0
        %v1171 = vadd.f32 0.0, %v1170
        %1172 = vmatmul.f32.gmra.mxu0 %v760
        %v1173 = vpop.f32.mrf.mxu0
        %v1174 = vadd.f32 0.0, %v1173
        %1175 = vmatmul.f32.gmra.mxu0 %v763
        %v1176 = vpop.f32.mrf.mxu0
        %v1177 = vadd.f32 0.0, %v1176
        %1178 = vdwg.mxu0
        %v1180 = vsel %vm765, %v727, 0
        %v1183 = vsel %vm765, %v728, 0
        %v1186 = vsel %vm765, %v729, 0
        %v1189 = vsel %vm765, %v730, 0
        %1191 = vmatpush.msra.mxu0 0.0
        %1192 = vmatpush.msra.mxu0 0.0
        %1193 = vmatpush.msra.mxu0 0.0
        %1194 = vmatpush.msra.mxu0 0.0
        %1195 = vmatpush.msra.mxu0 0.0
        %1196 = vmatpush.msra.mxu0 0.0
        %1197 = vmatpush.msra.mxu0 0.0
        %1198 = vmatpush.msra.mxu0 0.0
        %1199 = vmatpush.msra.mxu0 0.0
        %1200 = vmatpush.msra.mxu0 0.0
        %1201 = vmatpush.msra.mxu0 0.0
        %1202 = vmatpush.msra.mxu0 0.0
        %1203 = vmatpush.msra.mxu0 %v1180
        %1204 = vmatpush.msra.mxu0 %v723
        %1205 = vmatpush.msra.mxu0 %v719
        %1206 = vmatpush.msra.mxu0 %v715
        %1207 = vmatmul.f32.gmra.mxu0 %v895
        %v1208 = vpop.f32.mrf.mxu0
        %v1209 = vadd.f32 %v1081, %v1208
        %1210 = vmatmul.f32.gmra.mxu0 %v898
        %v1211 = vpop.f32.mrf.mxu0
        %v1212 = vadd.f32 %v1084, %v1211
        %1213 = vmatmul.f32.gmra.mxu0 %v901
        %v1214 = vpop.f32.mrf.mxu0
        %v1215 = vadd.f32 %v1087, %v1214
        %1216 = vmatmul.f32.gmra.mxu0 %v904
        %v1217 = vpop.f32.mrf.mxu0
        %v1218 = vadd.f32 %v1090, %v1217
        %1219 = vdwg.mxu0
        %1220 = vmatpush.msra.mxu0 0.0
        %1221 = vmatpush.msra.mxu0 0.0
        %1222 = vmatpush.msra.mxu0 0.0
        %1223 = vmatpush.msra.mxu0 0.0
        %1224 = vmatpush.msra.mxu0 0.0
        %1225 = vmatpush.msra.mxu0 0.0
        %1226 = vmatpush.msra.mxu0 0.0
        %1227 = vmatpush.msra.mxu0 0.0
        %1228 = vmatpush.msra.mxu0 0.0
        %1229 = vmatpush.msra.mxu0 0.0
        %1230 = vmatpush.msra.mxu0 0.0
        %1231 = vmatpush.msra.mxu0 0.0
        %1232 = vmatpush.msra.mxu0 %v1183
        %1233 = vmatpush.msra.mxu0 %v724
        %1234 = vmatpush.msra.mxu0 %v720
        %1235 = vmatpush.msra.mxu0 %v716
        %1236 = vmatmul.f32.gmra.mxu0 %v895
        %v1237 = vpop.f32.mrf.mxu0
        %v1238 = vadd.f32 %v1110, %v1237
        %1239 = vmatmul.f32.gmra.mxu0 %v898
        %v1240 = vpop.f32.mrf.mxu0
        %v1241 = vadd.f32 %v1113, %v1240
        %1242 = vmatmul.f32.gmra.mxu0 %v901
        %v1243 = vpop.f32.mrf.mxu0
        %v1244 = vadd.f32 %v1116, %v1243
        %1245 = vmatmul.f32.gmra.mxu0 %v904
        %v1246 = vpop.f32.mrf.mxu0
        %v1247 = vadd.f32 %v1119, %v1246
        %1248 = vdwg.mxu0
        %1249 = vmatpush.msra.mxu0 0.0
        %1250 = vmatpush.msra.mxu0 0.0
        %1251 = vmatpush.msra.mxu0 0.0
        %1252 = vmatpush.msra.mxu0 0.0
        %1253 = vmatpush.msra.mxu0 0.0
        %1254 = vmatpush.msra.mxu0 0.0
        %1255 = vmatpush.msra.mxu0 0.0
        %1256 = vmatpush.msra.mxu0 0.0
        %1257 = vmatpush.msra.mxu0 0.0
        %1258 = vmatpush.msra.mxu0 0.0
        %1259 = vmatpush.msra.mxu0 0.0
        %1260 = vmatpush.msra.mxu0 0.0
        %1261 = vmatpush.msra.mxu0 %v1186
        %1262 = vmatpush.msra.mxu0 %v725
        %1263 = vmatpush.msra.mxu0 %v721
        %1264 = vmatpush.msra.mxu0 %v717
        %1265 = vmatmul.f32.gmra.mxu0 %v895
        %v1266 = vpop.f32.mrf.mxu0
        %v1267 = vadd.f32 %v1139, %v1266
        %1268 = vmatmul.f32.gmra.mxu0 %v898
        %v1269 = vpop.f32.mrf.mxu0
        %v1270 = vadd.f32 %v1142, %v1269
        %1271 = vmatmul.f32.gmra.mxu0 %v901
        %v1272 = vpop.f32.mrf.mxu0
        %v1273 = vadd.f32 %v1145, %v1272
        %1274 = vmatmul.f32.gmra.mxu0 %v904
        %v1275 = vpop.f32.mrf.mxu0
        %v1276 = vadd.f32 %v1148, %v1275
        %1277 = vdwg.mxu0
        %1278 = vmatpush.msra.mxu0 0.0
        %1279 = vmatpush.msra.mxu0 0.0
        %1280 = vmatpush.msra.mxu0 0.0
        %1281 = vmatpush.msra.mxu0 0.0
        %1282 = vmatpush.msra.mxu0 0.0
        %1283 = vmatpush.msra.mxu0 0.0
        %1284 = vmatpush.msra.mxu0 0.0
        %1285 = vmatpush.msra.mxu0 0.0
        %1286 = vmatpush.msra.mxu0 0.0
        %1287 = vmatpush.msra.mxu0 0.0
        %1288 = vmatpush.msra.mxu0 0.0
        %1289 = vmatpush.msra.mxu0 0.0
        %1290 = vmatpush.msra.mxu0 %v1189
        %1291 = vmatpush.msra.mxu0 %v726
        %1292 = vmatpush.msra.mxu0 %v722
        %1293 = vmatpush.msra.mxu0 %v718
        %1294 = vmatmul.f32.gmra.mxu0 %v895
        %v1295 = vpop.f32.mrf.mxu0
        %v1296 = vadd.f32 %v1168, %v1295
        %1297 = vmatmul.f32.gmra.mxu0 %v898
        %v1298 = vpop.f32.mrf.mxu0
        %v1299 = vadd.f32 %v1171, %v1298
        %1300 = vmatmul.f32.gmra.mxu0 %v901
        %v1301 = vpop.f32.mrf.mxu0
        %v1302 = vadd.f32 %v1174, %v1301
        %1303 = vmatmul.f32.gmra.mxu0 %v904
        %v1304 = vpop.f32.mrf.mxu0
        %v1305 = vadd.f32 %v1177, %v1304
        %1306 = vdwg.mxu0
        %v1307 = vld [vmem:[%s694 + $0x2] sm:$0xff]
        %v1308 = vld [vmem:[%s694 + $0xa] sm:$0xff]
        %v1309 = vld [vmem:[%s694 + $0x12] sm:$0xff]
        %v1310 = vld [vmem:[%s694 + $0x1a] sm:$0x3]
        %s1311 = scalar_lea.vmem [#allocation4], 256
        %v1312 = vld [vmem:[%s1311] sm:$0xff]
        %v1313 = vld [vmem:[%s1311 + $0x8] sm:$0xff]
        %v1314 = vld [vmem:[%s1311 + $0x10] sm:$0xff]
        %v1315 = vld [vmem:[%s1311 + $0x18] sm:$0xff]
        %v1316 = vld [vmem:[%s1311 + $0x20] sm:$0xff]
        %v1317 = vld [vmem:[%s1311 + $0x28] sm:$0xff]
        %v1318 = vld [vmem:[%s1311 + $0x30] sm:$0xff]
        %v1319 = vld [vmem:[%s1311 + $0x38] sm:$0xff]
        %v1320 = vld [vmem:[%s1311 + $0x40] sm:$0xff]
        %v1321 = vld [vmem:[%s1311 + $0x48] sm:$0xff]
        %v1322 = vld [vmem:[%s1311 + $0x50] sm:$0xff]
        %v1323 = vld [vmem:[%s1311 + $0x58] sm:$0xff]
        %v1324 = vld [vmem:[%s1311 + $0x60] sm:$0xf]
        %v1325 = vld [vmem:[%s1311 + $0x68] sm:$0xf]
        %v1326 = vld [vmem:[%s1311 + $0x70] sm:$0xf]
        %v1327 = vld [vmem:[%s1311 + $0x78] sm:$0xf]
        %v1329 = vsel %vm752, %v1307, 0
        %v1332 = vsel %vm752, %v1308, 0
        %v1335 = vsel %vm752, %v1309, 0
        %v1338 = vsel %vm752, %v1310, 0
        %v1341 = vsel %vm765, %v1324, 0
        %v1344 = vsel %vm765, %v1325, 0
        %v1347 = vsel %vm765, %v1326, 0
        %v1350 = vsel %vm765, %v1327, 0
        %1352 = vmatpush.msra.mxu0 0.0
        %1353 = vmatpush.msra.mxu0 0.0
        %1354 = vmatpush.msra.mxu0 0.0
        %1355 = vmatpush.msra.mxu0 0.0
        %1356 = vmatpush.msra.mxu0 0.0
        %1357 = vmatpush.msra.mxu0 0.0
        %1358 = vmatpush.msra.mxu0 0.0
        %1359 = vmatpush.msra.mxu0 0.0
        %1360 = vmatpush.msra.mxu0 0.0
        %1361 = vmatpush.msra.mxu0 0.0
        %1362 = vmatpush.msra.mxu0 0.0
        %1363 = vmatpush.msra.mxu0 0.0
        %1364 = vmatpush.msra.mxu0 %v1341
        %1365 = vmatpush.msra.mxu0 %v1320
        %1366 = vmatpush.msra.mxu0 %v1316
        %1367 = vmatpush.msra.mxu0 %v1312
        %1368 = vmatmul.f32.gmra.mxu0 %v1329
        %v1369 = vpop.f32.mrf.mxu0
        %v1370 = vadd.f32 0.0, %v1369
        %1371 = vmatmul.f32.gmra.mxu0 %v1332
        %v1372 = vpop.f32.mrf.mxu0
        %v1373 = vadd.f32 0.0, %v1372
        %1374 = vmatmul.f32.gmra.mxu0 %v1335
        %v1375 = vpop.f32.mrf.mxu0
        %v1376 = vadd.f32 0.0, %v1375
        %1377 = vmatmul.f32.gmra.mxu0 %v1338
        %v1378 = vpop.f32.mrf.mxu0
        %v1379 = vadd.f32 0.0, %v1378
        %1380 = vdwg.mxu0
        %1381 = vmatpush.msra.mxu0 0.0
        %1382 = vmatpush.msra.mxu0 0.0
        %1383 = vmatpush.msra.mxu0 0.0
        %1384 = vmatpush.msra.mxu0 0.0
        %1385 = vmatpush.msra.mxu0 0.0
        %1386 = vmatpush.msra.mxu0 0.0
        %1387 = vmatpush.msra.mxu0 0.0
        %1388 = vmatpush.msra.mxu0 0.0
        %1389 = vmatpush.msra.mxu0 0.0
        %1390 = vmatpush.msra.mxu0 0.0
        %1391 = vmatpush.msra.mxu0 0.0
        %1392 = vmatpush.msra.mxu0 0.0
        %1393 = vmatpush.msra.mxu0 %v1344
        %1394 = vmatpush.msra.mxu0 %v1321
        %1395 = vmatpush.msra.mxu0 %v1317
        %1396 = vmatpush.msra.mxu0 %v1313
        %1397 = vmatmul.f32.gmra.mxu0 %v1329
        %v1398 = vpop.f32.mrf.mxu0
        %v1399 = vadd.f32 0.0, %v1398
        %1400 = vmatmul.f32.gmra.mxu0 %v1332
        %v1401 = vpop.f32.mrf.mxu0
        %v1402 = vadd.f32 0.0, %v1401
        %1403 = vmatmul.f32.gmra.mxu0 %v1335
        %v1404 = vpop.f32.mrf.mxu0
        %v1405 = vadd.f32 0.0, %v1404
        %1406 = vmatmul.f32.gmra.mxu0 %v1338
        %v1407 = vpop.f32.mrf.mxu0
        %v1408 = vadd.f32 0.0, %v1407
        %1409 = vdwg.mxu0
        %1410 = vmatpush.msra.mxu0 0.0
        %1411 = vmatpush.msra.mxu0 0.0
        %1412 = vmatpush.msra.mxu0 0.0
        %1413 = vmatpush.msra.mxu0 0.0
        %1414 = vmatpush.msra.mxu0 0.0
        %1415 = vmatpush.msra.mxu0 0.0
        %1416 = vmatpush.msra.mxu0 0.0
        %1417 = vmatpush.msra.mxu0 0.0
        %1418 = vmatpush.msra.mxu0 0.0
        %1419 = vmatpush.msra.mxu0 0.0
        %1420 = vmatpush.msra.mxu0 0.0
        %1421 = vmatpush.msra.mxu0 0.0
        %1422 = vmatpush.msra.mxu0 %v1347
        %1423 = vmatpush.msra.mxu0 %v1322
        %1424 = vmatpush.msra.mxu0 %v1318
        %1425 = vmatpush.msra.mxu0 %v1314
        %1426 = vmatmul.f32.gmra.mxu0 %v1329
        %v1427 = vpop.f32.mrf.mxu0
        %v1428 = vadd.f32 0.0, %v1427
        %1429 = vmatmul.f32.gmra.mxu0 %v1332
        %v1430 = vpop.f32.mrf.mxu0
        %v1431 = vadd.f32 0.0, %v1430
        %1432 = vmatmul.f32.gmra.mxu0 %v1335
        %v1433 = vpop.f32.mrf.mxu0
        %v1434 = vadd.f32 0.0, %v1433
        %1435 = vmatmul.f32.gmra.mxu0 %v1338
        %v1436 = vpop.f32.mrf.mxu0
        %v1437 = vadd.f32 0.0, %v1436
        %1438 = vdwg.mxu0
        %1439 = vmatpush.msra.mxu0 0.0
        %1440 = vmatpush.msra.mxu0 0.0
        %1441 = vmatpush.msra.mxu0 0.0
        %1442 = vmatpush.msra.mxu0 0.0
        %1443 = vmatpush.msra.mxu0 0.0
        %1444 = vmatpush.msra.mxu0 0.0
        %1445 = vmatpush.msra.mxu0 0.0
        %1446 = vmatpush.msra.mxu0 0.0
        %1447 = vmatpush.msra.mxu0 0.0
        %1448 = vmatpush.msra.mxu0 0.0
        %1449 = vmatpush.msra.mxu0 0.0
        %1450 = vmatpush.msra.mxu0 0.0
        %1451 = vmatpush.msra.mxu0 %v1350
        %1452 = vmatpush.msra.mxu0 %v1323
        %1453 = vmatpush.msra.mxu0 %v1319
        %1454 = vmatpush.msra.mxu0 %v1315
        %1455 = vmatmul.f32.gmra.mxu0 %v1329
        %v1456 = vpop.f32.mrf.mxu0
        %v1457 = vadd.f32 0.0, %v1456
        %1458 = vmatmul.f32.gmra.mxu0 %v1332
        %v1459 = vpop.f32.mrf.mxu0
        %v1460 = vadd.f32 0.0, %v1459
        %1461 = vmatmul.f32.gmra.mxu0 %v1335
        %v1462 = vpop.f32.mrf.mxu0
        %v1463 = vadd.f32 0.0, %v1462
        %1464 = vmatmul.f32.gmra.mxu0 %v1338
        %v1465 = vpop.f32.mrf.mxu0
        %v1466 = vadd.f32 0.0, %v1465
        %1467 = vdwg.mxu0
        %v1468 = vadd.f32 %v936, %v1370
        %v1469 = vadd.f32 %v965, %v1399
        %v1470 = vadd.f32 %v994, %v1428
        %v1471 = vadd.f32 %v1023, %v1457
        %v1472 = vadd.f32 %v939, %v1373
        %v1473 = vadd.f32 %v968, %v1402
        %v1474 = vadd.f32 %v997, %v1431
        %v1475 = vadd.f32 %v1026, %v1460
        %v1476 = vadd.f32 %v942, %v1376
        %v1477 = vadd.f32 %v971, %v1405
        %v1478 = vadd.f32 %v1000, %v1434
        %v1479 = vadd.f32 %v1029, %v1463
        %v1480 = vadd.f32 %v945, %v1379
        %v1481 = vadd.f32 %v974, %v1408
        %v1482 = vadd.f32 %v1003, %v1437
        %v1483 = vadd.f32 %v1032, %v1466
        %s1484 = scalar_lea.vmem [#allocation7], 256
        %v1485 = vld [vmem:[%s1484] sm:$0xff]
        %v1486 = vld [vmem:[%s1484 + $0x8] sm:$0xff]
        %v1487 = vld [vmem:[%s1484 + $0x10] sm:$0xff]
        %v1488 = vld [vmem:[%s1484 + $0x18] sm:$0xff]
        %v1489 = vld [vmem:[%s1484 + $0x20] sm:$0xff]
        %v1490 = vld [vmem:[%s1484 + $0x28] sm:$0xff]
        %v1491 = vld [vmem:[%s1484 + $0x30] sm:$0xff]
        %v1492 = vld [vmem:[%s1484 + $0x38] sm:$0xff]
        %v1493 = vld [vmem:[%s1484 + $0x40] sm:$0xff]
        %v1494 = vld [vmem:[%s1484 + $0x48] sm:$0xff]
        %v1495 = vld [vmem:[%s1484 + $0x50] sm:$0xff]
        %v1496 = vld [vmem:[%s1484 + $0x58] sm:$0xff]
        %v1497 = vld [vmem:[%s1484 + $0x60] sm:$0xf]
        %v1498 = vld [vmem:[%s1484 + $0x68] sm:$0xf]
        %v1499 = vld [vmem:[%s1484 + $0x70] sm:$0xf]
        %v1500 = vld [vmem:[%s1484 + $0x78] sm:$0xf]
        %v1502 = vsel %vm765, %v1497, 0
        %v1505 = vsel %vm765, %v1498, 0
        %v1508 = vsel %vm765, %v1499, 0
        %v1511 = vsel %vm765, %v1500, 0
        %1513 = vmatpush.msra.mxu0 0.0
        %1514 = vmatpush.msra.mxu0 0.0
        %1515 = vmatpush.msra.mxu0 0.0
        %1516 = vmatpush.msra.mxu0 0.0
        %1517 = vmatpush.msra.mxu0 0.0
        %1518 = vmatpush.msra.mxu0 0.0
        %1519 = vmatpush.msra.mxu0 0.0
        %1520 = vmatpush.msra.mxu0 0.0
        %1521 = vmatpush.msra.mxu0 0.0
        %1522 = vmatpush.msra.mxu0 0.0
        %1523 = vmatpush.msra.mxu0 0.0
        %1524 = vmatpush.msra.mxu0 0.0
        %1525 = vmatpush.msra.mxu0 %v1502
        %1526 = vmatpush.msra.mxu0 %v1493
        %1527 = vmatpush.msra.mxu0 %v1489
        %1528 = vmatpush.msra.mxu0 %v1485
        %1529 = vmatmul.f32.gmra.mxu0 %v1329
        %v1530 = vpop.f32.mrf.mxu0
        %v1531 = vadd.f32 0.0, %v1530
        %1532 = vmatmul.f32.gmra.mxu0 %v1332
        %v1533 = vpop.f32.mrf.mxu0
        %v1534 = vadd.f32 0.0, %v1533
        %1535 = vmatmul.f32.gmra.mxu0 %v1335
        %v1536 = vpop.f32.mrf.mxu0
        %v1537 = vadd.f32 0.0, %v1536
        %1538 = vmatmul.f32.gmra.mxu0 %v1338
        %v1539 = vpop.f32.mrf.mxu0
        %v1540 = vadd.f32 0.0, %v1539
        %1541 = vdwg.mxu0
        %1542 = vmatpush.msra.mxu0 0.0
        %1543 = vmatpush.msra.mxu0 0.0
        %1544 = vmatpush.msra.mxu0 0.0
        %1545 = vmatpush.msra.mxu0 0.0
        %1546 = vmatpush.msra.mxu0 0.0
        %1547 = vmatpush.msra.mxu0 0.0
        %1548 = vmatpush.msra.mxu0 0.0
        %1549 = vmatpush.msra.mxu0 0.0
        %1550 = vmatpush.msra.mxu0 0.0
        %1551 = vmatpush.msra.mxu0 0.0
        %1552 = vmatpush.msra.mxu0 0.0
        %1553 = vmatpush.msra.mxu0 0.0
        %1554 = vmatpush.msra.mxu0 %v1505
        %1555 = vmatpush.msra.mxu0 %v1494
        %1556 = vmatpush.msra.mxu0 %v1490
        %1557 = vmatpush.msra.mxu0 %v1486
        %1558 = vmatmul.f32.gmra.mxu0 %v1329
        %v1559 = vpop.f32.mrf.mxu0
        %v1560 = vadd.f32 0.0, %v1559
        %1561 = vmatmul.f32.gmra.mxu0 %v1332
        %v1562 = vpop.f32.mrf.mxu0
        %v1563 = vadd.f32 0.0, %v1562
        %1564 = vmatmul.f32.gmra.mxu0 %v1335
        %v1565 = vpop.f32.mrf.mxu0
        %v1566 = vadd.f32 0.0, %v1565
        %1567 = vmatmul.f32.gmra.mxu0 %v1338
        %v1568 = vpop.f32.mrf.mxu0
        %v1569 = vadd.f32 0.0, %v1568
        %1570 = vdwg.mxu0
        %1571 = vmatpush.msra.mxu0 0.0
        %1572 = vmatpush.msra.mxu0 0.0
        %1573 = vmatpush.msra.mxu0 0.0
        %1574 = vmatpush.msra.mxu0 0.0
        %1575 = vmatpush.msra.mxu0 0.0
        %1576 = vmatpush.msra.mxu0 0.0
        %1577 = vmatpush.msra.mxu0 0.0
        %1578 = vmatpush.msra.mxu0 0.0
        %1579 = vmatpush.msra.mxu0 0.0
        %1580 = vmatpush.msra.mxu0 0.0
        %1581 = vmatpush.msra.mxu0 0.0
        %1582 = vmatpush.msra.mxu0 0.0
        %1583 = vmatpush.msra.mxu0 %v1508
        %1584 = vmatpush.msra.mxu0 %v1495
        %1585 = vmatpush.msra.mxu0 %v1491
        %1586 = vmatpush.msra.mxu0 %v1487
        %1587 = vmatmul.f32.gmra.mxu0 %v1329
        %v1588 = vpop.f32.mrf.mxu0
        %v1589 = vadd.f32 0.0, %v1588
        %1590 = vmatmul.f32.gmra.mxu0 %v1332
        %v1591 = vpop.f32.mrf.mxu0
        %v1592 = vadd.f32 0.0, %v1591
        %1593 = vmatmul.f32.gmra.mxu0 %v1335
        %v1594 = vpop.f32.mrf.mxu0
        %v1595 = vadd.f32 0.0, %v1594
        %1596 = vmatmul.f32.gmra.mxu0 %v1338
        %v1597 = vpop.f32.mrf.mxu0
        %v1598 = vadd.f32 0.0, %v1597
        %1599 = vdwg.mxu0
        %1600 = vmatpush.msra.mxu0 0.0
        %1601 = vmatpush.msra.mxu0 0.0
        %1602 = vmatpush.msra.mxu0 0.0
        %1603 = vmatpush.msra.mxu0 0.0
        %1604 = vmatpush.msra.mxu0 0.0
        %1605 = vmatpush.msra.mxu0 0.0
        %1606 = vmatpush.msra.mxu0 0.0
        %1607 = vmatpush.msra.mxu0 0.0
        %1608 = vmatpush.msra.mxu0 0.0
        %1609 = vmatpush.msra.mxu0 0.0
        %1610 = vmatpush.msra.mxu0 0.0
        %1611 = vmatpush.msra.mxu0 0.0
        %1612 = vmatpush.msra.mxu0 %v1511
        %1613 = vmatpush.msra.mxu0 %v1496
        %1614 = vmatpush.msra.mxu0 %v1492
        %1615 = vmatpush.msra.mxu0 %v1488
        %1616 = vmatmul.f32.gmra.mxu0 %v1329
        %v1617 = vpop.f32.mrf.mxu0
        %v1618 = vadd.f32 0.0, %v1617
        %1619 = vmatmul.f32.gmra.mxu0 %v1332
        %v1620 = vpop.f32.mrf.mxu0
        %v1621 = vadd.f32 0.0, %v1620
        %1622 = vmatmul.f32.gmra.mxu0 %v1335
        %v1623 = vpop.f32.mrf.mxu0
        %v1624 = vadd.f32 0.0, %v1623
        %1625 = vmatmul.f32.gmra.mxu0 %v1338
        %v1626 = vpop.f32.mrf.mxu0
        %v1627 = vadd.f32 0.0, %v1626
        %1628 = vdwg.mxu0
        %v1629 = vadd.f32 %v1209, %v1531
        %v1630 = vadd.f32 %v1238, %v1560
        %v1631 = vadd.f32 %v1267, %v1589
        %v1632 = vadd.f32 %v1296, %v1618
        %v1633 = vadd.f32 %v1212, %v1534
        %v1634 = vadd.f32 %v1241, %v1563
        %v1635 = vadd.f32 %v1270, %v1592
        %v1636 = vadd.f32 %v1299, %v1621
        %v1637 = vadd.f32 %v1215, %v1537
        %v1638 = vadd.f32 %v1244, %v1566
        %v1639 = vadd.f32 %v1273, %v1595
        %v1640 = vadd.f32 %v1302, %v1624
        %v1641 = vadd.f32 %v1218, %v1540
        %v1642 = vadd.f32 %v1247, %v1569
        %v1643 = vadd.f32 %v1276, %v1598
        %v1644 = vadd.f32 %v1305, %v1627
        %v1645 = vld [vmem:[#allocation9] sm:$0xf]
        %v1647 = vperm.slane %v1645, 0
        %v1648 = vperm.slane %v1645, 1
        %v1649 = vperm.slane %v1645, 2
        %v1650 = vperm.slane %v1645, 3
        %v1655 = vadd.f32 %v1468, %v1647
        %v1656 = vadd.f32 %v1469, %v1648
        %v1657 = vadd.f32 %v1470, %v1649
        %v1658 = vadd.f32 %v1471, %v1650
        %v1659 = vadd.f32 %v1472, %v1647
        %v1660 = vadd.f32 %v1473, %v1648
        %v1661 = vadd.f32 %v1474, %v1649
        %v1662 = vadd.f32 %v1475, %v1650
        %v1663 = vadd.f32 %v1476, %v1647
        %v1664 = vadd.f32 %v1477, %v1648
        %v1665 = vadd.f32 %v1478, %v1649
        %v1666 = vadd.f32 %v1479, %v1650
        %v1667 = vadd.f32 %v1480, %v1647
        %v1668 = vadd.f32 %v1481, %v1648
        %v1669 = vadd.f32 %v1482, %v1649
        %v1670 = vadd.f32 %v1483, %v1650
        %v1671 = vmax.f32 %v1655, 0.0
        %v1672 = vmax.f32 %v1656, 0.0
        %v1673 = vmax.f32 %v1657, 0.0
        %v1674 = vmax.f32 %v1658, 0.0
        %v1675 = vmax.f32 %v1659, 0.0
        %v1676 = vmax.f32 %v1660, 0.0
        %v1677 = vmax.f32 %v1661, 0.0
        %v1678 = vmax.f32 %v1662, 0.0
        %v1679 = vmax.f32 %v1663, 0.0
        %v1680 = vmax.f32 %v1664, 0.0
        %v1681 = vmax.f32 %v1665, 0.0
        %v1682 = vmax.f32 %v1666, 0.0
        %v1683 = vmax.f32 %v1667, 0.0
        %v1684 = vmax.f32 %v1668, 0.0
        %v1685 = vmax.f32 %v1669, 0.0
        %v1686 = vmax.f32 %v1670, 0.0
        %v1687 = vadd.f32 %v1629, %v1647
        %v1688 = vadd.f32 %v1630, %v1648
        %v1689 = vadd.f32 %v1631, %v1649
        %v1690 = vadd.f32 %v1632, %v1650
        %v1691 = vadd.f32 %v1633, %v1647
        %v1692 = vadd.f32 %v1634, %v1648
        %v1693 = vadd.f32 %v1635, %v1649
        %v1694 = vadd.f32 %v1636, %v1650
        %v1695 = vadd.f32 %v1637, %v1647
        %v1696 = vadd.f32 %v1638, %v1648
        %v1697 = vadd.f32 %v1639, %v1649
        %v1698 = vadd.f32 %v1640, %v1650
        %v1699 = vadd.f32 %v1641, %v1647
        %v1700 = vadd.f32 %v1642, %v1648
        %v1701 = vadd.f32 %v1643, %v1649
        %v1702 = vadd.f32 %v1644, %v1650
        %v1703 = vmax.f32 %v1687, 0.0
        %v1704 = vmax.f32 %v1688, 0.0
        %v1705 = vmax.f32 %v1689, 0.0
        %v1706 = vmax.f32 %v1690, 0.0
        %v1707 = vmax.f32 %v1691, 0.0
        %v1708 = vmax.f32 %v1692, 0.0
        %v1709 = vmax.f32 %v1693, 0.0
        %v1710 = vmax.f32 %v1694, 0.0
        %v1711 = vmax.f32 %v1695, 0.0
        %v1712 = vmax.f32 %v1696, 0.0
        %v1713 = vmax.f32 %v1697, 0.0
        %v1714 = vmax.f32 %v1698, 0.0
        %v1715 = vmax.f32 %v1699, 0.0
        %v1716 = vmax.f32 %v1700, 0.0
        %v1717 = vmax.f32 %v1701, 0.0
        %v1718 = vmax.f32 %v1702, 0.0
        %v1719 = vmax.f32 %v1671, %v1703
        %v1720 = vmax.f32 %v1672, %v1704
        %v1721 = vmax.f32 %v1673, %v1705
        %v1722 = vmax.f32 %v1674, %v1706
        %v1723 = vmax.f32 %v1675, %v1707
        %v1724 = vmax.f32 %v1676, %v1708
        %v1725 = vmax.f32 %v1677, %v1709
        %v1726 = vmax.f32 %v1678, %v1710
        %v1727 = vmax.f32 %v1679, %v1711
        %v1728 = vmax.f32 %v1680, %v1712
        %v1729 = vmax.f32 %v1681, %v1713
        %v1730 = vmax.f32 %v1682, %v1714
        %v1731 = vmax.f32 %v1683, %v1715
        %v1732 = vmax.f32 %v1684, %v1716
        %v1733 = vmax.f32 %v1685, %v1717
        %v1734 = vmax.f32 %v1686, %v1718
        %v1735 = vld [vmem:[#allocation10] sm:$0xff]
        %v1736 = vld [vmem:[#allocation10 + $0x8] sm:$0x1f]
        %vm1737 = vcmask 211968
        %v1739 = vsel %vm1737, %v1735, 0
        %v1742 = vsel %vm1737, %v1736, 0
        %vm1744 = vcmask 1041408
        %v1746 = vsel %vm1744, %v1731, 0
        %v1749 = vsel %vm1744, %v1732, 0
        %v1752 = vsel %vm1744, %v1733, 0
        %v1755 = vsel %vm1744, %v1734, 0
        %1757 = vmatpush.msra.mxu0 0.0
        %1758 = vmatpush.msra.mxu0 0.0
        %1759 = vmatpush.msra.mxu0 0.0
        %1760 = vmatpush.msra.mxu0 0.0
        %1761 = vmatpush.msra.mxu0 0.0
        %1762 = vmatpush.msra.mxu0 0.0
        %1763 = vmatpush.msra.mxu0 0.0
        %1764 = vmatpush.msra.mxu0 0.0
        %1765 = vmatpush.msra.mxu0 0.0
        %1766 = vmatpush.msra.mxu0 0.0
        %1767 = vmatpush.msra.mxu0 0.0
        %1768 = vmatpush.msra.mxu0 0.0
        %1769 = vmatpush.msra.mxu0 %v1746
        %1770 = vmatpush.msra.mxu0 %v1727
        %1771 = vmatpush.msra.mxu0 %v1723
        %1772 = vmatpush.msra.mxu0 %v1719
        %1773 = vmatmul.f32.gmra.mxu0 %v1739
        %v1774 = vpop.f32.mrf.mxu0
        %v1775 = vadd.f32 0.0, %v1774
        %1776 = vmatmul.f32.gmra.mxu0 %v1742
        %v1777 = vpop.f32.mrf.mxu0
        %v1778 = vadd.f32 0.0, %v1777
        %1779 = vdwg.mxu0
        %1780 = vmatpush.msra.mxu0 0.0
        %1781 = vmatpush.msra.mxu0 0.0
        %1782 = vmatpush.msra.mxu0 0.0
        %1783 = vmatpush.msra.mxu0 0.0
        %1784 = vmatpush.msra.mxu0 0.0
        %1785 = vmatpush.msra.mxu0 0.0
        %1786 = vmatpush.msra.mxu0 0.0
        %1787 = vmatpush.msra.mxu0 0.0
        %1788 = vmatpush.msra.mxu0 0.0
        %1789 = vmatpush.msra.mxu0 0.0
        %1790 = vmatpush.msra.mxu0 0.0
        %1791 = vmatpush.msra.mxu0 0.0
        %1792 = vmatpush.msra.mxu0 %v1749
        %1793 = vmatpush.msra.mxu0 %v1728
        %1794 = vmatpush.msra.mxu0 %v1724
        %1795 = vmatpush.msra.mxu0 %v1720
        %1796 = vmatmul.f32.gmra.mxu0 %v1739
        %v1797 = vpop.f32.mrf.mxu0
        %v1798 = vadd.f32 0.0, %v1797
        %1799 = vmatmul.f32.gmra.mxu0 %v1742
        %v1800 = vpop.f32.mrf.mxu0
        %v1801 = vadd.f32 0.0, %v1800
        %1802 = vdwg.mxu0
        %1803 = vmatpush.msra.mxu0 0.0
        %1804 = vmatpush.msra.mxu0 0.0
        %1805 = vmatpush.msra.mxu0 0.0
        %1806 = vmatpush.msra.mxu0 0.0
        %1807 = vmatpush.msra.mxu0 0.0
        %1808 = vmatpush.msra.mxu0 0.0
        %1809 = vmatpush.msra.mxu0 0.0
        %1810 = vmatpush.msra.mxu0 0.0
        %1811 = vmatpush.msra.mxu0 0.0
        %1812 = vmatpush.msra.mxu0 0.0
        %1813 = vmatpush.msra.mxu0 0.0
        %1814 = vmatpush.msra.mxu0 0.0
        %1815 = vmatpush.msra.mxu0 %v1752
        %1816 = vmatpush.msra.mxu0 %v1729
        %1817 = vmatpush.msra.mxu0 %v1725
        %1818 = vmatpush.msra.mxu0 %v1721
        %1819 = vmatmul.f32.gmra.mxu0 %v1739
        %v1820 = vpop.f32.mrf.mxu0
        %v1821 = vadd.f32 0.0, %v1820
        %1822 = vmatmul.f32.gmra.mxu0 %v1742
        %v1823 = vpop.f32.mrf.mxu0
        %v1824 = vadd.f32 0.0, %v1823
        %1825 = vdwg.mxu0
        %1826 = vmatpush.msra.mxu0 0.0
        %1827 = vmatpush.msra.mxu0 0.0
        %1828 = vmatpush.msra.mxu0 0.0
        %1829 = vmatpush.msra.mxu0 0.0
        %1830 = vmatpush.msra.mxu0 0.0
        %1831 = vmatpush.msra.mxu0 0.0
        %1832 = vmatpush.msra.mxu0 0.0
        %1833 = vmatpush.msra.mxu0 0.0
        %1834 = vmatpush.msra.mxu0 0.0
        %1835 = vmatpush.msra.mxu0 0.0
        %1836 = vmatpush.msra.mxu0 0.0
        %1837 = vmatpush.msra.mxu0 0.0
        %1838 = vmatpush.msra.mxu0 %v1755
        %1839 = vmatpush.msra.mxu0 %v1730
        %1840 = vmatpush.msra.mxu0 %v1726
        %1841 = vmatpush.msra.mxu0 %v1722
        %1842 = vmatmul.f32.gmra.mxu0 %v1739
        %v1843 = vpop.f32.mrf.mxu0
        %v1844 = vadd.f32 0.0, %v1843
        %1845 = vmatmul.f32.gmra.mxu0 %v1742
        %v1846 = vpop.f32.mrf.mxu0
        %v1847 = vadd.f32 0.0, %v1846
        %1848 = vdwg.mxu0
        %v1849 = vld [vmem:[#allocation12] sm:$0xff]
        %v1850 = vld [vmem:[#allocation12 + $0x8] sm:$0x1f]
        %v1852 = vsel %vm1737, %v1849, 0
        %v1855 = vsel %vm1737, %v1850, 0
        %1857 = vmatpush.msra.mxu0 0.0
        %1858 = vmatpush.msra.mxu0 0.0
        %1859 = vmatpush.msra.mxu0 0.0
        %1860 = vmatpush.msra.mxu0 0.0
        %1861 = vmatpush.msra.mxu0 0.0
        %1862 = vmatpush.msra.mxu0 0.0
        %1863 = vmatpush.msra.mxu0 0.0
        %1864 = vmatpush.msra.mxu0 0.0
        %1865 = vmatpush.msra.mxu0 0.0
        %1866 = vmatpush.msra.mxu0 0.0
        %1867 = vmatpush.msra.mxu0 0.0
        %1868 = vmatpush.msra.mxu0 0.0
        %1869 = vmatpush.msra.mxu0 %v1746
        %1870 = vmatpush.msra.mxu0 %v1727
        %1871 = vmatpush.msra.mxu0 %v1723
        %1872 = vmatpush.msra.mxu0 %v1719
        %1873 = vmatmul.f32.gmra.mxu0 %v1852
        %v1874 = vpop.f32.mrf.mxu0
        %v1875 = vadd.f32 0.0, %v1874
        %1876 = vmatmul.f32.gmra.mxu0 %v1855
        %v1877 = vpop.f32.mrf.mxu0
        %v1878 = vadd.f32 0.0, %v1877
        %1879 = vdwg.mxu0
        %1880 = vmatpush.msra.mxu0 0.0
        %1881 = vmatpush.msra.mxu0 0.0
        %1882 = vmatpush.msra.mxu0 0.0
        %1883 = vmatpush.msra.mxu0 0.0
        %1884 = vmatpush.msra.mxu0 0.0
        %1885 = vmatpush.msra.mxu0 0.0
        %1886 = vmatpush.msra.mxu0 0.0
        %1887 = vmatpush.msra.mxu0 0.0
        %1888 = vmatpush.msra.mxu0 0.0
        %1889 = vmatpush.msra.mxu0 0.0
        %1890 = vmatpush.msra.mxu0 0.0
        %1891 = vmatpush.msra.mxu0 0.0
        %1892 = vmatpush.msra.mxu0 %v1749
        %1893 = vmatpush.msra.mxu0 %v1728
        %1894 = vmatpush.msra.mxu0 %v1724
        %1895 = vmatpush.msra.mxu0 %v1720
        %1896 = vmatmul.f32.gmra.mxu0 %v1852
        %v1897 = vpop.f32.mrf.mxu0
        %v1898 = vadd.f32 0.0, %v1897
        %1899 = vmatmul.f32.gmra.mxu0 %v1855
        %v1900 = vpop.f32.mrf.mxu0
        %v1901 = vadd.f32 0.0, %v1900
        %1902 = vdwg.mxu0
        %1903 = vmatpush.msra.mxu0 0.0
        %1904 = vmatpush.msra.mxu0 0.0
        %1905 = vmatpush.msra.mxu0 0.0
        %1906 = vmatpush.msra.mxu0 0.0
        %1907 = vmatpush.msra.mxu0 0.0
        %1908 = vmatpush.msra.mxu0 0.0
        %1909 = vmatpush.msra.mxu0 0.0
        %1910 = vmatpush.msra.mxu0 0.0
        %1911 = vmatpush.msra.mxu0 0.0
        %1912 = vmatpush.msra.mxu0 0.0
        %1913 = vmatpush.msra.mxu0 0.0
        %1914 = vmatpush.msra.mxu0 0.0
        %1915 = vmatpush.msra.mxu0 %v1752
        %1916 = vmatpush.msra.mxu0 %v1729
        %1917 = vmatpush.msra.mxu0 %v1725
        %1918 = vmatpush.msra.mxu0 %v1721
        %1919 = vmatmul.f32.gmra.mxu0 %v1852
        %v1920 = vpop.f32.mrf.mxu0
        %v1921 = vadd.f32 0.0, %v1920
        %1922 = vmatmul.f32.gmra.mxu0 %v1855
        %v1923 = vpop.f32.mrf.mxu0
        %v1924 = vadd.f32 0.0, %v1923
        %1925 = vdwg.mxu0
        %1926 = vmatpush.msra.mxu0 0.0
        %1927 = vmatpush.msra.mxu0 0.0
        %1928 = vmatpush.msra.mxu0 0.0
        %1929 = vmatpush.msra.mxu0 0.0
        %1930 = vmatpush.msra.mxu0 0.0
        %1931 = vmatpush.msra.mxu0 0.0
        %1932 = vmatpush.msra.mxu0 0.0
        %1933 = vmatpush.msra.mxu0 0.0
        %1934 = vmatpush.msra.mxu0 0.0
        %1935 = vmatpush.msra.mxu0 0.0
        %1936 = vmatpush.msra.mxu0 0.0
        %1937 = vmatpush.msra.mxu0 0.0
        %1938 = vmatpush.msra.mxu0 %v1755
        %1939 = vmatpush.msra.mxu0 %v1730
        %1940 = vmatpush.msra.mxu0 %v1726
        %1941 = vmatpush.msra.mxu0 %v1722
        %1942 = vmatmul.f32.gmra.mxu0 %v1852
        %v1943 = vpop.f32.mrf.mxu0
        %v1944 = vadd.f32 0.0, %v1943
        %1945 = vmatmul.f32.gmra.mxu0 %v1855
        %v1946 = vpop.f32.mrf.mxu0
        %v1947 = vadd.f32 0.0, %v1946
        %1948 = vdwg.mxu0
        %v1949 = vmax.f32 %v1775, %v1875
        %v1950 = vmax.f32 %v1798, %v1898
        %v1951 = vmax.f32 %v1821, %v1921
        %v1952 = vmax.f32 %v1844, %v1944
        %v1953 = vmax.f32 %v1778, %v1878
        %v1954 = vmax.f32 %v1801, %v1901
        %v1955 = vmax.f32 %v1824, %v1924
        %v1956 = vmax.f32 %v1847, %v1947
        %1957 = vst [vmem:[#allocation2] sm:$0xff] %v1949
        %1958 = vst [vmem:[#allocation2 + $0x8] sm:$0xff] %v1950
        %1959 = vst [vmem:[#allocation2 + $0x10] sm:$0xff] %v1951
        %vm1960 = vcmask 261120
        %1961 = vst.msk [vmem:[#allocation2 + $0x18] sm:$0xff] %vm1960, %v1952
        %1962 = vst [vmem:[#allocation2 + $0x20] sm:$0x1f] %v1953
        %1963 = vst [vmem:[#allocation2 + $0x28] sm:$0x1f] %v1954
        %1964 = vst [vmem:[#allocation2 + $0x30] sm:$0x1f] %v1955
        %vm1965 = vcmask 258048
        %1966 = vst.msk [vmem:[#allocation2 + $0x38] sm:$0x1f] %vm1965, %v1956
        %v1967 = vld [vmem:[#allocation2] sm:$0xff]
        %v1968 = vld [vmem:[#allocation2 + $0x8] sm:$0xff]
        %v1969 = vld [vmem:[#allocation2 + $0x10] sm:$0xff]
        %v1970 = vld [vmem:[#allocation2 + $0x18] sm:$0xff]
        %v1971 = vld [vmem:[#allocation2 + $0x20] sm:$0x7]
        %v1972 = vld [vmem:[#allocation2 + $0x28] sm:$0x7]
        %v1973 = vld [vmem:[#allocation2 + $0x30] sm:$0x7]
        %v1974 = vld [vmem:[#allocation2 + $0x38] sm:$0x7]
        %v1975 = vld [vmem:[#allocation13] sm:$0xff]
        %v1976 = vld [vmem:[#allocation13 + $0x8] sm:$0xff]
        %v1977 = vld [vmem:[#allocation13 + $0x10] sm:$0xff]
        %v1978 = vld [vmem:[#allocation13 + $0x18] sm:$0xff]
        %v1979 = vld [vmem:[#allocation13 + $0x20] sm:$0xff]
        %v1980 = vld [vmem:[#allocation13 + $0x28] sm:$0xff]
        %v1981 = vld [vmem:[#allocation13 + $0x30] sm:$0xff]
        %v1982 = vld [vmem:[#allocation13 + $0x38] sm:$0xff]
        %v1983 = vld [vmem:[#allocation13 + $0x40] sm:$0xff]
        %v1984 = vld [vmem:[#allocation13 + $0x48] sm:$0xff]
        %v1985 = vld [vmem:[#allocation13 + $0x50] sm:$0xff]
        %v1986 = vld [vmem:[#allocation13 + $0x58] sm:$0xff]
        %v1987 = vld [vmem:[#allocation13 + $0x60] sm:$0xff]
        %v1988 = vld [vmem:[#allocation13 + $0x68] sm:$0xff]
        %v1989 = vld [vmem:[#allocation13 + $0x70] sm:$0xff]
        %v1990 = vld [vmem:[#allocation13 + $0x78] sm:$0xff]
        %v1991 = vld [vmem:[#allocation13 + $0x80] sm:$0xff]
        %v1992 = vld [vmem:[#allocation13 + $0x88] sm:$0xff]
        %v1993 = vld [vmem:[#allocation13 + $0x90] sm:$0xff]
        %v1994 = vld [vmem:[#allocation13 + $0x98] sm:$0xff]
        %v1995 = vld [vmem:[#allocation13 + $0xa0] sm:$0xff]
        %v1996 = vld [vmem:[#allocation13 + $0xa8] sm:$0xff]
        %v1997 = vld [vmem:[#allocation13 + $0xb0] sm:$0xff]
        %v1998 = vld [vmem:[#allocation13 + $0xb8] sm:$0xff]
        %v1999 = vld [vmem:[#allocation13 + $0xc0] sm:$0xff]
        %v2000 = vld [vmem:[#allocation13 + $0xc8] sm:$0xff]
        %v2001 = vld [vmem:[#allocation13 + $0xd0] sm:$0xff]
        %v2002 = vld [vmem:[#allocation13 + $0xd8] sm:$0xff]
        %v2003 = vld [vmem:[#allocation13 + $0xe0] sm:$0xff]
        %v2004 = vld [vmem:[#allocation13 + $0xe8] sm:$0xff]
        %v2005 = vld [vmem:[#allocation13 + $0xf0] sm:$0xff]
        %v2006 = vld [vmem:[#allocation13 + $0xf8] sm:$0xff]
        %v2007 = vld [vmem:[#allocation13 + $0x100] sm:$0xff]
        %v2008 = vld [vmem:[#allocation13 + $0x108] sm:$0xff]
        %v2009 = vld [vmem:[#allocation13 + $0x110] sm:$0xff]
        %v2010 = vld [vmem:[#allocation13 + $0x118] sm:$0xff]
        %v2011 = vld [vmem:[#allocation13 + $0x120] sm:$0xff]
        %v2012 = vld [vmem:[#allocation13 + $0x128] sm:$0xff]
        %v2013 = vld [vmem:[#allocation13 + $0x130] sm:$0xff]
        %v2014 = vld [vmem:[#allocation13 + $0x138] sm:$0xff]
        %v2015 = vld [vmem:[#allocation13 + $0x140] sm:$0xff]
        %v2016 = vld [vmem:[#allocation13 + $0x148] sm:$0xff]
        %v2017 = vld [vmem:[#allocation13 + $0x150] sm:$0xff]
        %v2018 = vld [vmem:[#allocation13 + $0x158] sm:$0xff]
        %v2019 = vld [vmem:[#allocation13 + $0x160] sm:$0xff]
        %v2020 = vld [vmem:[#allocation13 + $0x168] sm:$0xff]
        %v2021 = vld [vmem:[#allocation13 + $0x170] sm:$0xff]
        %v2022 = vld [vmem:[#allocation13 + $0x178] sm:$0xff]
        %v2023 = vld [vmem:[#allocation13 + $0x180] sm:$0xff]
        %v2024 = vld [vmem:[#allocation13 + $0x188] sm:$0xff]
        %v2025 = vld [vmem:[#allocation13 + $0x190] sm:$0xff]
        %v2026 = vld [vmem:[#allocation13 + $0x198] sm:$0xff]
        %v2027 = vld [vmem:[#allocation13 + $0x1a0] sm:$0xff]
        %v2028 = vld [vmem:[#allocation13 + $0x1a8] sm:$0xff]
        %v2029 = vld [vmem:[#allocation13 + $0x1b0] sm:$0xff]
        %v2030 = vld [vmem:[#allocation13 + $0x1b8] sm:$0xff]
        %v2031 = vld [vmem:[#allocation13 + $0x1c0] sm:$0xff]
        %v2032 = vld [vmem:[#allocation13 + $0x1c8] sm:$0xff]
        %v2033 = vld [vmem:[#allocation13 + $0x1d0] sm:$0xff]
        %v2034 = vld [vmem:[#allocation13 + $0x1d8] sm:$0xff]
        %v2035 = vld [vmem:[#allocation13 + $0x1e0] sm:$0xff]
        %v2036 = vld [vmem:[#allocation13 + $0x1e8] sm:$0xff]
        %v2037 = vld [vmem:[#allocation13 + $0x1f0] sm:$0xff]
        %v2038 = vld [vmem:[#allocation13 + $0x1f8] sm:$0xff]
        %v2039 = vld [vmem:[#allocation13 + $0x200] sm:$0xff]
        %v2040 = vld [vmem:[#allocation13 + $0x208] sm:$0xff]
        %v2041 = vld [vmem:[#allocation13 + $0x210] sm:$0xff]
        %v2042 = vld [vmem:[#allocation13 + $0x218] sm:$0xff]
        %v2043 = vld [vmem:[#allocation13 + $0x220] sm:$0xff]
        %v2044 = vld [vmem:[#allocation13 + $0x228] sm:$0xff]
        %v2045 = vld [vmem:[#allocation13 + $0x230] sm:$0xff]
        %v2046 = vld [vmem:[#allocation13 + $0x238] sm:$0xff]
        %v2047 = vld [vmem:[#allocation13 + $0x240] sm:$0xff]
        %v2048 = vld [vmem:[#allocation13 + $0x248] sm:$0xff]
        %v2049 = vld [vmem:[#allocation13 + $0x250] sm:$0xff]
        %v2050 = vld [vmem:[#allocation13 + $0x258] sm:$0xff]
        %v2051 = vld [vmem:[#allocation13 + $0x260] sm:$0xff]
        %v2052 = vld [vmem:[#allocation13 + $0x268] sm:$0xff]
        %v2053 = vld [vmem:[#allocation13 + $0x270] sm:$0xff]
        %v2054 = vld [vmem:[#allocation13 + $0x278] sm:$0xff]
        %v2055 = vld [vmem:[#allocation13 + $0x280] sm:$0xff]
        %v2056 = vld [vmem:[#allocation13 + $0x288] sm:$0xff]
        %v2057 = vld [vmem:[#allocation13 + $0x290] sm:$0xff]
        %v2058 = vld [vmem:[#allocation13 + $0x298] sm:$0xff]
        %v2059 = vld [vmem:[#allocation13 + $0x2a0] sm:$0xff]
        %v2060 = vld [vmem:[#allocation13 + $0x2a8] sm:$0xff]
        %v2061 = vld [vmem:[#allocation13 + $0x2b0] sm:$0xff]
        %v2062 = vld [vmem:[#allocation13 + $0x2b8] sm:$0xff]
        %v2063 = vld [vmem:[#allocation13 + $0x2c0] sm:$0xff]
        %v2064 = vld [vmem:[#allocation13 + $0x2c8] sm:$0xff]
        %v2065 = vld [vmem:[#allocation13 + $0x2d0] sm:$0xff]
        %v2066 = vld [vmem:[#allocation13 + $0x2d8] sm:$0xff]
        %v2067 = vld [vmem:[#allocation13 + $0x2e0] sm:$0xff]
        %v2068 = vld [vmem:[#allocation13 + $0x2e8] sm:$0xff]
        %v2069 = vld [vmem:[#allocation13 + $0x2f0] sm:$0xff]
        %v2070 = vld [vmem:[#allocation13 + $0x2f8] sm:$0xff]
        %v2071 = vld [vmem:[#allocation13 + $0x300] sm:$0xff]
        %v2072 = vld [vmem:[#allocation13 + $0x308] sm:$0xff]
        %v2073 = vld [vmem:[#allocation13 + $0x310] sm:$0xff]
        %v2074 = vld [vmem:[#allocation13 + $0x318] sm:$0xff]
        %v2075 = vld [vmem:[#allocation13 + $0x320] sm:$0xff]
        %v2076 = vld [vmem:[#allocation13 + $0x328] sm:$0xff]
        %v2077 = vld [vmem:[#allocation13 + $0x330] sm:$0xff]
        %v2078 = vld [vmem:[#allocation13 + $0x338] sm:$0xff]
        %v2079 = vld [vmem:[#allocation13 + $0x340] sm:$0xff]
        %v2080 = vld [vmem:[#allocation13 + $0x348] sm:$0xff]
        %v2081 = vld [vmem:[#allocation13 + $0x350] sm:$0xff]
        %v2082 = vld [vmem:[#allocation13 + $0x358] sm:$0xff]
        %v2083 = vld [vmem:[#allocation13 + $0x360] sm:$0xff]
        %v2084 = vld [vmem:[#allocation13 + $0x368] sm:$0xff]
        %v2085 = vld [vmem:[#allocation13 + $0x370] sm:$0xff]
        %v2086 = vld [vmem:[#allocation13 + $0x378] sm:$0xff]
        %v2087 = vld [vmem:[#allocation13 + $0x380] sm:$0xff]
        %v2088 = vld [vmem:[#allocation13 + $0x388] sm:$0xff]
        %v2089 = vld [vmem:[#allocation13 + $0x390] sm:$0xff]
        %v2090 = vld [vmem:[#allocation13 + $0x398] sm:$0xff]
        %v2091 = vld [vmem:[#allocation13 + $0x3a0] sm:$0xff]
        %v2092 = vld [vmem:[#allocation13 + $0x3a8] sm:$0xff]
        %v2093 = vld [vmem:[#allocation13 + $0x3b0] sm:$0xff]
        %v2094 = vld [vmem:[#allocation13 + $0x3b8] sm:$0xff]
        %v2095 = vld [vmem:[#allocation13 + $0x3c0] sm:$0xff]
        %v2096 = vld [vmem:[#allocation13 + $0x3c8] sm:$0xff]
        %v2097 = vld [vmem:[#allocation13 + $0x3d0] sm:$0xff]
        %v2098 = vld [vmem:[#allocation13 + $0x3d8] sm:$0xff]
        %v2099 = vld [vmem:[#allocation13 + $0x3e0] sm:$0xff]
        %v2100 = vld [vmem:[#allocation13 + $0x3e8] sm:$0xff]
        %v2101 = vld [vmem:[#allocation13 + $0x3f0] sm:$0xff]
        %v2102 = vld [vmem:[#allocation13 + $0x3f8] sm:$0xff]
        %v2103 = vld [vmem:[#allocation13 + $0x400] sm:$0xff]
        %v2104 = vld [vmem:[#allocation13 + $0x408] sm:$0xff]
        %v2105 = vld [vmem:[#allocation13 + $0x410] sm:$0xff]
        %v2106 = vld [vmem:[#allocation13 + $0x418] sm:$0xff]
        %v2107 = vld [vmem:[#allocation13 + $0x420] sm:$0xff]
        %v2108 = vld [vmem:[#allocation13 + $0x428] sm:$0xff]
        %v2109 = vld [vmem:[#allocation13 + $0x430] sm:$0xff]
        %v2110 = vld [vmem:[#allocation13 + $0x438] sm:$0xff]
        %v2111 = vld [vmem:[#allocation13 + $0x440] sm:$0xff]
        %v2112 = vld [vmem:[#allocation13 + $0x448] sm:$0xff]
        %v2113 = vld [vmem:[#allocation13 + $0x450] sm:$0xff]
        %v2114 = vld [vmem:[#allocation13 + $0x458] sm:$0xff]
        %v2115 = vld [vmem:[#allocation13 + $0x460] sm:$0xff]
        %v2116 = vld [vmem:[#allocation13 + $0x468] sm:$0xff]
        %v2117 = vld [vmem:[#allocation13 + $0x470] sm:$0xff]
        %v2118 = vld [vmem:[#allocation13 + $0x478] sm:$0xff]
        %v2119 = vld [vmem:[#allocation13 + $0x480] sm:$0xff]
        %v2120 = vld [vmem:[#allocation13 + $0x488] sm:$0xff]
        %v2121 = vld [vmem:[#allocation13 + $0x490] sm:$0xff]
        %v2122 = vld [vmem:[#allocation13 + $0x498] sm:$0xff]
        %v2123 = vld [vmem:[#allocation13 + $0x4a0] sm:$0xff]
        %v2124 = vld [vmem:[#allocation13 + $0x4a8] sm:$0xff]
        %v2125 = vld [vmem:[#allocation13 + $0x4b0] sm:$0xff]
        %v2126 = vld [vmem:[#allocation13 + $0x4b8] sm:$0xff]
        %v2127 = vld [vmem:[#allocation13 + $0x4c0] sm:$0xff]
        %v2128 = vld [vmem:[#allocation13 + $0x4c8] sm:$0xff]
        %v2129 = vld [vmem:[#allocation13 + $0x4d0] sm:$0xff]
        %v2130 = vld [vmem:[#allocation13 + $0x4d8] sm:$0xff]
        %v2131 = vld [vmem:[#allocation15] sm:$0xff]
        %v2132 = vld [vmem:[#allocation15 + $0x8] sm:$0xff]
        %v2133 = vld [vmem:[#allocation15 + $0x10] sm:$0xff]
        %v2134 = vld [vmem:[#allocation15 + $0x18] sm:$0xff]
        %v2135 = vld [vmem:[#allocation15 + $0x20] sm:$0xff]
        %v2136 = vld [vmem:[#allocation15 + $0x28] sm:$0xff]
        %v2137 = vld [vmem:[#allocation15 + $0x30] sm:$0xff]
        %v2138 = vld [vmem:[#allocation15 + $0x38] sm:$0xff]
        %v2139 = vld [vmem:[#allocation15 + $0x40] sm:$0xff]
        %v2140 = vld [vmem:[#allocation15 + $0x48] sm:$0xff]
        %v2141 = vld [vmem:[#allocation15 + $0x50] sm:$0xff]
        %v2142 = vld [vmem:[#allocation15 + $0x58] sm:$0xff]
        %v2143 = vld [vmem:[#allocation15 + $0x60] sm:$0xff]
        %v2144 = vld [vmem:[#allocation15 + $0x68] sm:$0xff]
        %v2145 = vld [vmem:[#allocation15 + $0x70] sm:$0xff]
        %v2146 = vld [vmem:[#allocation15 + $0x78] sm:$0xff]
        %v2147 = vld [vmem:[#allocation15 + $0x80] sm:$0xff]
        %v2148 = vld [vmem:[#allocation15 + $0x88] sm:$0xff]
        %v2149 = vld [vmem:[#allocation15 + $0x90] sm:$0xff]
        %v2150 = vld [vmem:[#allocation15 + $0x98] sm:$0xff]
        %v2151 = vld [vmem:[#allocation15 + $0xa0] sm:$0xff]
        %v2152 = vld [vmem:[#allocation15 + $0xa8] sm:$0xff]
        %v2153 = vld [vmem:[#allocation15 + $0xb0] sm:$0xff]
        %v2154 = vld [vmem:[#allocation15 + $0xb8] sm:$0xff]
        %v2155 = vld [vmem:[#allocation15 + $0xc0] sm:$0xff]
        %v2156 = vld [vmem:[#allocation15 + $0xc8] sm:$0xff]
        %v2157 = vld [vmem:[#allocation15 + $0xd0] sm:$0xff]
        %v2158 = vld [vmem:[#allocation15 + $0xd8] sm:$0xff]
        %v2159 = vld [vmem:[#allocation15 + $0xe0] sm:$0xff]
        %v2160 = vld [vmem:[#allocation15 + $0xe8] sm:$0xff]
        %v2161 = vld [vmem:[#allocation15 + $0xf0] sm:$0xff]
        %v2162 = vld [vmem:[#allocation15 + $0xf8] sm:$0xff]
        %v2163 = vld [vmem:[#allocation15 + $0x100] sm:$0xff]
        %v2164 = vld [vmem:[#allocation15 + $0x108] sm:$0xff]
        %v2165 = vld [vmem:[#allocation15 + $0x110] sm:$0xff]
        %v2166 = vld [vmem:[#allocation15 + $0x118] sm:$0xff]
        %v2167 = vld [vmem:[#allocation15 + $0x120] sm:$0xff]
        %v2168 = vld [vmem:[#allocation15 + $0x128] sm:$0xff]
        %v2169 = vld [vmem:[#allocation15 + $0x130] sm:$0xff]
        %v2170 = vld [vmem:[#allocation15 + $0x138] sm:$0xff]
        %v2171 = vld [vmem:[#allocation15 + $0x140] sm:$0xff]
        %v2172 = vld [vmem:[#allocation15 + $0x148] sm:$0xff]
        %v2173 = vld [vmem:[#allocation15 + $0x150] sm:$0xff]
        %v2174 = vld [vmem:[#allocation15 + $0x158] sm:$0xff]
        %v2175 = vld [vmem:[#allocation15 + $0x160] sm:$0xff]
        %v2176 = vld [vmem:[#allocation15 + $0x168] sm:$0xff]
        %v2177 = vld [vmem:[#allocation15 + $0x170] sm:$0xff]
        %v2178 = vld [vmem:[#allocation15 + $0x178] sm:$0xff]
        %v2179 = vld [vmem:[#allocation15 + $0x180] sm:$0xff]
        %v2180 = vld [vmem:[#allocation15 + $0x188] sm:$0xff]
        %v2181 = vld [vmem:[#allocation15 + $0x190] sm:$0xff]
        %v2182 = vld [vmem:[#allocation15 + $0x198] sm:$0xff]
        %v2183 = vld [vmem:[#allocation15 + $0x1a0] sm:$0xff]
        %v2184 = vld [vmem:[#allocation15 + $0x1a8] sm:$0xff]
        %v2185 = vld [vmem:[#allocation15 + $0x1b0] sm:$0xff]
        %v2186 = vld [vmem:[#allocation15 + $0x1b8] sm:$0xff]
        %v2187 = vld [vmem:[#allocation15 + $0x1c0] sm:$0xff]
        %v2188 = vld [vmem:[#allocation15 + $0x1c8] sm:$0xff]
        %v2189 = vld [vmem:[#allocation15 + $0x1d0] sm:$0xff]
        %v2190 = vld [vmem:[#allocation15 + $0x1d8] sm:$0xff]
        %v2191 = vld [vmem:[#allocation15 + $0x1e0] sm:$0xff]
        %v2192 = vld [vmem:[#allocation15 + $0x1e8] sm:$0xff]
        %v2193 = vld [vmem:[#allocation15 + $0x1f0] sm:$0xff]
        %v2194 = vld [vmem:[#allocation15 + $0x1f8] sm:$0xff]
        %v2195 = vld [vmem:[#allocation15 + $0x200] sm:$0xff]
        %v2196 = vld [vmem:[#allocation15 + $0x208] sm:$0xff]
        %v2197 = vld [vmem:[#allocation15 + $0x210] sm:$0xff]
        %v2198 = vld [vmem:[#allocation15 + $0x218] sm:$0xff]
        %v2199 = vld [vmem:[#allocation15 + $0x220] sm:$0xff]
        %v2200 = vld [vmem:[#allocation15 + $0x228] sm:$0xff]
        %v2201 = vld [vmem:[#allocation15 + $0x230] sm:$0xff]
        %v2202 = vld [vmem:[#allocation15 + $0x238] sm:$0xff]
        %v2203 = vld [vmem:[#allocation15 + $0x240] sm:$0xff]
        %v2204 = vld [vmem:[#allocation15 + $0x248] sm:$0xff]
        %v2205 = vld [vmem:[#allocation15 + $0x250] sm:$0xff]
        %v2206 = vld [vmem:[#allocation15 + $0x258] sm:$0xff]
        %v2207 = vld [vmem:[#allocation15 + $0x260] sm:$0xff]
        %v2208 = vld [vmem:[#allocation15 + $0x268] sm:$0xff]
        %v2209 = vld [vmem:[#allocation15 + $0x270] sm:$0xff]
        %v2210 = vld [vmem:[#allocation15 + $0x278] sm:$0xff]
        %v2211 = vld [vmem:[#allocation15 + $0x280] sm:$0xff]
        %v2212 = vld [vmem:[#allocation15 + $0x288] sm:$0xff]
        %v2213 = vld [vmem:[#allocation15 + $0x290] sm:$0xff]
        %v2214 = vld [vmem:[#allocation15 + $0x298] sm:$0xff]
        %v2215 = vld [vmem:[#allocation15 + $0x2a0] sm:$0xff]
        %v2216 = vld [vmem:[#allocation15 + $0x2a8] sm:$0xff]
        %v2217 = vld [vmem:[#allocation15 + $0x2b0] sm:$0xff]
        %v2218 = vld [vmem:[#allocation15 + $0x2b8] sm:$0xff]
        %v2219 = vld [vmem:[#allocation15 + $0x2c0] sm:$0xff]
        %v2220 = vld [vmem:[#allocation15 + $0x2c8] sm:$0xff]
        %v2221 = vld [vmem:[#allocation15 + $0x2d0] sm:$0xff]
        %v2222 = vld [vmem:[#allocation15 + $0x2d8] sm:$0xff]
        %v2223 = vld [vmem:[#allocation15 + $0x2e0] sm:$0xff]
        %v2224 = vld [vmem:[#allocation15 + $0x2e8] sm:$0xff]
        %v2225 = vld [vmem:[#allocation15 + $0x2f0] sm:$0xff]
        %v2226 = vld [vmem:[#allocation15 + $0x2f8] sm:$0xff]
        %v2227 = vld [vmem:[#allocation15 + $0x300] sm:$0xff]
        %v2228 = vld [vmem:[#allocation15 + $0x308] sm:$0xff]
        %v2229 = vld [vmem:[#allocation15 + $0x310] sm:$0xff]
        %v2230 = vld [vmem:[#allocation15 + $0x318] sm:$0xff]
        %v2231 = vld [vmem:[#allocation15 + $0x320] sm:$0xff]
        %v2232 = vld [vmem:[#allocation15 + $0x328] sm:$0xff]
        %v2233 = vld [vmem:[#allocation15 + $0x330] sm:$0xff]
        %v2234 = vld [vmem:[#allocation15 + $0x338] sm:$0xff]
        %v2235 = vld [vmem:[#allocation15 + $0x340] sm:$0xff]
        %v2236 = vld [vmem:[#allocation15 + $0x348] sm:$0xff]
        %v2237 = vld [vmem:[#allocation15 + $0x350] sm:$0xff]
        %v2238 = vld [vmem:[#allocation15 + $0x358] sm:$0xff]
        %v2239 = vld [vmem:[#allocation15 + $0x360] sm:$0xff]
        %v2240 = vld [vmem:[#allocation15 + $0x368] sm:$0xff]
        %v2241 = vld [vmem:[#allocation15 + $0x370] sm:$0xff]
        %v2242 = vld [vmem:[#allocation15 + $0x378] sm:$0xff]
        %v2243 = vld [vmem:[#allocation15 + $0x380] sm:$0xff]
        %v2244 = vld [vmem:[#allocation15 + $0x388] sm:$0xff]
        %v2245 = vld [vmem:[#allocation15 + $0x390] sm:$0xff]
        %v2246 = vld [vmem:[#allocation15 + $0x398] sm:$0xff]
        %v2247 = vld [vmem:[#allocation15 + $0x3a0] sm:$0xff]
        %v2248 = vld [vmem:[#allocation15 + $0x3a8] sm:$0xff]
        %v2249 = vld [vmem:[#allocation15 + $0x3b0] sm:$0xff]
        %v2250 = vld [vmem:[#allocation15 + $0x3b8] sm:$0xff]
        %v2251 = vld [vmem:[#allocation15 + $0x3c0] sm:$0xff]
        %v2252 = vld [vmem:[#allocation15 + $0x3c8] sm:$0xff]
        %v2253 = vld [vmem:[#allocation15 + $0x3d0] sm:$0xff]
        %v2254 = vld [vmem:[#allocation15 + $0x3d8] sm:$0xff]
        %v2255 = vld [vmem:[#allocation15 + $0x3e0] sm:$0xff]
        %v2256 = vld [vmem:[#allocation15 + $0x3e8] sm:$0xff]
        %v2257 = vld [vmem:[#allocation15 + $0x3f0] sm:$0xff]
        %v2258 = vld [vmem:[#allocation15 + $0x3f8] sm:$0xff]
        %v2259 = vld [vmem:[#allocation15 + $0x400] sm:$0xff]
        %v2260 = vld [vmem:[#allocation15 + $0x408] sm:$0xff]
        %v2261 = vld [vmem:[#allocation15 + $0x410] sm:$0xff]
        %v2262 = vld [vmem:[#allocation15 + $0x418] sm:$0xff]
        %v2263 = vld [vmem:[#allocation15 + $0x420] sm:$0xff]
        %v2264 = vld [vmem:[#allocation15 + $0x428] sm:$0xff]
        %v2265 = vld [vmem:[#allocation15 + $0x430] sm:$0xff]
        %v2266 = vld [vmem:[#allocation15 + $0x438] sm:$0xff]
        %v2267 = vld [vmem:[#allocation15 + $0x440] sm:$0xff]
        %v2268 = vld [vmem:[#allocation15 + $0x448] sm:$0xff]
        %v2269 = vld [vmem:[#allocation15 + $0x450] sm:$0xff]
        %v2270 = vld [vmem:[#allocation15 + $0x458] sm:$0xff]
        %v2271 = vld [vmem:[#allocation15 + $0x460] sm:$0xff]
        %v2272 = vld [vmem:[#allocation15 + $0x468] sm:$0xff]
        %v2273 = vld [vmem:[#allocation15 + $0x470] sm:$0xff]
        %v2274 = vld [vmem:[#allocation15 + $0x478] sm:$0xff]
        %v2275 = vld [vmem:[#allocation15 + $0x480] sm:$0xff]
        %v2276 = vld [vmem:[#allocation15 + $0x488] sm:$0xff]
        %v2277 = vld [vmem:[#allocation15 + $0x490] sm:$0xff]
        %v2278 = vld [vmem:[#allocation15 + $0x498] sm:$0xff]
        %v2279 = vld [vmem:[#allocation15 + $0x4a0] sm:$0xff]
        %v2280 = vld [vmem:[#allocation15 + $0x4a8] sm:$0xff]
        %v2281 = vld [vmem:[#allocation15 + $0x4b0] sm:$0xff]
        %v2282 = vld [vmem:[#allocation15 + $0x4b8] sm:$0xff]
        %v2283 = vld [vmem:[#allocation15 + $0x4c0] sm:$0xff]
        %v2284 = vld [vmem:[#allocation15 + $0x4c8] sm:$0xff]
        %v2285 = vld [vmem:[#allocation15 + $0x4d0] sm:$0xff]
        %v2286 = vld [vmem:[#allocation15 + $0x4d8] sm:$0xff]
        %v2287 = vld [vmem:[#allocation2] sm:$0xfe]
        %v2288 = vld [vmem:[#allocation2 + $0x8] sm:$0xfe]
        %v2289 = vld [vmem:[#allocation2 + $0x10] sm:$0xfe]
        %v2290 = vld [vmem:[#allocation2 + $0x18] sm:$0xfe]
        %v2291 = vld [vmem:[#allocation2 + $0x20] sm:$0xf]
        %v2292 = vld [vmem:[#allocation2 + $0x28] sm:$0xf]
        %v2293 = vld [vmem:[#allocation2 + $0x30] sm:$0xf]
        %v2294 = vld [vmem:[#allocation2 + $0x38] sm:$0xf]
        %s2295 = scalar_lea.vmem [#allocation13], 1248
        %v2296 = vld [vmem:[%s2295] sm:$0xff]
        %v2297 = vld [vmem:[%s2295 + $0x8] sm:$0xff]
        %v2298 = vld [vmem:[%s2295 + $0x10] sm:$0xff]
        %v2299 = vld [vmem:[%s2295 + $0x18] sm:$0xff]
        %v2300 = vld [vmem:[%s2295 + $0x20] sm:$0xff]
        %v2301 = vld [vmem:[%s2295 + $0x28] sm:$0xff]
        %v2302 = vld [vmem:[%s2295 + $0x30] sm:$0xff]
        %v2303 = vld [vmem:[%s2295 + $0x38] sm:$0xff]
        %v2304 = vld [vmem:[%s2295 + $0x40] sm:$0xff]
        %v2305 = vld [vmem:[%s2295 + $0x48] sm:$0xff]
        %v2306 = vld [vmem:[%s2295 + $0x50] sm:$0xff]
        %v2307 = vld [vmem:[%s2295 + $0x58] sm:$0xff]
        %v2308 = vld [vmem:[%s2295 + $0x60] sm:$0xff]
        %v2309 = vld [vmem:[%s2295 + $0x68] sm:$0xff]
        %v2310 = vld [vmem:[%s2295 + $0x70] sm:$0xff]
        %v2311 = vld [vmem:[%s2295 + $0x78] sm:$0xff]
        %v2312 = vld [vmem:[%s2295 + $0x80] sm:$0xff]
        %v2313 = vld [vmem:[%s2295 + $0x88] sm:$0xff]
        %v2314 = vld [vmem:[%s2295 + $0x90] sm:$0xff]
        %v2315 = vld [vmem:[%s2295 + $0x98] sm:$0xff]
        %v2316 = vld [vmem:[%s2295 + $0xa0] sm:$0xff]
        %v2317 = vld [vmem:[%s2295 + $0xa8] sm:$0xff]
        %v2318 = vld [vmem:[%s2295 + $0xb0] sm:$0xff]
        %v2319 = vld [vmem:[%s2295 + $0xb8] sm:$0xff]
        %v2320 = vld [vmem:[%s2295 + $0xc0] sm:$0xff]
        %v2321 = vld [vmem:[%s2295 + $0xc8] sm:$0xff]
        %v2322 = vld [vmem:[%s2295 + $0xd0] sm:$0xff]
        %v2323 = vld [vmem:[%s2295 + $0xd8] sm:$0xff]
        %v2324 = vld [vmem:[%s2295 + $0xe0] sm:$0xff]
        %v2325 = vld [vmem:[%s2295 + $0xe8] sm:$0xff]
        %v2326 = vld [vmem:[%s2295 + $0xf0] sm:$0xff]
        %v2327 = vld [vmem:[%s2295 + $0xf8] sm:$0xff]
        %v2328 = vld [vmem:[%s2295 + $0x100] sm:$0xff]
        %v2329 = vld [vmem:[%s2295 + $0x108] sm:$0xff]
        %v2330 = vld [vmem:[%s2295 + $0x110] sm:$0xff]
        %v2331 = vld [vmem:[%s2295 + $0x118] sm:$0xff]
        %v2332 = vld [vmem:[%s2295 + $0x120] sm:$0xff]
        %v2333 = vld [vmem:[%s2295 + $0x128] sm:$0xff]
        %v2334 = vld [vmem:[%s2295 + $0x130] sm:$0xff]
        %v2335 = vld [vmem:[%s2295 + $0x138] sm:$0xff]
        %v2336 = vld [vmem:[%s2295 + $0x140] sm:$0xff]
        %v2337 = vld [vmem:[%s2295 + $0x148] sm:$0xff]
        %v2338 = vld [vmem:[%s2295 + $0x150] sm:$0xff]
        %v2339 = vld [vmem:[%s2295 + $0x158] sm:$0xff]
        %v2340 = vld [vmem:[%s2295 + $0x160] sm:$0xff]
        %v2341 = vld [vmem:[%s2295 + $0x168] sm:$0xff]
        %v2342 = vld [vmem:[%s2295 + $0x170] sm:$0xff]
        %v2343 = vld [vmem:[%s2295 + $0x178] sm:$0xff]
        %v2344 = vld [vmem:[%s2295 + $0x180] sm:$0xff]
        %v2345 = vld [vmem:[%s2295 + $0x188] sm:$0xff]
        %v2346 = vld [vmem:[%s2295 + $0x190] sm:$0xff]
        %v2347 = vld [vmem:[%s2295 + $0x198] sm:$0xff]
        %v2348 = vld [vmem:[%s2295 + $0x1a0] sm:$0xff]
        %v2349 = vld [vmem:[%s2295 + $0x1a8] sm:$0xff]
        %v2350 = vld [vmem:[%s2295 + $0x1b0] sm:$0xff]
        %v2351 = vld [vmem:[%s2295 + $0x1b8] sm:$0xff]
        %v2352 = vld [vmem:[%s2295 + $0x1c0] sm:$0xff]
        %v2353 = vld [vmem:[%s2295 + $0x1c8] sm:$0xff]
        %v2354 = vld [vmem:[%s2295 + $0x1d0] sm:$0xff]
        %v2355 = vld [vmem:[%s2295 + $0x1d8] sm:$0xff]
        %v2356 = vld [vmem:[%s2295 + $0x1e0] sm:$0xff]
        %v2357 = vld [vmem:[%s2295 + $0x1e8] sm:$0xff]
        %v2358 = vld [vmem:[%s2295 + $0x1f0] sm:$0xff]
        %v2359 = vld [vmem:[%s2295 + $0x1f8] sm:$0xff]
        %v2360 = vld [vmem:[%s2295 + $0x200] sm:$0xff]
        %v2361 = vld [vmem:[%s2295 + $0x208] sm:$0xff]
        %v2362 = vld [vmem:[%s2295 + $0x210] sm:$0xff]
        %v2363 = vld [vmem:[%s2295 + $0x218] sm:$0xff]
        %v2364 = vld [vmem:[%s2295 + $0x220] sm:$0xff]
        %v2365 = vld [vmem:[%s2295 + $0x228] sm:$0xff]
        %v2366 = vld [vmem:[%s2295 + $0x230] sm:$0xff]
        %v2367 = vld [vmem:[%s2295 + $0x238] sm:$0xff]
        %v2368 = vld [vmem:[%s2295 + $0x240] sm:$0xff]
        %v2369 = vld [vmem:[%s2295 + $0x248] sm:$0xff]
        %v2370 = vld [vmem:[%s2295 + $0x250] sm:$0xff]
        %v2371 = vld [vmem:[%s2295 + $0x258] sm:$0xff]
        %v2372 = vld [vmem:[%s2295 + $0x260] sm:$0xff]
        %v2373 = vld [vmem:[%s2295 + $0x268] sm:$0xff]
        %v2374 = vld [vmem:[%s2295 + $0x270] sm:$0xff]
        %v2375 = vld [vmem:[%s2295 + $0x278] sm:$0xff]
        %v2376 = vld [vmem:[%s2295 + $0x280] sm:$0xff]
        %v2377 = vld [vmem:[%s2295 + $0x288] sm:$0xff]
        %v2378 = vld [vmem:[%s2295 + $0x290] sm:$0xff]
        %v2379 = vld [vmem:[%s2295 + $0x298] sm:$0xff]
        %v2380 = vld [vmem:[%s2295 + $0x2a0] sm:$0xff]
        %v2381 = vld [vmem:[%s2295 + $0x2a8] sm:$0xff]
        %v2382 = vld [vmem:[%s2295 + $0x2b0] sm:$0xff]
        %v2383 = vld [vmem:[%s2295 + $0x2b8] sm:$0xff]
        %v2384 = vld [vmem:[%s2295 + $0x2c0] sm:$0xff]
        %v2385 = vld [vmem:[%s2295 + $0x2c8] sm:$0xff]
        %v2386 = vld [vmem:[%s2295 + $0x2d0] sm:$0xff]
        %v2387 = vld [vmem:[%s2295 + $0x2d8] sm:$0xff]
        %v2388 = vld [vmem:[%s2295 + $0x2e0] sm:$0xff]
        %v2389 = vld [vmem:[%s2295 + $0x2e8] sm:$0xff]
        %v2390 = vld [vmem:[%s2295 + $0x2f0] sm:$0xff]
        %v2391 = vld [vmem:[%s2295 + $0x2f8] sm:$0xff]
        %v2392 = vld [vmem:[%s2295 + $0x300] sm:$0xff]
        %v2393 = vld [vmem:[%s2295 + $0x308] sm:$0xff]
        %v2394 = vld [vmem:[%s2295 + $0x310] sm:$0xff]
        %v2395 = vld [vmem:[%s2295 + $0x318] sm:$0xff]
        %v2396 = vld [vmem:[%s2295 + $0x320] sm:$0xff]
        %v2397 = vld [vmem:[%s2295 + $0x328] sm:$0xff]
        %v2398 = vld [vmem:[%s2295 + $0x330] sm:$0xff]
        %v2399 = vld [vmem:[%s2295 + $0x338] sm:$0xff]
        %v2400 = vld [vmem:[%s2295 + $0x340] sm:$0xff]
        %v2401 = vld [vmem:[%s2295 + $0x348] sm:$0xff]
        %v2402 = vld [vmem:[%s2295 + $0x350] sm:$0xff]
        %v2403 = vld [vmem:[%s2295 + $0x358] sm:$0xff]
        %v2404 = vld [vmem:[%s2295 + $0x360] sm:$0xff]
        %v2405 = vld [vmem:[%s2295 + $0x368] sm:$0xff]
        %v2406 = vld [vmem:[%s2295 + $0x370] sm:$0xff]
        %v2407 = vld [vmem:[%s2295 + $0x378] sm:$0xff]
        %v2408 = vld [vmem:[%s2295 + $0x380] sm:$0xff]
        %v2409 = vld [vmem:[%s2295 + $0x388] sm:$0xff]
        %v2410 = vld [vmem:[%s2295 + $0x390] sm:$0xff]
        %v2411 = vld [vmem:[%s2295 + $0x398] sm:$0xff]
        %v2412 = vld [vmem:[%s2295 + $0x3a0] sm:$0xff]
        %v2413 = vld [vmem:[%s2295 + $0x3a8] sm:$0xff]
        %v2414 = vld [vmem:[%s2295 + $0x3b0] sm:$0xff]
        %v2415 = vld [vmem:[%s2295 + $0x3b8] sm:$0xff]
        %v2416 = vld [vmem:[%s2295 + $0x3c0] sm:$0xff]
        %v2417 = vld [vmem:[%s2295 + $0x3c8] sm:$0xff]
        %v2418 = vld [vmem:[%s2295 + $0x3d0] sm:$0xff]
        %v2419 = vld [vmem:[%s2295 + $0x3d8] sm:$0xff]
        %v2420 = vld [vmem:[%s2295 + $0x3e0] sm:$0xff]
        %v2421 = vld [vmem:[%s2295 + $0x3e8] sm:$0xff]
        %v2422 = vld [vmem:[%s2295 + $0x3f0] sm:$0xff]
        %v2423 = vld [vmem:[%s2295 + $0x3f8] sm:$0xff]
        %v2424 = vld [vmem:[%s2295 + $0x400] sm:$0xff]
        %v2425 = vld [vmem:[%s2295 + $0x408] sm:$0xff]
        %v2426 = vld [vmem:[%s2295 + $0x410] sm:$0xff]
        %v2427 = vld [vmem:[%s2295 + $0x418] sm:$0xff]
        %v2428 = vld [vmem:[%s2295 + $0x420] sm:$0xff]
        %v2429 = vld [vmem:[%s2295 + $0x428] sm:$0xff]
        %v2430 = vld [vmem:[%s2295 + $0x430] sm:$0xff]
        %v2431 = vld [vmem:[%s2295 + $0x438] sm:$0xff]
        %v2432 = vld [vmem:[%s2295 + $0x440] sm:$0xff]
        %v2433 = vld [vmem:[%s2295 + $0x448] sm:$0xff]
        %v2434 = vld [vmem:[%s2295 + $0x450] sm:$0xff]
        %v2435 = vld [vmem:[%s2295 + $0x458] sm:$0xff]
        %v2436 = vld [vmem:[%s2295 + $0x460] sm:$0xff]
        %v2437 = vld [vmem:[%s2295 + $0x468] sm:$0xff]
        %v2438 = vld [vmem:[%s2295 + $0x470] sm:$0xff]
        %v2439 = vld [vmem:[%s2295 + $0x478] sm:$0xff]
        %v2440 = vld [vmem:[%s2295 + $0x480] sm:$0xff]
        %v2441 = vld [vmem:[%s2295 + $0x488] sm:$0xff]
        %v2442 = vld [vmem:[%s2295 + $0x490] sm:$0xff]
        %v2443 = vld [vmem:[%s2295 + $0x498] sm:$0xff]
        %v2444 = vld [vmem:[%s2295 + $0x4a0] sm:$0xff]
        %v2445 = vld [vmem:[%s2295 + $0x4a8] sm:$0xff]
        %v2446 = vld [vmem:[%s2295 + $0x4b0] sm:$0xff]
        %v2447 = vld [vmem:[%s2295 + $0x4b8] sm:$0xff]
        %v2448 = vld [vmem:[%s2295 + $0x4c0] sm:$0xff]
        %v2449 = vld [vmem:[%s2295 + $0x4c8] sm:$0xff]
        %v2450 = vld [vmem:[%s2295 + $0x4d0] sm:$0xff]
        %v2451 = vld [vmem:[%s2295 + $0x4d8] sm:$0xff]
        %vm2460 = vcmask 1046528
        %v2461 = vrot.slane %v2287, 1
        %v2462 = vrot.slane %v2291, 1
        %v2463 = vsel %vm2460, %v2461, %v2462
        %v2464 = vrot.slane %v2288, 1
        %v2465 = vrot.slane %v2292, 1
        %v2466 = vsel %vm2460, %v2464, %v2465
        %v2467 = vrot.slane %v2289, 1
        %v2468 = vrot.slane %v2293, 1
        %v2469 = vsel %vm2460, %v2467, %v2468
        %v2470 = vrot.slane %v2290, 1
        %v2471 = vrot.slane %v2294, 1
        %v2472 = vsel %vm2460, %v2470, %v2471
        %v2479 = vsel %vm1960, %v2472, 0
        %v2481 = vsel %vm1960, %v2471, 0
        %2483 = vmatpush.msra.mxu0 %v2341
        %2484 = vmatpush.msra.mxu0 %v2338
        %2485 = vmatpush.msra.mxu0 %v2335
        %2486 = vmatpush.msra.mxu0 %v2332
        %2487 = vmatpush.msra.mxu0 %v2329
        %2488 = vmatpush.msra.mxu0 %v2326
        %2489 = vmatpush.msra.mxu0 %v2323
        %2490 = vmatpush.msra.mxu0 %v2320
        %2491 = vmatpush.msra.mxu0 %v2317
        %2492 = vmatpush.msra.mxu0 %v2314
        %2493 = vmatpush.msra.mxu0 %v2311
        %2494 = vmatpush.msra.mxu0 %v2308
        %2495 = vmatpush.msra.mxu0 %v2305
        %2496 = vmatpush.msra.mxu0 %v2302
        %2497 = vmatpush.msra.mxu0 %v2299
        %2498 = vmatpush.msra.mxu0 %v2296
        %2499 = vmatmul.f32.gmra.mxu0 %v2463
        %v2500 = vpop.f32.mrf.mxu0
        %v2501 = vadd.f32 0.0, %v2500
        %2502 = vmatmul.f32.gmra.mxu0 %v2462
        %v2503 = vpop.f32.mrf.mxu0
        %v2504 = vadd.f32 0.0, %v2503
        %2505 = vdwg.mxu0
        %2506 = vmatpush.msra.mxu0 %v2389
        %2507 = vmatpush.msra.mxu0 %v2386
        %2508 = vmatpush.msra.mxu0 %v2383
        %2509 = vmatpush.msra.mxu0 %v2380
        %2510 = vmatpush.msra.mxu0 %v2377
        %2511 = vmatpush.msra.mxu0 %v2374
        %2512 = vmatpush.msra.mxu0 %v2371
        %2513 = vmatpush.msra.mxu0 %v2368
        %2514 = vmatpush.msra.mxu0 %v2365
        %2515 = vmatpush.msra.mxu0 %v2362
        %2516 = vmatpush.msra.mxu0 %v2359
        %2517 = vmatpush.msra.mxu0 %v2356
        %2518 = vmatpush.msra.mxu0 %v2353
        %2519 = vmatpush.msra.mxu0 %v2350
        %2520 = vmatpush.msra.mxu0 %v2347
        %2521 = vmatpush.msra.mxu0 %v2344
        %2522 = vmatmul.f32.gmra.mxu0 %v2466
        %v2523 = vpop.f32.mrf.mxu0
        %v2524 = vadd.f32 %v2501, %v2523
        %2525 = vmatmul.f32.gmra.mxu0 %v2465
        %v2526 = vpop.f32.mrf.mxu0
        %v2527 = vadd.f32 %v2504, %v2526
        %2528 = vdwg.mxu0
        %2529 = vmatpush.msra.mxu0 %v2437
        %2530 = vmatpush.msra.mxu0 %v2434
        %2531 = vmatpush.msra.mxu0 %v2431
        %2532 = vmatpush.msra.mxu0 %v2428
        %2533 = vmatpush.msra.mxu0 %v2425
        %2534 = vmatpush.msra.mxu0 %v2422
        %2535 = vmatpush.msra.mxu0 %v2419
        %2536 = vmatpush.msra.mxu0 %v2416
        %2537 = vmatpush.msra.mxu0 %v2413
        %2538 = vmatpush.msra.mxu0 %v2410
        %2539 = vmatpush.msra.mxu0 %v2407
        %2540 = vmatpush.msra.mxu0 %v2404
        %2541 = vmatpush.msra.mxu0 %v2401
        %2542 = vmatpush.msra.mxu0 %v2398
        %2543 = vmatpush.msra.mxu0 %v2395
        %2544 = vmatpush.msra.mxu0 %v2392
        %2545 = vmatmul.f32.gmra.mxu0 %v2469
        %v2546 = vpop.f32.mrf.mxu0
        %v2547 = vadd.f32 %v2524, %v2546
        %2548 = vmatmul.f32.gmra.mxu0 %v2468
        %v2549 = vpop.f32.mrf.mxu0
        %v2550 = vadd.f32 %v2527, %v2549
        %2551 = vdwg.mxu0
        %2552 = vmatpush.msra.mxu0 0.0
        %2553 = vmatpush.msra.mxu0 0.0
        %2554 = vmatpush.msra.mxu0 0.0
        %2555 = vmatpush.msra.mxu0 0.0
        %2556 = vmatpush.msra.mxu0 0.0
        %2557 = vmatpush.msra.mxu0 0.0
        %2558 = vmatpush.msra.mxu0 0.0
        %2559 = vmatpush.msra.mxu0 0.0
        %2560 = vmatpush.msra.mxu0 0.0
        %2561 = vmatpush.msra.mxu0 0.0
        %2562 = vmatpush.msra.mxu0 0.0
        %2563 = vmatpush.msra.mxu0 0.0
        %2564 = vmatpush.msra.mxu0 %v2449
        %2565 = vmatpush.msra.mxu0 %v2446
        %2566 = vmatpush.msra.mxu0 %v2443
        %2567 = vmatpush.msra.mxu0 %v2440
        %2568 = vmatmul.f32.gmra.mxu0 %v2479
        %v2569 = vpop.f32.mrf.mxu0
        %v2570 = vadd.f32 %v2547, %v2569
        %2571 = vmatmul.f32.gmra.mxu0 %v2481
        %v2572 = vpop.f32.mrf.mxu0
        %v2573 = vadd.f32 %v2550, %v2572
        %2574 = vdwg.mxu0
        %2575 = vmatpush.msra.mxu0 %v2342
        %2576 = vmatpush.msra.mxu0 %v2339
        %2577 = vmatpush.msra.mxu0 %v2336
        %2578 = vmatpush.msra.mxu0 %v2333
        %2579 = vmatpush.msra.mxu0 %v2330
        %2580 = vmatpush.msra.mxu0 %v2327
        %2581 = vmatpush.msra.mxu0 %v2324
        %2582 = vmatpush.msra.mxu0 %v2321
        %2583 = vmatpush.msra.mxu0 %v2318
        %2584 = vmatpush.msra.mxu0 %v2315
        %2585 = vmatpush.msra.mxu0 %v2312
        %2586 = vmatpush.msra.mxu0 %v2309
        %2587 = vmatpush.msra.mxu0 %v2306
        %2588 = vmatpush.msra.mxu0 %v2303
        %2589 = vmatpush.msra.mxu0 %v2300
        %2590 = vmatpush.msra.mxu0 %v2297
        %2591 = vmatmul.f32.gmra.mxu0 %v2463
        %v2592 = vpop.f32.mrf.mxu0
        %v2593 = vadd.f32 0.0, %v2592
        %2594 = vmatmul.f32.gmra.mxu0 %v2462
        %v2595 = vpop.f32.mrf.mxu0
        %v2596 = vadd.f32 0.0, %v2595
        %2597 = vdwg.mxu0
        %2598 = vmatpush.msra.mxu0 %v2390
        %2599 = vmatpush.msra.mxu0 %v2387
        %2600 = vmatpush.msra.mxu0 %v2384
        %2601 = vmatpush.msra.mxu0 %v2381
        %2602 = vmatpush.msra.mxu0 %v2378
        %2603 = vmatpush.msra.mxu0 %v2375
        %2604 = vmatpush.msra.mxu0 %v2372
        %2605 = vmatpush.msra.mxu0 %v2369
        %2606 = vmatpush.msra.mxu0 %v2366
        %2607 = vmatpush.msra.mxu0 %v2363
        %2608 = vmatpush.msra.mxu0 %v2360
        %2609 = vmatpush.msra.mxu0 %v2357
        %2610 = vmatpush.msra.mxu0 %v2354
        %2611 = vmatpush.msra.mxu0 %v2351
        %2612 = vmatpush.msra.mxu0 %v2348
        %2613 = vmatpush.msra.mxu0 %v2345
        %2614 = vmatmul.f32.gmra.mxu0 %v2466
        %v2615 = vpop.f32.mrf.mxu0
        %v2616 = vadd.f32 %v2593, %v2615
        %2617 = vmatmul.f32.gmra.mxu0 %v2465
        %v2618 = vpop.f32.mrf.mxu0
        %v2619 = vadd.f32 %v2596, %v2618
        %2620 = vdwg.mxu0
        %2621 = vmatpush.msra.mxu0 %v2438
        %2622 = vmatpush.msra.mxu0 %v2435
        %2623 = vmatpush.msra.mxu0 %v2432
        %2624 = vmatpush.msra.mxu0 %v2429
        %2625 = vmatpush.msra.mxu0 %v2426
        %2626 = vmatpush.msra.mxu0 %v2423
        %2627 = vmatpush.msra.mxu0 %v2420
        %2628 = vmatpush.msra.mxu0 %v2417
        %2629 = vmatpush.msra.mxu0 %v2414
        %2630 = vmatpush.msra.mxu0 %v2411
        %2631 = vmatpush.msra.mxu0 %v2408
        %2632 = vmatpush.msra.mxu0 %v2405
        %2633 = vmatpush.msra.mxu0 %v2402
        %2634 = vmatpush.msra.mxu0 %v2399
        %2635 = vmatpush.msra.mxu0 %v2396
        %2636 = vmatpush.msra.mxu0 %v2393
        %2637 = vmatmul.f32.gmra.mxu0 %v2469
        %v2638 = vpop.f32.mrf.mxu0
        %v2639 = vadd.f32 %v2616, %v2638
        %2640 = vmatmul.f32.gmra.mxu0 %v2468
        %v2641 = vpop.f32.mrf.mxu0
        %v2642 = vadd.f32 %v2619, %v2641
        %2643 = vdwg.mxu0
        %2644 = vmatpush.msra.mxu0 0.0
        %2645 = vmatpush.msra.mxu0 0.0
        %2646 = vmatpush.msra.mxu0 0.0
        %2647 = vmatpush.msra.mxu0 0.0
        %2648 = vmatpush.msra.mxu0 0.0
        %2649 = vmatpush.msra.mxu0 0.0
        %2650 = vmatpush.msra.mxu0 0.0
        %2651 = vmatpush.msra.mxu0 0.0
        %2652 = vmatpush.msra.mxu0 0.0
        %2653 = vmatpush.msra.mxu0 0.0
        %2654 = vmatpush.msra.mxu0 0.0
        %2655 = vmatpush.msra.mxu0 0.0
        %2656 = vmatpush.msra.mxu0 %v2450
        %2657 = vmatpush.msra.mxu0 %v2447
        %2658 = vmatpush.msra.mxu0 %v2444
        %2659 = vmatpush.msra.mxu0 %v2441
        %2660 = vmatmul.f32.gmra.mxu0 %v2479
        %v2661 = vpop.f32.mrf.mxu0
        %v2662 = vadd.f32 %v2639, %v2661
        %2663 = vmatmul.f32.gmra.mxu0 %v2481
        %v2664 = vpop.f32.mrf.mxu0
        %v2665 = vadd.f32 %v2642, %v2664
        %2666 = vdwg.mxu0
        %2667 = vmatpush.msra.mxu0 %v2343
        %2668 = vmatpush.msra.mxu0 %v2340
        %2669 = vmatpush.msra.mxu0 %v2337
        %2670 = vmatpush.msra.mxu0 %v2334
        %2671 = vmatpush.msra.mxu0 %v2331
        %2672 = vmatpush.msra.mxu0 %v2328
        %2673 = vmatpush.msra.mxu0 %v2325
        %2674 = vmatpush.msra.mxu0 %v2322
        %2675 = vmatpush.msra.mxu0 %v2319
        %2676 = vmatpush.msra.mxu0 %v2316
        %2677 = vmatpush.msra.mxu0 %v2313
        %2678 = vmatpush.msra.mxu0 %v2310
        %2679 = vmatpush.msra.mxu0 %v2307
        %2680 = vmatpush.msra.mxu0 %v2304
        %2681 = vmatpush.msra.mxu0 %v2301
        %2682 = vmatpush.msra.mxu0 %v2298
        %2683 = vmatmul.f32.gmra.mxu0 %v2463
        %v2684 = vpop.f32.mrf.mxu0
        %v2685 = vadd.f32 0.0, %v2684
        %2686 = vmatmul.f32.gmra.mxu0 %v2462
        %v2687 = vpop.f32.mrf.mxu0
        %v2688 = vadd.f32 0.0, %v2687
        %2689 = vdwg.mxu0
        %2690 = vmatpush.msra.mxu0 %v2391
        %2691 = vmatpush.msra.mxu0 %v2388
        %2692 = vmatpush.msra.mxu0 %v2385
        %2693 = vmatpush.msra.mxu0 %v2382
        %2694 = vmatpush.msra.mxu0 %v2379
        %2695 = vmatpush.msra.mxu0 %v2376
        %2696 = vmatpush.msra.mxu0 %v2373
        %2697 = vmatpush.msra.mxu0 %v2370
        %2698 = vmatpush.msra.mxu0 %v2367
        %2699 = vmatpush.msra.mxu0 %v2364
        %2700 = vmatpush.msra.mxu0 %v2361
        %2701 = vmatpush.msra.mxu0 %v2358
        %2702 = vmatpush.msra.mxu0 %v2355
        %2703 = vmatpush.msra.mxu0 %v2352
        %2704 = vmatpush.msra.mxu0 %v2349
        %2705 = vmatpush.msra.mxu0 %v2346
        %2706 = vmatmul.f32.gmra.mxu0 %v2466
        %v2707 = vpop.f32.mrf.mxu0
        %v2708 = vadd.f32 %v2685, %v2707
        %2709 = vmatmul.f32.gmra.mxu0 %v2465
        %v2710 = vpop.f32.mrf.mxu0
        %v2711 = vadd.f32 %v2688, %v2710
        %2712 = vdwg.mxu0
        %2713 = vmatpush.msra.mxu0 %v2439
        %2714 = vmatpush.msra.mxu0 %v2436
        %2715 = vmatpush.msra.mxu0 %v2433
        %2716 = vmatpush.msra.mxu0 %v2430
        %2717 = vmatpush.msra.mxu0 %v2427
        %2718 = vmatpush.msra.mxu0 %v2424
        %2719 = vmatpush.msra.mxu0 %v2421
        %2720 = vmatpush.msra.mxu0 %v2418
        %2721 = vmatpush.msra.mxu0 %v2415
        %2722 = vmatpush.msra.mxu0 %v2412
        %2723 = vmatpush.msra.mxu0 %v2409
        %2724 = vmatpush.msra.mxu0 %v2406
        %2725 = vmatpush.msra.mxu0 %v2403
        %2726 = vmatpush.msra.mxu0 %v2400
        %2727 = vmatpush.msra.mxu0 %v2397
        %2728 = vmatpush.msra.mxu0 %v2394
        %2729 = vmatmul.f32.gmra.mxu0 %v2469
        %v2730 = vpop.f32.mrf.mxu0
        %v2731 = vadd.f32 %v2708, %v2730
        %2732 = vmatmul.f32.gmra.mxu0 %v2468
        %v2733 = vpop.f32.mrf.mxu0
        %v2734 = vadd.f32 %v2711, %v2733
        %2735 = vdwg.mxu0
        %2736 = vmatpush.msra.mxu0 0.0
        %2737 = vmatpush.msra.mxu0 0.0
        %2738 = vmatpush.msra.mxu0 0.0
        %2739 = vmatpush.msra.mxu0 0.0
        %2740 = vmatpush.msra.mxu0 0.0
        %2741 = vmatpush.msra.mxu0 0.0
        %2742 = vmatpush.msra.mxu0 0.0
        %2743 = vmatpush.msra.mxu0 0.0
        %2744 = vmatpush.msra.mxu0 0.0
        %2745 = vmatpush.msra.mxu0 0.0
        %2746 = vmatpush.msra.mxu0 0.0
        %2747 = vmatpush.msra.mxu0 0.0
        %2748 = vmatpush.msra.mxu0 %v2451
        %2749 = vmatpush.msra.mxu0 %v2448
        %2750 = vmatpush.msra.mxu0 %v2445
        %2751 = vmatpush.msra.mxu0 %v2442
        %2752 = vmatmul.f32.gmra.mxu0 %v2479
        %v2753 = vpop.f32.mrf.mxu0
        %v2754 = vadd.f32 %v2731, %v2753
        %2755 = vmatmul.f32.gmra.mxu0 %v2481
        %v2756 = vpop.f32.mrf.mxu0
        %v2757 = vadd.f32 %v2734, %v2756
        %2758 = vdwg.mxu0
        %v2760 = vsel %vm1960, %v1970, 0
        %v2763 = vsel %vm1960, %v1974, 0
        %2765 = vmatpush.msra.mxu0 %v2020
        %2766 = vmatpush.msra.mxu0 %v2017
        %2767 = vmatpush.msra.mxu0 %v2014
        %2768 = vmatpush.msra.mxu0 %v2011
        %2769 = vmatpush.msra.mxu0 %v2008
        %2770 = vmatpush.msra.mxu0 %v2005
        %2771 = vmatpush.msra.mxu0 %v2002
        %2772 = vmatpush.msra.mxu0 %v1999
        %2773 = vmatpush.msra.mxu0 %v1996
        %2774 = vmatpush.msra.mxu0 %v1993
        %2775 = vmatpush.msra.mxu0 %v1990
        %2776 = vmatpush.msra.mxu0 %v1987
        %2777 = vmatpush.msra.mxu0 %v1984
        %2778 = vmatpush.msra.mxu0 %v1981
        %2779 = vmatpush.msra.mxu0 %v1978
        %2780 = vmatpush.msra.mxu0 %v1975
        %2781 = vmatmul.f32.gmra.mxu0 %v1967
        %v2782 = vpop.f32.mrf.mxu0
        %v2783 = vadd.f32 %v2570, %v2782
        %2784 = vmatmul.f32.gmra.mxu0 %v1971
        %v2785 = vpop.f32.mrf.mxu0
        %v2786 = vadd.f32 %v2573, %v2785
        %2787 = vdwg.mxu0
        %2788 = vmatpush.msra.mxu0 %v2068
        %2789 = vmatpush.msra.mxu0 %v2065
        %2790 = vmatpush.msra.mxu0 %v2062
        %2791 = vmatpush.msra.mxu0 %v2059
        %2792 = vmatpush.msra.mxu0 %v2056
        %2793 = vmatpush.msra.mxu0 %v2053
        %2794 = vmatpush.msra.mxu0 %v2050
        %2795 = vmatpush.msra.mxu0 %v2047
        %2796 = vmatpush.msra.mxu0 %v2044
        %2797 = vmatpush.msra.mxu0 %v2041
        %2798 = vmatpush.msra.mxu0 %v2038
        %2799 = vmatpush.msra.mxu0 %v2035
        %2800 = vmatpush.msra.mxu0 %v2032
        %2801 = vmatpush.msra.mxu0 %v2029
        %2802 = vmatpush.msra.mxu0 %v2026
        %2803 = vmatpush.msra.mxu0 %v2023
        %2804 = vmatmul.f32.gmra.mxu0 %v1968
        %v2805 = vpop.f32.mrf.mxu0
        %v2806 = vadd.f32 %v2783, %v2805
        %2807 = vmatmul.f32.gmra.mxu0 %v1972
        %v2808 = vpop.f32.mrf.mxu0
        %v2809 = vadd.f32 %v2786, %v2808
        %2810 = vdwg.mxu0
        %2811 = vmatpush.msra.mxu0 %v2116
        %2812 = vmatpush.msra.mxu0 %v2113
        %2813 = vmatpush.msra.mxu0 %v2110
        %2814 = vmatpush.msra.mxu0 %v2107
        %2815 = vmatpush.msra.mxu0 %v2104
        %2816 = vmatpush.msra.mxu0 %v2101
        %2817 = vmatpush.msra.mxu0 %v2098
        %2818 = vmatpush.msra.mxu0 %v2095
        %2819 = vmatpush.msra.mxu0 %v2092
        %2820 = vmatpush.msra.mxu0 %v2089
        %2821 = vmatpush.msra.mxu0 %v2086
        %2822 = vmatpush.msra.mxu0 %v2083
        %2823 = vmatpush.msra.mxu0 %v2080
        %2824 = vmatpush.msra.mxu0 %v2077
        %2825 = vmatpush.msra.mxu0 %v2074
        %2826 = vmatpush.msra.mxu0 %v2071
        %2827 = vmatmul.f32.gmra.mxu0 %v1969
        %v2828 = vpop.f32.mrf.mxu0
        %v2829 = vadd.f32 %v2806, %v2828
        %2830 = vmatmul.f32.gmra.mxu0 %v1973
        %v2831 = vpop.f32.mrf.mxu0
        %v2832 = vadd.f32 %v2809, %v2831
        %2833 = vdwg.mxu0
        %2834 = vmatpush.msra.mxu0 0.0
        %2835 = vmatpush.msra.mxu0 0.0
        %2836 = vmatpush.msra.mxu0 0.0
        %2837 = vmatpush.msra.mxu0 0.0
        %2838 = vmatpush.msra.mxu0 0.0
        %2839 = vmatpush.msra.mxu0 0.0
        %2840 = vmatpush.msra.mxu0 0.0
        %2841 = vmatpush.msra.mxu0 0.0
        %2842 = vmatpush.msra.mxu0 0.0
        %2843 = vmatpush.msra.mxu0 0.0
        %2844 = vmatpush.msra.mxu0 0.0
        %2845 = vmatpush.msra.mxu0 0.0
        %2846 = vmatpush.msra.mxu0 %v2128
        %2847 = vmatpush.msra.mxu0 %v2125
        %2848 = vmatpush.msra.mxu0 %v2122
        %2849 = vmatpush.msra.mxu0 %v2119
        %2850 = vmatmul.f32.gmra.mxu0 %v2760
        %v2851 = vpop.f32.mrf.mxu0
        %v2852 = vadd.f32 %v2829, %v2851
        %2853 = vmatmul.f32.gmra.mxu0 %v2763
        %v2854 = vpop.f32.mrf.mxu0
        %v2855 = vadd.f32 %v2832, %v2854
        %2856 = vdwg.mxu0
        %2857 = vmatpush.msra.mxu0 %v2021
        %2858 = vmatpush.msra.mxu0 %v2018
        %2859 = vmatpush.msra.mxu0 %v2015
        %2860 = vmatpush.msra.mxu0 %v2012
        %2861 = vmatpush.msra.mxu0 %v2009
        %2862 = vmatpush.msra.mxu0 %v2006
        %2863 = vmatpush.msra.mxu0 %v2003
        %2864 = vmatpush.msra.mxu0 %v2000
        %2865 = vmatpush.msra.mxu0 %v1997
        %2866 = vmatpush.msra.mxu0 %v1994
        %2867 = vmatpush.msra.mxu0 %v1991
        %2868 = vmatpush.msra.mxu0 %v1988
        %2869 = vmatpush.msra.mxu0 %v1985
        %2870 = vmatpush.msra.mxu0 %v1982
        %2871 = vmatpush.msra.mxu0 %v1979
        %2872 = vmatpush.msra.mxu0 %v1976
        %2873 = vmatmul.f32.gmra.mxu0 %v1967
        %v2874 = vpop.f32.mrf.mxu0
        %v2875 = vadd.f32 %v2662, %v2874
        %2876 = vmatmul.f32.gmra.mxu0 %v1971
        %v2877 = vpop.f32.mrf.mxu0
        %v2878 = vadd.f32 %v2665, %v2877
        %2879 = vdwg.mxu0
        %2880 = vmatpush.msra.mxu0 %v2069
        %2881 = vmatpush.msra.mxu0 %v2066
        %2882 = vmatpush.msra.mxu0 %v2063
        %2883 = vmatpush.msra.mxu0 %v2060
        %2884 = vmatpush.msra.mxu0 %v2057
        %2885 = vmatpush.msra.mxu0 %v2054
        %2886 = vmatpush.msra.mxu0 %v2051
        %2887 = vmatpush.msra.mxu0 %v2048
        %2888 = vmatpush.msra.mxu0 %v2045
        %2889 = vmatpush.msra.mxu0 %v2042
        %2890 = vmatpush.msra.mxu0 %v2039
        %2891 = vmatpush.msra.mxu0 %v2036
        %2892 = vmatpush.msra.mxu0 %v2033
        %2893 = vmatpush.msra.mxu0 %v2030
        %2894 = vmatpush.msra.mxu0 %v2027
        %2895 = vmatpush.msra.mxu0 %v2024
        %2896 = vmatmul.f32.gmra.mxu0 %v1968
        %v2897 = vpop.f32.mrf.mxu0
        %v2898 = vadd.f32 %v2875, %v2897
        %2899 = vmatmul.f32.gmra.mxu0 %v1972
        %v2900 = vpop.f32.mrf.mxu0
        %v2901 = vadd.f32 %v2878, %v2900
        %2902 = vdwg.mxu0
        %2903 = vmatpush.msra.mxu0 %v2117
        %2904 = vmatpush.msra.mxu0 %v2114
        %2905 = vmatpush.msra.mxu0 %v2111
        %2906 = vmatpush.msra.mxu0 %v2108
        %2907 = vmatpush.msra.mxu0 %v2105
        %2908 = vmatpush.msra.mxu0 %v2102
        %2909 = vmatpush.msra.mxu0 %v2099
        %2910 = vmatpush.msra.mxu0 %v2096
        %2911 = vmatpush.msra.mxu0 %v2093
        %2912 = vmatpush.msra.mxu0 %v2090
        %2913 = vmatpush.msra.mxu0 %v2087
        %2914 = vmatpush.msra.mxu0 %v2084
        %2915 = vmatpush.msra.mxu0 %v2081
        %2916 = vmatpush.msra.mxu0 %v2078
        %2917 = vmatpush.msra.mxu0 %v2075
        %2918 = vmatpush.msra.mxu0 %v2072
        %2919 = vmatmul.f32.gmra.mxu0 %v1969
        %v2920 = vpop.f32.mrf.mxu0
        %v2921 = vadd.f32 %v2898, %v2920
        %2922 = vmatmul.f32.gmra.mxu0 %v1973
        %v2923 = vpop.f32.mrf.mxu0
        %v2924 = vadd.f32 %v2901, %v2923
        %2925 = vdwg.mxu0
        %2926 = vmatpush.msra.mxu0 0.0
        %2927 = vmatpush.msra.mxu0 0.0
        %2928 = vmatpush.msra.mxu0 0.0
        %2929 = vmatpush.msra.mxu0 0.0
        %2930 = vmatpush.msra.mxu0 0.0
        %2931 = vmatpush.msra.mxu0 0.0
        %2932 = vmatpush.msra.mxu0 0.0
        %2933 = vmatpush.msra.mxu0 0.0
        %2934 = vmatpush.msra.mxu0 0.0
        %2935 = vmatpush.msra.mxu0 0.0
        %2936 = vmatpush.msra.mxu0 0.0
        %2937 = vmatpush.msra.mxu0 0.0
        %2938 = vmatpush.msra.mxu0 %v2129
        %2939 = vmatpush.msra.mxu0 %v2126
        %2940 = vmatpush.msra.mxu0 %v2123
        %2941 = vmatpush.msra.mxu0 %v2120
        %2942 = vmatmul.f32.gmra.mxu0 %v2760
        %v2943 = vpop.f32.mrf.mxu0
        %v2944 = vadd.f32 %v2921, %v2943
        %2945 = vmatmul.f32.gmra.mxu0 %v2763
        %v2946 = vpop.f32.mrf.mxu0
        %v2947 = vadd.f32 %v2924, %v2946
        %2948 = vdwg.mxu0
        %2949 = vmatpush.msra.mxu0 %v2022
        %2950 = vmatpush.msra.mxu0 %v2019
        %2951 = vmatpush.msra.mxu0 %v2016
        %2952 = vmatpush.msra.mxu0 %v2013
        %2953 = vmatpush.msra.mxu0 %v2010
        %2954 = vmatpush.msra.mxu0 %v2007
        %2955 = vmatpush.msra.mxu0 %v2004
        %2956 = vmatpush.msra.mxu0 %v2001
        %2957 = vmatpush.msra.mxu0 %v1998
        %2958 = vmatpush.msra.mxu0 %v1995
        %2959 = vmatpush.msra.mxu0 %v1992
        %2960 = vmatpush.msra.mxu0 %v1989
        %2961 = vmatpush.msra.mxu0 %v1986
        %2962 = vmatpush.msra.mxu0 %v1983
        %2963 = vmatpush.msra.mxu0 %v1980
        %2964 = vmatpush.msra.mxu0 %v1977
        %2965 = vmatmul.f32.gmra.mxu0 %v1967
        %v2966 = vpop.f32.mrf.mxu0
        %v2967 = vadd.f32 %v2754, %v2966
        %2968 = vmatmul.f32.gmra.mxu0 %v1971
        %v2969 = vpop.f32.mrf.mxu0
        %v2970 = vadd.f32 %v2757, %v2969
        %2971 = vdwg.mxu0
        %2972 = vmatpush.msra.mxu0 %v2070
        %2973 = vmatpush.msra.mxu0 %v2067
        %2974 = vmatpush.msra.mxu0 %v2064
        %2975 = vmatpush.msra.mxu0 %v2061
        %2976 = vmatpush.msra.mxu0 %v2058
        %2977 = vmatpush.msra.mxu0 %v2055
        %2978 = vmatpush.msra.mxu0 %v2052
        %2979 = vmatpush.msra.mxu0 %v2049
        %2980 = vmatpush.msra.mxu0 %v2046
        %2981 = vmatpush.msra.mxu0 %v2043
        %2982 = vmatpush.msra.mxu0 %v2040
        %2983 = vmatpush.msra.mxu0 %v2037
        %2984 = vmatpush.msra.mxu0 %v2034
        %2985 = vmatpush.msra.mxu0 %v2031
        %2986 = vmatpush.msra.mxu0 %v2028
        %2987 = vmatpush.msra.mxu0 %v2025
        %2988 = vmatmul.f32.gmra.mxu0 %v1968
        %v2989 = vpop.f32.mrf.mxu0
        %v2990 = vadd.f32 %v2967, %v2989
        %2991 = vmatmul.f32.gmra.mxu0 %v1972
        %v2992 = vpop.f32.mrf.mxu0
        %v2993 = vadd.f32 %v2970, %v2992
        %2994 = vdwg.mxu0
        %2995 = vmatpush.msra.mxu0 %v2118
        %2996 = vmatpush.msra.mxu0 %v2115
        %2997 = vmatpush.msra.mxu0 %v2112
        %2998 = vmatpush.msra.mxu0 %v2109
        %2999 = vmatpush.msra.mxu0 %v2106
        %3000 = vmatpush.msra.mxu0 %v2103
        %3001 = vmatpush.msra.mxu0 %v2100
        %3002 = vmatpush.msra.mxu0 %v2097
        %3003 = vmatpush.msra.mxu0 %v2094
        %3004 = vmatpush.msra.mxu0 %v2091
        %3005 = vmatpush.msra.mxu0 %v2088
        %3006 = vmatpush.msra.mxu0 %v2085
        %3007 = vmatpush.msra.mxu0 %v2082
        %3008 = vmatpush.msra.mxu0 %v2079
        %3009 = vmatpush.msra.mxu0 %v2076
        %3010 = vmatpush.msra.mxu0 %v2073
        %3011 = vmatmul.f32.gmra.mxu0 %v1969
        %v3012 = vpop.f32.mrf.mxu0
        %v3013 = vadd.f32 %v2990, %v3012
        %3014 = vmatmul.f32.gmra.mxu0 %v1973
        %v3015 = vpop.f32.mrf.mxu0
        %v3016 = vadd.f32 %v2993, %v3015
        %3017 = vdwg.mxu0
        %3018 = vmatpush.msra.mxu0 0.0
        %3019 = vmatpush.msra.mxu0 0.0
        %3020 = vmatpush.msra.mxu0 0.0
        %3021 = vmatpush.msra.mxu0 0.0
        %3022 = vmatpush.msra.mxu0 0.0
        %3023 = vmatpush.msra.mxu0 0.0
        %3024 = vmatpush.msra.mxu0 0.0
        %3025 = vmatpush.msra.mxu0 0.0
        %3026 = vmatpush.msra.mxu0 0.0
        %3027 = vmatpush.msra.mxu0 0.0
        %3028 = vmatpush.msra.mxu0 0.0
        %3029 = vmatpush.msra.mxu0 0.0
        %3030 = vmatpush.msra.mxu0 %v2130
        %3031 = vmatpush.msra.mxu0 %v2127
        %3032 = vmatpush.msra.mxu0 %v2124
        %3033 = vmatpush.msra.mxu0 %v2121
        %3034 = vmatmul.f32.gmra.mxu0 %v2760
        %v3035 = vpop.f32.mrf.mxu0
        %v3036 = vadd.f32 %v3013, %v3035
        %3037 = vmatmul.f32.gmra.mxu0 %v2763
        %v3038 = vpop.f32.mrf.mxu0
        %v3039 = vadd.f32 %v3016, %v3038
        %3040 = vdwg.mxu0
        %s3041 = scalar_lea.vmem [#allocation15], 1248
        %v3042 = vld [vmem:[%s3041] sm:$0xff]
        %v3043 = vld [vmem:[%s3041 + $0x8] sm:$0xff]
        %v3044 = vld [vmem:[%s3041 + $0x10] sm:$0xff]
        %v3045 = vld [vmem:[%s3041 + $0x18] sm:$0xff]
        %v3046 = vld [vmem:[%s3041 + $0x20] sm:$0xff]
        %v3047 = vld [vmem:[%s3041 + $0x28] sm:$0xff]
        %v3048 = vld [vmem:[%s3041 + $0x30] sm:$0xff]
        %v3049 = vld [vmem:[%s3041 + $0x38] sm:$0xff]
        %v3050 = vld [vmem:[%s3041 + $0x40] sm:$0xff]
        %v3051 = vld [vmem:[%s3041 + $0x48] sm:$0xff]
        %v3052 = vld [vmem:[%s3041 + $0x50] sm:$0xff]
        %v3053 = vld [vmem:[%s3041 + $0x58] sm:$0xff]
        %v3054 = vld [vmem:[%s3041 + $0x60] sm:$0xff]
        %v3055 = vld [vmem:[%s3041 + $0x68] sm:$0xff]
        %v3056 = vld [vmem:[%s3041 + $0x70] sm:$0xff]
        %v3057 = vld [vmem:[%s3041 + $0x78] sm:$0xff]
        %v3058 = vld [vmem:[%s3041 + $0x80] sm:$0xff]
        %v3059 = vld [vmem:[%s3041 + $0x88] sm:$0xff]
        %v3060 = vld [vmem:[%s3041 + $0x90] sm:$0xff]
        %v3061 = vld [vmem:[%s3041 + $0x98] sm:$0xff]
        %v3062 = vld [vmem:[%s3041 + $0xa0] sm:$0xff]
        %v3063 = vld [vmem:[%s3041 + $0xa8] sm:$0xff]
        %v3064 = vld [vmem:[%s3041 + $0xb0] sm:$0xff]
        %v3065 = vld [vmem:[%s3041 + $0xb8] sm:$0xff]
        %v3066 = vld [vmem:[%s3041 + $0xc0] sm:$0xff]
        %v3067 = vld [vmem:[%s3041 + $0xc8] sm:$0xff]
        %v3068 = vld [vmem:[%s3041 + $0xd0] sm:$0xff]
        %v3069 = vld [vmem:[%s3041 + $0xd8] sm:$0xff]
        %v3070 = vld [vmem:[%s3041 + $0xe0] sm:$0xff]
        %v3071 = vld [vmem:[%s3041 + $0xe8] sm:$0xff]
        %v3072 = vld [vmem:[%s3041 + $0xf0] sm:$0xff]
        %v3073 = vld [vmem:[%s3041 + $0xf8] sm:$0xff]
        %v3074 = vld [vmem:[%s3041 + $0x100] sm:$0xff]
        %v3075 = vld [vmem:[%s3041 + $0x108] sm:$0xff]
        %v3076 = vld [vmem:[%s3041 + $0x110] sm:$0xff]
        %v3077 = vld [vmem:[%s3041 + $0x118] sm:$0xff]
        %v3078 = vld [vmem:[%s3041 + $0x120] sm:$0xff]
        %v3079 = vld [vmem:[%s3041 + $0x128] sm:$0xff]
        %v3080 = vld [vmem:[%s3041 + $0x130] sm:$0xff]
        %v3081 = vld [vmem:[%s3041 + $0x138] sm:$0xff]
        %v3082 = vld [vmem:[%s3041 + $0x140] sm:$0xff]
        %v3083 = vld [vmem:[%s3041 + $0x148] sm:$0xff]
        %v3084 = vld [vmem:[%s3041 + $0x150] sm:$0xff]
        %v3085 = vld [vmem:[%s3041 + $0x158] sm:$0xff]
        %v3086 = vld [vmem:[%s3041 + $0x160] sm:$0xff]
        %v3087 = vld [vmem:[%s3041 + $0x168] sm:$0xff]
        %v3088 = vld [vmem:[%s3041 + $0x170] sm:$0xff]
        %v3089 = vld [vmem:[%s3041 + $0x178] sm:$0xff]
        %v3090 = vld [vmem:[%s3041 + $0x180] sm:$0xff]
        %v3091 = vld [vmem:[%s3041 + $0x188] sm:$0xff]
        %v3092 = vld [vmem:[%s3041 + $0x190] sm:$0xff]
        %v3093 = vld [vmem:[%s3041 + $0x198] sm:$0xff]
        %v3094 = vld [vmem:[%s3041 + $0x1a0] sm:$0xff]
        %v3095 = vld [vmem:[%s3041 + $0x1a8] sm:$0xff]
        %v3096 = vld [vmem:[%s3041 + $0x1b0] sm:$0xff]
        %v3097 = vld [vmem:[%s3041 + $0x1b8] sm:$0xff]
        %v3098 = vld [vmem:[%s3041 + $0x1c0] sm:$0xff]
        %v3099 = vld [vmem:[%s3041 + $0x1c8] sm:$0xff]
        %v3100 = vld [vmem:[%s3041 + $0x1d0] sm:$0xff]
        %v3101 = vld [vmem:[%s3041 + $0x1d8] sm:$0xff]
        %v3102 = vld [vmem:[%s3041 + $0x1e0] sm:$0xff]
        %v3103 = vld [vmem:[%s3041 + $0x1e8] sm:$0xff]
        %v3104 = vld [vmem:[%s3041 + $0x1f0] sm:$0xff]
        %v3105 = vld [vmem:[%s3041 + $0x1f8] sm:$0xff]
        %v3106 = vld [vmem:[%s3041 + $0x200] sm:$0xff]
        %v3107 = vld [vmem:[%s3041 + $0x208] sm:$0xff]
        %v3108 = vld [vmem:[%s3041 + $0x210] sm:$0xff]
        %v3109 = vld [vmem:[%s3041 + $0x218] sm:$0xff]
        %v3110 = vld [vmem:[%s3041 + $0x220] sm:$0xff]
        %v3111 = vld [vmem:[%s3041 + $0x228] sm:$0xff]
        %v3112 = vld [vmem:[%s3041 + $0x230] sm:$0xff]
        %v3113 = vld [vmem:[%s3041 + $0x238] sm:$0xff]
        %v3114 = vld [vmem:[%s3041 + $0x240] sm:$0xff]
        %v3115 = vld [vmem:[%s3041 + $0x248] sm:$0xff]
        %v3116 = vld [vmem:[%s3041 + $0x250] sm:$0xff]
        %v3117 = vld [vmem:[%s3041 + $0x258] sm:$0xff]
        %v3118 = vld [vmem:[%s3041 + $0x260] sm:$0xff]
        %v3119 = vld [vmem:[%s3041 + $0x268] sm:$0xff]
        %v3120 = vld [vmem:[%s3041 + $0x270] sm:$0xff]
        %v3121 = vld [vmem:[%s3041 + $0x278] sm:$0xff]
        %v3122 = vld [vmem:[%s3041 + $0x280] sm:$0xff]
        %v3123 = vld [vmem:[%s3041 + $0x288] sm:$0xff]
        %v3124 = vld [vmem:[%s3041 + $0x290] sm:$0xff]
        %v3125 = vld [vmem:[%s3041 + $0x298] sm:$0xff]
        %v3126 = vld [vmem:[%s3041 + $0x2a0] sm:$0xff]
        %v3127 = vld [vmem:[%s3041 + $0x2a8] sm:$0xff]
        %v3128 = vld [vmem:[%s3041 + $0x2b0] sm:$0xff]
        %v3129 = vld [vmem:[%s3041 + $0x2b8] sm:$0xff]
        %v3130 = vld [vmem:[%s3041 + $0x2c0] sm:$0xff]
        %v3131 = vld [vmem:[%s3041 + $0x2c8] sm:$0xff]
        %v3132 = vld [vmem:[%s3041 + $0x2d0] sm:$0xff]
        %v3133 = vld [vmem:[%s3041 + $0x2d8] sm:$0xff]
        %v3134 = vld [vmem:[%s3041 + $0x2e0] sm:$0xff]
        %v3135 = vld [vmem:[%s3041 + $0x2e8] sm:$0xff]
        %v3136 = vld [vmem:[%s3041 + $0x2f0] sm:$0xff]
        %v3137 = vld [vmem:[%s3041 + $0x2f8] sm:$0xff]
        %v3138 = vld [vmem:[%s3041 + $0x300] sm:$0xff]
        %v3139 = vld [vmem:[%s3041 + $0x308] sm:$0xff]
        %v3140 = vld [vmem:[%s3041 + $0x310] sm:$0xff]
        %v3141 = vld [vmem:[%s3041 + $0x318] sm:$0xff]
        %v3142 = vld [vmem:[%s3041 + $0x320] sm:$0xff]
        %v3143 = vld [vmem:[%s3041 + $0x328] sm:$0xff]
        %v3144 = vld [vmem:[%s3041 + $0x330] sm:$0xff]
        %v3145 = vld [vmem:[%s3041 + $0x338] sm:$0xff]
        %v3146 = vld [vmem:[%s3041 + $0x340] sm:$0xff]
        %v3147 = vld [vmem:[%s3041 + $0x348] sm:$0xff]
        %v3148 = vld [vmem:[%s3041 + $0x350] sm:$0xff]
        %v3149 = vld [vmem:[%s3041 + $0x358] sm:$0xff]
        %v3150 = vld [vmem:[%s3041 + $0x360] sm:$0xff]
        %v3151 = vld [vmem:[%s3041 + $0x368] sm:$0xff]
        %v3152 = vld [vmem:[%s3041 + $0x370] sm:$0xff]
        %v3153 = vld [vmem:[%s3041 + $0x378] sm:$0xff]
        %v3154 = vld [vmem:[%s3041 + $0x380] sm:$0xff]
        %v3155 = vld [vmem:[%s3041 + $0x388] sm:$0xff]
        %v3156 = vld [vmem:[%s3041 + $0x390] sm:$0xff]
        %v3157 = vld [vmem:[%s3041 + $0x398] sm:$0xff]
        %v3158 = vld [vmem:[%s3041 + $0x3a0] sm:$0xff]
        %v3159 = vld [vmem:[%s3041 + $0x3a8] sm:$0xff]
        %v3160 = vld [vmem:[%s3041 + $0x3b0] sm:$0xff]
        %v3161 = vld [vmem:[%s3041 + $0x3b8] sm:$0xff]
        %v3162 = vld [vmem:[%s3041 + $0x3c0] sm:$0xff]
        %v3163 = vld [vmem:[%s3041 + $0x3c8] sm:$0xff]
        %v3164 = vld [vmem:[%s3041 + $0x3d0] sm:$0xff]
        %v3165 = vld [vmem:[%s3041 + $0x3d8] sm:$0xff]
        %v3166 = vld [vmem:[%s3041 + $0x3e0] sm:$0xff]
        %v3167 = vld [vmem:[%s3041 + $0x3e8] sm:$0xff]
        %v3168 = vld [vmem:[%s3041 + $0x3f0] sm:$0xff]
        %v3169 = vld [vmem:[%s3041 + $0x3f8] sm:$0xff]
        %v3170 = vld [vmem:[%s3041 + $0x400] sm:$0xff]
        %v3171 = vld [vmem:[%s3041 + $0x408] sm:$0xff]
        %v3172 = vld [vmem:[%s3041 + $0x410] sm:$0xff]
        %v3173 = vld [vmem:[%s3041 + $0x418] sm:$0xff]
        %v3174 = vld [vmem:[%s3041 + $0x420] sm:$0xff]
        %v3175 = vld [vmem:[%s3041 + $0x428] sm:$0xff]
        %v3176 = vld [vmem:[%s3041 + $0x430] sm:$0xff]
        %v3177 = vld [vmem:[%s3041 + $0x438] sm:$0xff]
        %v3178 = vld [vmem:[%s3041 + $0x440] sm:$0xff]
        %v3179 = vld [vmem:[%s3041 + $0x448] sm:$0xff]
        %v3180 = vld [vmem:[%s3041 + $0x450] sm:$0xff]
        %v3181 = vld [vmem:[%s3041 + $0x458] sm:$0xff]
        %v3182 = vld [vmem:[%s3041 + $0x460] sm:$0xff]
        %v3183 = vld [vmem:[%s3041 + $0x468] sm:$0xff]
        %v3184 = vld [vmem:[%s3041 + $0x470] sm:$0xff]
        %v3185 = vld [vmem:[%s3041 + $0x478] sm:$0xff]
        %v3186 = vld [vmem:[%s3041 + $0x480] sm:$0xff]
        %v3187 = vld [vmem:[%s3041 + $0x488] sm:$0xff]
        %v3188 = vld [vmem:[%s3041 + $0x490] sm:$0xff]
        %v3189 = vld [vmem:[%s3041 + $0x498] sm:$0xff]
        %v3190 = vld [vmem:[%s3041 + $0x4a0] sm:$0xff]
        %v3191 = vld [vmem:[%s3041 + $0x4a8] sm:$0xff]
        %v3192 = vld [vmem:[%s3041 + $0x4b0] sm:$0xff]
        %v3193 = vld [vmem:[%s3041 + $0x4b8] sm:$0xff]
        %v3194 = vld [vmem:[%s3041 + $0x4c0] sm:$0xff]
        %v3195 = vld [vmem:[%s3041 + $0x4c8] sm:$0xff]
        %v3196 = vld [vmem:[%s3041 + $0x4d0] sm:$0xff]
        %v3197 = vld [vmem:[%s3041 + $0x4d8] sm:$0xff]
        %3198 = vmatpush.msra.mxu0 %v3087
        %3199 = vmatpush.msra.mxu0 %v3084
        %3200 = vmatpush.msra.mxu0 %v3081
        %3201 = vmatpush.msra.mxu0 %v3078
        %3202 = vmatpush.msra.mxu0 %v3075
        %3203 = vmatpush.msra.mxu0 %v3072
        %3204 = vmatpush.msra.mxu0 %v3069
        %3205 = vmatpush.msra.mxu0 %v3066
        %3206 = vmatpush.msra.mxu0 %v3063
        %3207 = vmatpush.msra.mxu0 %v3060
        %3208 = vmatpush.msra.mxu0 %v3057
        %3209 = vmatpush.msra.mxu0 %v3054
        %3210 = vmatpush.msra.mxu0 %v3051
        %3211 = vmatpush.msra.mxu0 %v3048
        %3212 = vmatpush.msra.mxu0 %v3045
        %3213 = vmatpush.msra.mxu0 %v3042
        %3214 = vmatmul.f32.gmra.mxu0 %v2463
        %v3215 = vpop.f32.mrf.mxu0
        %v3216 = vadd.f32 0.0, %v3215
        %3217 = vmatmul.f32.gmra.mxu0 %v2462
        %v3218 = vpop.f32.mrf.mxu0
        %v3219 = vadd.f32 0.0, %v3218
        %3220 = vdwg.mxu0
        %3221 = vmatpush.msra.mxu0 %v3135
        %3222 = vmatpush.msra.mxu0 %v3132
        %3223 = vmatpush.msra.mxu0 %v3129
        %3224 = vmatpush.msra.mxu0 %v3126
        %3225 = vmatpush.msra.mxu0 %v3123
        %3226 = vmatpush.msra.mxu0 %v3120
        %3227 = vmatpush.msra.mxu0 %v3117
        %3228 = vmatpush.msra.mxu0 %v3114
        %3229 = vmatpush.msra.mxu0 %v3111
        %3230 = vmatpush.msra.mxu0 %v3108
        %3231 = vmatpush.msra.mxu0 %v3105
        %3232 = vmatpush.msra.mxu0 %v3102
        %3233 = vmatpush.msra.mxu0 %v3099
        %3234 = vmatpush.msra.mxu0 %v3096
        %3235 = vmatpush.msra.mxu0 %v3093
        %3236 = vmatpush.msra.mxu0 %v3090
        %3237 = vmatmul.f32.gmra.mxu0 %v2466
        %v3238 = vpop.f32.mrf.mxu0
        %v3239 = vadd.f32 %v3216, %v3238
        %3240 = vmatmul.f32.gmra.mxu0 %v2465
        %v3241 = vpop.f32.mrf.mxu0
        %v3242 = vadd.f32 %v3219, %v3241
        %3243 = vdwg.mxu0
        %3244 = vmatpush.msra.mxu0 %v3183
        %3245 = vmatpush.msra.mxu0 %v3180
        %3246 = vmatpush.msra.mxu0 %v3177
        %3247 = vmatpush.msra.mxu0 %v3174
        %3248 = vmatpush.msra.mxu0 %v3171
        %3249 = vmatpush.msra.mxu0 %v3168
        %3250 = vmatpush.msra.mxu0 %v3165
        %3251 = vmatpush.msra.mxu0 %v3162
        %3252 = vmatpush.msra.mxu0 %v3159
        %3253 = vmatpush.msra.mxu0 %v3156
        %3254 = vmatpush.msra.mxu0 %v3153
        %3255 = vmatpush.msra.mxu0 %v3150
        %3256 = vmatpush.msra.mxu0 %v3147
        %3257 = vmatpush.msra.mxu0 %v3144
        %3258 = vmatpush.msra.mxu0 %v3141
        %3259 = vmatpush.msra.mxu0 %v3138
        %3260 = vmatmul.f32.gmra.mxu0 %v2469
        %v3261 = vpop.f32.mrf.mxu0
        %v3262 = vadd.f32 %v3239, %v3261
        %3263 = vmatmul.f32.gmra.mxu0 %v2468
        %v3264 = vpop.f32.mrf.mxu0
        %v3265 = vadd.f32 %v3242, %v3264
        %3266 = vdwg.mxu0
        %3267 = vmatpush.msra.mxu0 0.0
        %3268 = vmatpush.msra.mxu0 0.0
        %3269 = vmatpush.msra.mxu0 0.0
        %3270 = vmatpush.msra.mxu0 0.0
        %3271 = vmatpush.msra.mxu0 0.0
        %3272 = vmatpush.msra.mxu0 0.0
        %3273 = vmatpush.msra.mxu0 0.0
        %3274 = vmatpush.msra.mxu0 0.0
        %3275 = vmatpush.msra.mxu0 0.0
        %3276 = vmatpush.msra.mxu0 0.0
        %3277 = vmatpush.msra.mxu0 0.0
        %3278 = vmatpush.msra.mxu0 0.0
        %3279 = vmatpush.msra.mxu0 %v3195
        %3280 = vmatpush.msra.mxu0 %v3192
        %3281 = vmatpush.msra.mxu0 %v3189
        %3282 = vmatpush.msra.mxu0 %v3186
        %3283 = vmatmul.f32.gmra.mxu0 %v2479
        %v3284 = vpop.f32.mrf.mxu0
        %v3285 = vadd.f32 %v3262, %v3284
        %3286 = vmatmul.f32.gmra.mxu0 %v2481
        %v3287 = vpop.f32.mrf.mxu0
        %v3288 = vadd.f32 %v3265, %v3287
        %3289 = vdwg.mxu0
        %3290 = vmatpush.msra.mxu0 %v3088
        %3291 = vmatpush.msra.mxu0 %v3085
        %3292 = vmatpush.msra.mxu0 %v3082
        %3293 = vmatpush.msra.mxu0 %v3079
        %3294 = vmatpush.msra.mxu0 %v3076
        %3295 = vmatpush.msra.mxu0 %v3073
        %3296 = vmatpush.msra.mxu0 %v3070
        %3297 = vmatpush.msra.mxu0 %v3067
        %3298 = vmatpush.msra.mxu0 %v3064
        %3299 = vmatpush.msra.mxu0 %v3061
        %3300 = vmatpush.msra.mxu0 %v3058
        %3301 = vmatpush.msra.mxu0 %v3055
        %3302 = vmatpush.msra.mxu0 %v3052
        %3303 = vmatpush.msra.mxu0 %v3049
        %3304 = vmatpush.msra.mxu0 %v3046
        %3305 = vmatpush.msra.mxu0 %v3043
        %3306 = vmatmul.f32.gmra.mxu0 %v2463
        %v3307 = vpop.f32.mrf.mxu0
        %v3308 = vadd.f32 0.0, %v3307
        %3309 = vmatmul.f32.gmra.mxu0 %v2462
        %v3310 = vpop.f32.mrf.mxu0
        %v3311 = vadd.f32 0.0, %v3310
        %3312 = vdwg.mxu0
        %3313 = vmatpush.msra.mxu0 %v3136
        %3314 = vmatpush.msra.mxu0 %v3133
        %3315 = vmatpush.msra.mxu0 %v3130
        %3316 = vmatpush.msra.mxu0 %v3127
        %3317 = vmatpush.msra.mxu0 %v3124
        %3318 = vmatpush.msra.mxu0 %v3121
        %3319 = vmatpush.msra.mxu0 %v3118
        %3320 = vmatpush.msra.mxu0 %v3115
        %3321 = vmatpush.msra.mxu0 %v3112
        %3322 = vmatpush.msra.mxu0 %v3109
        %3323 = vmatpush.msra.mxu0 %v3106
        %3324 = vmatpush.msra.mxu0 %v3103
        %3325 = vmatpush.msra.mxu0 %v3100
        %3326 = vmatpush.msra.mxu0 %v3097
        %3327 = vmatpush.msra.mxu0 %v3094
        %3328 = vmatpush.msra.mxu0 %v3091
        %3329 = vmatmul.f32.gmra.mxu0 %v2466
        %v3330 = vpop.f32.mrf.mxu0
        %v3331 = vadd.f32 %v3308, %v3330
        %3332 = vmatmul.f32.gmra.mxu0 %v2465
        %v3333 = vpop.f32.mrf.mxu0
        %v3334 = vadd.f32 %v3311, %v3333
        %3335 = vdwg.mxu0
        %3336 = vmatpush.msra.mxu0 %v3184
        %3337 = vmatpush.msra.mxu0 %v3181
        %3338 = vmatpush.msra.mxu0 %v3178
        %3339 = vmatpush.msra.mxu0 %v3175
        %3340 = vmatpush.msra.mxu0 %v3172
        %3341 = vmatpush.msra.mxu0 %v3169
        %3342 = vmatpush.msra.mxu0 %v3166
        %3343 = vmatpush.msra.mxu0 %v3163
        %3344 = vmatpush.msra.mxu0 %v3160
        %3345 = vmatpush.msra.mxu0 %v3157
        %3346 = vmatpush.msra.mxu0 %v3154
        %3347 = vmatpush.msra.mxu0 %v3151
        %3348 = vmatpush.msra.mxu0 %v3148
        %3349 = vmatpush.msra.mxu0 %v3145
        %3350 = vmatpush.msra.mxu0 %v3142
        %3351 = vmatpush.msra.mxu0 %v3139
        %3352 = vmatmul.f32.gmra.mxu0 %v2469
        %v3353 = vpop.f32.mrf.mxu0
        %v3354 = vadd.f32 %v3331, %v3353
        %3355 = vmatmul.f32.gmra.mxu0 %v2468
        %v3356 = vpop.f32.mrf.mxu0
        %v3357 = vadd.f32 %v3334, %v3356
        %3358 = vdwg.mxu0
        %3359 = vmatpush.msra.mxu0 0.0
        %3360 = vmatpush.msra.mxu0 0.0
        %3361 = vmatpush.msra.mxu0 0.0
        %3362 = vmatpush.msra.mxu0 0.0
        %3363 = vmatpush.msra.mxu0 0.0
        %3364 = vmatpush.msra.mxu0 0.0
        %3365 = vmatpush.msra.mxu0 0.0
        %3366 = vmatpush.msra.mxu0 0.0
        %3367 = vmatpush.msra.mxu0 0.0
        %3368 = vmatpush.msra.mxu0 0.0
        %3369 = vmatpush.msra.mxu0 0.0
        %3370 = vmatpush.msra.mxu0 0.0
        %3371 = vmatpush.msra.mxu0 %v3196
        %3372 = vmatpush.msra.mxu0 %v3193
        %3373 = vmatpush.msra.mxu0 %v3190
        %3374 = vmatpush.msra.mxu0 %v3187
        %3375 = vmatmul.f32.gmra.mxu0 %v2479
        %v3376 = vpop.f32.mrf.mxu0
        %v3377 = vadd.f32 %v3354, %v3376
        %3378 = vmatmul.f32.gmra.mxu0 %v2481
        %v3379 = vpop.f32.mrf.mxu0
        %v3380 = vadd.f32 %v3357, %v3379
        %3381 = vdwg.mxu0
        %3382 = vmatpush.msra.mxu0 %v3089
        %3383 = vmatpush.msra.mxu0 %v3086
        %3384 = vmatpush.msra.mxu0 %v3083
        %3385 = vmatpush.msra.mxu0 %v3080
        %3386 = vmatpush.msra.mxu0 %v3077
        %3387 = vmatpush.msra.mxu0 %v3074
        %3388 = vmatpush.msra.mxu0 %v3071
        %3389 = vmatpush.msra.mxu0 %v3068
        %3390 = vmatpush.msra.mxu0 %v3065
        %3391 = vmatpush.msra.mxu0 %v3062
        %3392 = vmatpush.msra.mxu0 %v3059
        %3393 = vmatpush.msra.mxu0 %v3056
        %3394 = vmatpush.msra.mxu0 %v3053
        %3395 = vmatpush.msra.mxu0 %v3050
        %3396 = vmatpush.msra.mxu0 %v3047
        %3397 = vmatpush.msra.mxu0 %v3044
        %3398 = vmatmul.f32.gmra.mxu0 %v2463
        %v3399 = vpop.f32.mrf.mxu0
        %v3400 = vadd.f32 0.0, %v3399
        %3401 = vmatmul.f32.gmra.mxu0 %v2462
        %v3402 = vpop.f32.mrf.mxu0
        %v3403 = vadd.f32 0.0, %v3402
        %3404 = vdwg.mxu0
        %3405 = vmatpush.msra.mxu0 %v3137
        %3406 = vmatpush.msra.mxu0 %v3134
        %3407 = vmatpush.msra.mxu0 %v3131
        %3408 = vmatpush.msra.mxu0 %v3128
        %3409 = vmatpush.msra.mxu0 %v3125
        %3410 = vmatpush.msra.mxu0 %v3122
        %3411 = vmatpush.msra.mxu0 %v3119
        %3412 = vmatpush.msra.mxu0 %v3116
        %3413 = vmatpush.msra.mxu0 %v3113
        %3414 = vmatpush.msra.mxu0 %v3110
        %3415 = vmatpush.msra.mxu0 %v3107
        %3416 = vmatpush.msra.mxu0 %v3104
        %3417 = vmatpush.msra.mxu0 %v3101
        %3418 = vmatpush.msra.mxu0 %v3098
        %3419 = vmatpush.msra.mxu0 %v3095
        %3420 = vmatpush.msra.mxu0 %v3092
        %3421 = vmatmul.f32.gmra.mxu0 %v2466
        %v3422 = vpop.f32.mrf.mxu0
        %v3423 = vadd.f32 %v3400, %v3422
        %3424 = vmatmul.f32.gmra.mxu0 %v2465
        %v3425 = vpop.f32.mrf.mxu0
        %v3426 = vadd.f32 %v3403, %v3425
        %3427 = vdwg.mxu0
        %3428 = vmatpush.msra.mxu0 %v3185
        %3429 = vmatpush.msra.mxu0 %v3182
        %3430 = vmatpush.msra.mxu0 %v3179
        %3431 = vmatpush.msra.mxu0 %v3176
        %3432 = vmatpush.msra.mxu0 %v3173
        %3433 = vmatpush.msra.mxu0 %v3170
        %3434 = vmatpush.msra.mxu0 %v3167
        %3435 = vmatpush.msra.mxu0 %v3164
        %3436 = vmatpush.msra.mxu0 %v3161
        %3437 = vmatpush.msra.mxu0 %v3158
        %3438 = vmatpush.msra.mxu0 %v3155
        %3439 = vmatpush.msra.mxu0 %v3152
        %3440 = vmatpush.msra.mxu0 %v3149
        %3441 = vmatpush.msra.mxu0 %v3146
        %3442 = vmatpush.msra.mxu0 %v3143
        %3443 = vmatpush.msra.mxu0 %v3140
        %3444 = vmatmul.f32.gmra.mxu0 %v2469
        %v3445 = vpop.f32.mrf.mxu0
        %v3446 = vadd.f32 %v3423, %v3445
        %3447 = vmatmul.f32.gmra.mxu0 %v2468
        %v3448 = vpop.f32.mrf.mxu0
        %v3449 = vadd.f32 %v3426, %v3448
        %3450 = vdwg.mxu0
        %3451 = vmatpush.msra.mxu0 0.0
        %3452 = vmatpush.msra.mxu0 0.0
        %3453 = vmatpush.msra.mxu0 0.0
        %3454 = vmatpush.msra.mxu0 0.0
        %3455 = vmatpush.msra.mxu0 0.0
        %3456 = vmatpush.msra.mxu0 0.0
        %3457 = vmatpush.msra.mxu0 0.0
        %3458 = vmatpush.msra.mxu0 0.0
        %3459 = vmatpush.msra.mxu0 0.0
        %3460 = vmatpush.msra.mxu0 0.0
        %3461 = vmatpush.msra.mxu0 0.0
        %3462 = vmatpush.msra.mxu0 0.0
        %3463 = vmatpush.msra.mxu0 %v3197
        %3464 = vmatpush.msra.mxu0 %v3194
        %3465 = vmatpush.msra.mxu0 %v3191
        %3466 = vmatpush.msra.mxu0 %v3188
        %3467 = vmatmul.f32.gmra.mxu0 %v2479
        %v3468 = vpop.f32.mrf.mxu0
        %v3469 = vadd.f32 %v3446, %v3468
        %3470 = vmatmul.f32.gmra.mxu0 %v2481
        %v3471 = vpop.f32.mrf.mxu0
        %v3472 = vadd.f32 %v3449, %v3471
        %3473 = vdwg.mxu0
        %3474 = vmatpush.msra.mxu0 %v2176
        %3475 = vmatpush.msra.mxu0 %v2173
        %3476 = vmatpush.msra.mxu0 %v2170
        %3477 = vmatpush.msra.mxu0 %v2167
        %3478 = vmatpush.msra.mxu0 %v2164
        %3479 = vmatpush.msra.mxu0 %v2161
        %3480 = vmatpush.msra.mxu0 %v2158
        %3481 = vmatpush.msra.mxu0 %v2155
        %3482 = vmatpush.msra.mxu0 %v2152
        %3483 = vmatpush.msra.mxu0 %v2149
        %3484 = vmatpush.msra.mxu0 %v2146
        %3485 = vmatpush.msra.mxu0 %v2143
        %3486 = vmatpush.msra.mxu0 %v2140
        %3487 = vmatpush.msra.mxu0 %v2137
        %3488 = vmatpush.msra.mxu0 %v2134
        %3489 = vmatpush.msra.mxu0 %v2131
        %3490 = vmatmul.f32.gmra.mxu0 %v1967
        %v3491 = vpop.f32.mrf.mxu0
        %v3492 = vadd.f32 %v3285, %v3491
        %3493 = vmatmul.f32.gmra.mxu0 %v1971
        %v3494 = vpop.f32.mrf.mxu0
        %v3495 = vadd.f32 %v3288, %v3494
        %3496 = vdwg.mxu0
        %3497 = vmatpush.msra.mxu0 %v2224
        %3498 = vmatpush.msra.mxu0 %v2221
        %3499 = vmatpush.msra.mxu0 %v2218
        %3500 = vmatpush.msra.mxu0 %v2215
        %3501 = vmatpush.msra.mxu0 %v2212
        %3502 = vmatpush.msra.mxu0 %v2209
        %3503 = vmatpush.msra.mxu0 %v2206
        %3504 = vmatpush.msra.mxu0 %v2203
        %3505 = vmatpush.msra.mxu0 %v2200
        %3506 = vmatpush.msra.mxu0 %v2197
        %3507 = vmatpush.msra.mxu0 %v2194
        %3508 = vmatpush.msra.mxu0 %v2191
        %3509 = vmatpush.msra.mxu0 %v2188
        %3510 = vmatpush.msra.mxu0 %v2185
        %3511 = vmatpush.msra.mxu0 %v2182
        %3512 = vmatpush.msra.mxu0 %v2179
        %3513 = vmatmul.f32.gmra.mxu0 %v1968
        %v3514 = vpop.f32.mrf.mxu0
        %v3515 = vadd.f32 %v3492, %v3514
        %3516 = vmatmul.f32.gmra.mxu0 %v1972
        %v3517 = vpop.f32.mrf.mxu0
        %v3518 = vadd.f32 %v3495, %v3517
        %3519 = vdwg.mxu0
        %3520 = vmatpush.msra.mxu0 %v2272
        %3521 = vmatpush.msra.mxu0 %v2269
        %3522 = vmatpush.msra.mxu0 %v2266
        %3523 = vmatpush.msra.mxu0 %v2263
        %3524 = vmatpush.msra.mxu0 %v2260
        %3525 = vmatpush.msra.mxu0 %v2257
        %3526 = vmatpush.msra.mxu0 %v2254
        %3527 = vmatpush.msra.mxu0 %v2251
        %3528 = vmatpush.msra.mxu0 %v2248
        %3529 = vmatpush.msra.mxu0 %v2245
        %3530 = vmatpush.msra.mxu0 %v2242
        %3531 = vmatpush.msra.mxu0 %v2239
        %3532 = vmatpush.msra.mxu0 %v2236
        %3533 = vmatpush.msra.mxu0 %v2233
        %3534 = vmatpush.msra.mxu0 %v2230
        %3535 = vmatpush.msra.mxu0 %v2227
        %3536 = vmatmul.f32.gmra.mxu0 %v1969
        %v3537 = vpop.f32.mrf.mxu0
        %v3538 = vadd.f32 %v3515, %v3537
        %3539 = vmatmul.f32.gmra.mxu0 %v1973
        %v3540 = vpop.f32.mrf.mxu0
        %v3541 = vadd.f32 %v3518, %v3540
        %3542 = vdwg.mxu0
        %3543 = vmatpush.msra.mxu0 0.0
        %3544 = vmatpush.msra.mxu0 0.0
        %3545 = vmatpush.msra.mxu0 0.0
        %3546 = vmatpush.msra.mxu0 0.0
        %3547 = vmatpush.msra.mxu0 0.0
        %3548 = vmatpush.msra.mxu0 0.0
        %3549 = vmatpush.msra.mxu0 0.0
        %3550 = vmatpush.msra.mxu0 0.0
        %3551 = vmatpush.msra.mxu0 0.0
        %3552 = vmatpush.msra.mxu0 0.0
        %3553 = vmatpush.msra.mxu0 0.0
        %3554 = vmatpush.msra.mxu0 0.0
        %3555 = vmatpush.msra.mxu0 %v2284
        %3556 = vmatpush.msra.mxu0 %v2281
        %3557 = vmatpush.msra.mxu0 %v2278
        %3558 = vmatpush.msra.mxu0 %v2275
        %3559 = vmatmul.f32.gmra.mxu0 %v2760
        %v3560 = vpop.f32.mrf.mxu0
        %v3561 = vadd.f32 %v3538, %v3560
        %3562 = vmatmul.f32.gmra.mxu0 %v2763
        %v3563 = vpop.f32.mrf.mxu0
        %v3564 = vadd.f32 %v3541, %v3563
        %3565 = vdwg.mxu0
        %3566 = vmatpush.msra.mxu0 %v2177
        %3567 = vmatpush.msra.mxu0 %v2174
        %3568 = vmatpush.msra.mxu0 %v2171
        %3569 = vmatpush.msra.mxu0 %v2168
        %3570 = vmatpush.msra.mxu0 %v2165
        %3571 = vmatpush.msra.mxu0 %v2162
        %3572 = vmatpush.msra.mxu0 %v2159
        %3573 = vmatpush.msra.mxu0 %v2156
        %3574 = vmatpush.msra.mxu0 %v2153
        %3575 = vmatpush.msra.mxu0 %v2150
        %3576 = vmatpush.msra.mxu0 %v2147
        %3577 = vmatpush.msra.mxu0 %v2144
        %3578 = vmatpush.msra.mxu0 %v2141
        %3579 = vmatpush.msra.mxu0 %v2138
        %3580 = vmatpush.msra.mxu0 %v2135
        %3581 = vmatpush.msra.mxu0 %v2132
        %3582 = vmatmul.f32.gmra.mxu0 %v1967
        %v3583 = vpop.f32.mrf.mxu0
        %v3584 = vadd.f32 %v3377, %v3583
        %3585 = vmatmul.f32.gmra.mxu0 %v1971
        %v3586 = vpop.f32.mrf.mxu0
        %v3587 = vadd.f32 %v3380, %v3586
        %3588 = vdwg.mxu0
        %3589 = vmatpush.msra.mxu0 %v2225
        %3590 = vmatpush.msra.mxu0 %v2222
        %3591 = vmatpush.msra.mxu0 %v2219
        %3592 = vmatpush.msra.mxu0 %v2216
        %3593 = vmatpush.msra.mxu0 %v2213
        %3594 = vmatpush.msra.mxu0 %v2210
        %3595 = vmatpush.msra.mxu0 %v2207
        %3596 = vmatpush.msra.mxu0 %v2204
        %3597 = vmatpush.msra.mxu0 %v2201
        %3598 = vmatpush.msra.mxu0 %v2198
        %3599 = vmatpush.msra.mxu0 %v2195
        %3600 = vmatpush.msra.mxu0 %v2192
        %3601 = vmatpush.msra.mxu0 %v2189
        %3602 = vmatpush.msra.mxu0 %v2186
        %3603 = vmatpush.msra.mxu0 %v2183
        %3604 = vmatpush.msra.mxu0 %v2180
        %3605 = vmatmul.f32.gmra.mxu0 %v1968
        %v3606 = vpop.f32.mrf.mxu0
        %v3607 = vadd.f32 %v3584, %v3606
        %3608 = vmatmul.f32.gmra.mxu0 %v1972
        %v3609 = vpop.f32.mrf.mxu0
        %v3610 = vadd.f32 %v3587, %v3609
        %3611 = vdwg.mxu0
        %3612 = vmatpush.msra.mxu0 %v2273
        %3613 = vmatpush.msra.mxu0 %v2270
        %3614 = vmatpush.msra.mxu0 %v2267
        %3615 = vmatpush.msra.mxu0 %v2264
        %3616 = vmatpush.msra.mxu0 %v2261
        %3617 = vmatpush.msra.mxu0 %v2258
        %3618 = vmatpush.msra.mxu0 %v2255
        %3619 = vmatpush.msra.mxu0 %v2252
        %3620 = vmatpush.msra.mxu0 %v2249
        %3621 = vmatpush.msra.mxu0 %v2246
        %3622 = vmatpush.msra.mxu0 %v2243
        %3623 = vmatpush.msra.mxu0 %v2240
        %3624 = vmatpush.msra.mxu0 %v2237
        %3625 = vmatpush.msra.mxu0 %v2234
        %3626 = vmatpush.msra.mxu0 %v2231
        %3627 = vmatpush.msra.mxu0 %v2228
        %3628 = vmatmul.f32.gmra.mxu0 %v1969
        %v3629 = vpop.f32.mrf.mxu0
        %v3630 = vadd.f32 %v3607, %v3629
        %3631 = vmatmul.f32.gmra.mxu0 %v1973
        %v3632 = vpop.f32.mrf.mxu0
        %v3633 = vadd.f32 %v3610, %v3632
        %3634 = vdwg.mxu0
        %3635 = vmatpush.msra.mxu0 0.0
        %3636 = vmatpush.msra.mxu0 0.0
        %3637 = vmatpush.msra.mxu0 0.0
        %3638 = vmatpush.msra.mxu0 0.0
        %3639 = vmatpush.msra.mxu0 0.0
        %3640 = vmatpush.msra.mxu0 0.0
        %3641 = vmatpush.msra.mxu0 0.0
        %3642 = vmatpush.msra.mxu0 0.0
        %3643 = vmatpush.msra.mxu0 0.0
        %3644 = vmatpush.msra.mxu0 0.0
        %3645 = vmatpush.msra.mxu0 0.0
        %3646 = vmatpush.msra.mxu0 0.0
        %3647 = vmatpush.msra.mxu0 %v2285
        %3648 = vmatpush.msra.mxu0 %v2282
        %3649 = vmatpush.msra.mxu0 %v2279
        %3650 = vmatpush.msra.mxu0 %v2276
        %3651 = vmatmul.f32.gmra.mxu0 %v2760
        %v3652 = vpop.f32.mrf.mxu0
        %v3653 = vadd.f32 %v3630, %v3652
        %3654 = vmatmul.f32.gmra.mxu0 %v2763
        %v3655 = vpop.f32.mrf.mxu0
        %v3656 = vadd.f32 %v3633, %v3655
        %3657 = vdwg.mxu0
        %3658 = vmatpush.msra.mxu0 %v2178
        %3659 = vmatpush.msra.mxu0 %v2175
        %3660 = vmatpush.msra.mxu0 %v2172
        %3661 = vmatpush.msra.mxu0 %v2169
        %3662 = vmatpush.msra.mxu0 %v2166
        %3663 = vmatpush.msra.mxu0 %v2163
        %3664 = vmatpush.msra.mxu0 %v2160
        %3665 = vmatpush.msra.mxu0 %v2157
        %3666 = vmatpush.msra.mxu0 %v2154
        %3667 = vmatpush.msra.mxu0 %v2151
        %3668 = vmatpush.msra.mxu0 %v2148
        %3669 = vmatpush.msra.mxu0 %v2145
        %3670 = vmatpush.msra.mxu0 %v2142
        %3671 = vmatpush.msra.mxu0 %v2139
        %3672 = vmatpush.msra.mxu0 %v2136
        %3673 = vmatpush.msra.mxu0 %v2133
        %3674 = vmatmul.f32.gmra.mxu0 %v1967
        %v3675 = vpop.f32.mrf.mxu0
        %v3676 = vadd.f32 %v3469, %v3675
        %3677 = vmatmul.f32.gmra.mxu0 %v1971
        %v3678 = vpop.f32.mrf.mxu0
        %v3679 = vadd.f32 %v3472, %v3678
        %3680 = vdwg.mxu0
        %3681 = vmatpush.msra.mxu0 %v2226
        %3682 = vmatpush.msra.mxu0 %v2223
        %3683 = vmatpush.msra.mxu0 %v2220
        %3684 = vmatpush.msra.mxu0 %v2217
        %3685 = vmatpush.msra.mxu0 %v2214
        %3686 = vmatpush.msra.mxu0 %v2211
        %3687 = vmatpush.msra.mxu0 %v2208
        %3688 = vmatpush.msra.mxu0 %v2205
        %3689 = vmatpush.msra.mxu0 %v2202
        %3690 = vmatpush.msra.mxu0 %v2199
        %3691 = vmatpush.msra.mxu0 %v2196
        %3692 = vmatpush.msra.mxu0 %v2193
        %3693 = vmatpush.msra.mxu0 %v2190
        %3694 = vmatpush.msra.mxu0 %v2187
        %3695 = vmatpush.msra.mxu0 %v2184
        %3696 = vmatpush.msra.mxu0 %v2181
        %3697 = vmatmul.f32.gmra.mxu0 %v1968
        %v3698 = vpop.f32.mrf.mxu0
        %v3699 = vadd.f32 %v3676, %v3698
        %3700 = vmatmul.f32.gmra.mxu0 %v1972
        %v3701 = vpop.f32.mrf.mxu0
        %v3702 = vadd.f32 %v3679, %v3701
        %3703 = vdwg.mxu0
        %3704 = vmatpush.msra.mxu0 %v2274
        %3705 = vmatpush.msra.mxu0 %v2271
        %3706 = vmatpush.msra.mxu0 %v2268
        %3707 = vmatpush.msra.mxu0 %v2265
        %3708 = vmatpush.msra.mxu0 %v2262
        %3709 = vmatpush.msra.mxu0 %v2259
        %3710 = vmatpush.msra.mxu0 %v2256
        %3711 = vmatpush.msra.mxu0 %v2253
        %3712 = vmatpush.msra.mxu0 %v2250
        %3713 = vmatpush.msra.mxu0 %v2247
        %3714 = vmatpush.msra.mxu0 %v2244
        %3715 = vmatpush.msra.mxu0 %v2241
        %3716 = vmatpush.msra.mxu0 %v2238
        %3717 = vmatpush.msra.mxu0 %v2235
        %3718 = vmatpush.msra.mxu0 %v2232
        %3719 = vmatpush.msra.mxu0 %v2229
        %3720 = vmatmul.f32.gmra.mxu0 %v1969
        %v3721 = vpop.f32.mrf.mxu0
        %v3722 = vadd.f32 %v3699, %v3721
        %3723 = vmatmul.f32.gmra.mxu0 %v1973
        %v3724 = vpop.f32.mrf.mxu0
        %v3725 = vadd.f32 %v3702, %v3724
        %3726 = vdwg.mxu0
        %3727 = vmatpush.msra.mxu0 0.0
        %3728 = vmatpush.msra.mxu0 0.0
        %3729 = vmatpush.msra.mxu0 0.0
        %3730 = vmatpush.msra.mxu0 0.0
        %3731 = vmatpush.msra.mxu0 0.0
        %3732 = vmatpush.msra.mxu0 0.0
        %3733 = vmatpush.msra.mxu0 0.0
        %3734 = vmatpush.msra.mxu0 0.0
        %3735 = vmatpush.msra.mxu0 0.0
        %3736 = vmatpush.msra.mxu0 0.0
        %3737 = vmatpush.msra.mxu0 0.0
        %3738 = vmatpush.msra.mxu0 0.0
        %3739 = vmatpush.msra.mxu0 %v2286
        %3740 = vmatpush.msra.mxu0 %v2283
        %3741 = vmatpush.msra.mxu0 %v2280
        %3742 = vmatpush.msra.mxu0 %v2277
        %3743 = vmatmul.f32.gmra.mxu0 %v2760
        %v3744 = vpop.f32.mrf.mxu0
        %v3745 = vadd.f32 %v3722, %v3744
        %3746 = vmatmul.f32.gmra.mxu0 %v2763
        %v3747 = vpop.f32.mrf.mxu0
        %v3748 = vadd.f32 %v3725, %v3747
        %3749 = vdwg.mxu0
        %v3750 = vld [vmem:[#allocation2] sm:$0xfc]
        %v3751 = vld [vmem:[#allocation2 + $0x8] sm:$0xfc]
        %v3752 = vld [vmem:[#allocation2 + $0x10] sm:$0xfc]
        %v3753 = vld [vmem:[#allocation2 + $0x18] sm:$0xfc]
        %v3754 = vld [vmem:[#allocation2 + $0x20] sm:$0x1f]
        %v3755 = vld [vmem:[#allocation2 + $0x28] sm:$0x1f]
        %v3756 = vld [vmem:[#allocation2 + $0x30] sm:$0x1f]
        %v3757 = vld [vmem:[#allocation2 + $0x38] sm:$0x1f]
        %s3758 = scalar_lea.vmem [#allocation13], 2496
        %v3759 = vld [vmem:[%s3758] sm:$0xff]
        %v3760 = vld [vmem:[%s3758 + $0x8] sm:$0xff]
        %v3761 = vld [vmem:[%s3758 + $0x10] sm:$0xff]
        %v3762 = vld [vmem:[%s3758 + $0x18] sm:$0xff]
        %v3763 = vld [vmem:[%s3758 + $0x20] sm:$0xff]
        %v3764 = vld [vmem:[%s3758 + $0x28] sm:$0xff]
        %v3765 = vld [vmem:[%s3758 + $0x30] sm:$0xff]
        %v3766 = vld [vmem:[%s3758 + $0x38] sm:$0xff]
        %v3767 = vld [vmem:[%s3758 + $0x40] sm:$0xff]
        %v3768 = vld [vmem:[%s3758 + $0x48] sm:$0xff]
        %v3769 = vld [vmem:[%s3758 + $0x50] sm:$0xff]
        %v3770 = vld [vmem:[%s3758 + $0x58] sm:$0xff]
        %v3771 = vld [vmem:[%s3758 + $0x60] sm:$0xff]
        %v3772 = vld [vmem:[%s3758 + $0x68] sm:$0xff]
        %v3773 = vld [vmem:[%s3758 + $0x70] sm:$0xff]
        %v3774 = vld [vmem:[%s3758 + $0x78] sm:$0xff]
        %v3775 = vld [vmem:[%s3758 + $0x80] sm:$0xff]
        %v3776 = vld [vmem:[%s3758 + $0x88] sm:$0xff]
        %v3777 = vld [vmem:[%s3758 + $0x90] sm:$0xff]
        %v3778 = vld [vmem:[%s3758 + $0x98] sm:$0xff]
        %v3779 = vld [vmem:[%s3758 + $0xa0] sm:$0xff]
        %v3780 = vld [vmem:[%s3758 + $0xa8] sm:$0xff]
        %v3781 = vld [vmem:[%s3758 + $0xb0] sm:$0xff]
        %v3782 = vld [vmem:[%s3758 + $0xb8] sm:$0xff]
        %v3783 = vld [vmem:[%s3758 + $0xc0] sm:$0xff]
        %v3784 = vld [vmem:[%s3758 + $0xc8] sm:$0xff]
        %v3785 = vld [vmem:[%s3758 + $0xd0] sm:$0xff]
        %v3786 = vld [vmem:[%s3758 + $0xd8] sm:$0xff]
        %v3787 = vld [vmem:[%s3758 + $0xe0] sm:$0xff]
        %v3788 = vld [vmem:[%s3758 + $0xe8] sm:$0xff]
        %v3789 = vld [vmem:[%s3758 + $0xf0] sm:$0xff]
        %v3790 = vld [vmem:[%s3758 + $0xf8] sm:$0xff]
        %v3791 = vld [vmem:[%s3758 + $0x100] sm:$0xff]
        %v3792 = vld [vmem:[%s3758 + $0x108] sm:$0xff]
        %v3793 = vld [vmem:[%s3758 + $0x110] sm:$0xff]
        %v3794 = vld [vmem:[%s3758 + $0x118] sm:$0xff]
        %v3795 = vld [vmem:[%s3758 + $0x120] sm:$0xff]
        %v3796 = vld [vmem:[%s3758 + $0x128] sm:$0xff]
        %v3797 = vld [vmem:[%s3758 + $0x130] sm:$0xff]
        %v3798 = vld [vmem:[%s3758 + $0x138] sm:$0xff]
        %v3799 = vld [vmem:[%s3758 + $0x140] sm:$0xff]
        %v3800 = vld [vmem:[%s3758 + $0x148] sm:$0xff]
        %v3801 = vld [vmem:[%s3758 + $0x150] sm:$0xff]
        %v3802 = vld [vmem:[%s3758 + $0x158] sm:$0xff]
        %v3803 = vld [vmem:[%s3758 + $0x160] sm:$0xff]
        %v3804 = vld [vmem:[%s3758 + $0x168] sm:$0xff]
        %v3805 = vld [vmem:[%s3758 + $0x170] sm:$0xff]
        %v3806 = vld [vmem:[%s3758 + $0x178] sm:$0xff]
        %v3807 = vld [vmem:[%s3758 + $0x180] sm:$0xff]
        %v3808 = vld [vmem:[%s3758 + $0x188] sm:$0xff]
        %v3809 = vld [vmem:[%s3758 + $0x190] sm:$0xff]
        %v3810 = vld [vmem:[%s3758 + $0x198] sm:$0xff]
        %v3811 = vld [vmem:[%s3758 + $0x1a0] sm:$0xff]
        %v3812 = vld [vmem:[%s3758 + $0x1a8] sm:$0xff]
        %v3813 = vld [vmem:[%s3758 + $0x1b0] sm:$0xff]
        %v3814 = vld [vmem:[%s3758 + $0x1b8] sm:$0xff]
        %v3815 = vld [vmem:[%s3758 + $0x1c0] sm:$0xff]
        %v3816 = vld [vmem:[%s3758 + $0x1c8] sm:$0xff]
        %v3817 = vld [vmem:[%s3758 + $0x1d0] sm:$0xff]
        %v3818 = vld [vmem:[%s3758 + $0x1d8] sm:$0xff]
        %v3819 = vld [vmem:[%s3758 + $0x1e0] sm:$0xff]
        %v3820 = vld [vmem:[%s3758 + $0x1e8] sm:$0xff]
        %v3821 = vld [vmem:[%s3758 + $0x1f0] sm:$0xff]
        %v3822 = vld [vmem:[%s3758 + $0x1f8] sm:$0xff]
        %v3823 = vld [vmem:[%s3758 + $0x200] sm:$0xff]
        %v3824 = vld [vmem:[%s3758 + $0x208] sm:$0xff]
        %v3825 = vld [vmem:[%s3758 + $0x210] sm:$0xff]
        %v3826 = vld [vmem:[%s3758 + $0x218] sm:$0xff]
        %v3827 = vld [vmem:[%s3758 + $0x220] sm:$0xff]
        %v3828 = vld [vmem:[%s3758 + $0x228] sm:$0xff]
        %v3829 = vld [vmem:[%s3758 + $0x230] sm:$0xff]
        %v3830 = vld [vmem:[%s3758 + $0x238] sm:$0xff]
        %v3831 = vld [vmem:[%s3758 + $0x240] sm:$0xff]
        %v3832 = vld [vmem:[%s3758 + $0x248] sm:$0xff]
        %v3833 = vld [vmem:[%s3758 + $0x250] sm:$0xff]
        %v3834 = vld [vmem:[%s3758 + $0x258] sm:$0xff]
        %v3835 = vld [vmem:[%s3758 + $0x260] sm:$0xff]
        %v3836 = vld [vmem:[%s3758 + $0x268] sm:$0xff]
        %v3837 = vld [vmem:[%s3758 + $0x270] sm:$0xff]
        %v3838 = vld [vmem:[%s3758 + $0x278] sm:$0xff]
        %v3839 = vld [vmem:[%s3758 + $0x280] sm:$0xff]
        %v3840 = vld [vmem:[%s3758 + $0x288] sm:$0xff]
        %v3841 = vld [vmem:[%s3758 + $0x290] sm:$0xff]
        %v3842 = vld [vmem:[%s3758 + $0x298] sm:$0xff]
        %v3843 = vld [vmem:[%s3758 + $0x2a0] sm:$0xff]
        %v3844 = vld [vmem:[%s3758 + $0x2a8] sm:$0xff]
        %v3845 = vld [vmem:[%s3758 + $0x2b0] sm:$0xff]
        %v3846 = vld [vmem:[%s3758 + $0x2b8] sm:$0xff]
        %v3847 = vld [vmem:[%s3758 + $0x2c0] sm:$0xff]
        %v3848 = vld [vmem:[%s3758 + $0x2c8] sm:$0xff]
        %v3849 = vld [vmem:[%s3758 + $0x2d0] sm:$0xff]
        %v3850 = vld [vmem:[%s3758 + $0x2d8] sm:$0xff]
        %v3851 = vld [vmem:[%s3758 + $0x2e0] sm:$0xff]
        %v3852 = vld [vmem:[%s3758 + $0x2e8] sm:$0xff]
        %v3853 = vld [vmem:[%s3758 + $0x2f0] sm:$0xff]
        %v3854 = vld [vmem:[%s3758 + $0x2f8] sm:$0xff]
        %v3855 = vld [vmem:[%s3758 + $0x300] sm:$0xff]
        %v3856 = vld [vmem:[%s3758 + $0x308] sm:$0xff]
        %v3857 = vld [vmem:[%s3758 + $0x310] sm:$0xff]
        %v3858 = vld [vmem:[%s3758 + $0x318] sm:$0xff]
        %v3859 = vld [vmem:[%s3758 + $0x320] sm:$0xff]
        %v3860 = vld [vmem:[%s3758 + $0x328] sm:$0xff]
        %v3861 = vld [vmem:[%s3758 + $0x330] sm:$0xff]
        %v3862 = vld [vmem:[%s3758 + $0x338] sm:$0xff]
        %v3863 = vld [vmem:[%s3758 + $0x340] sm:$0xff]
        %v3864 = vld [vmem:[%s3758 + $0x348] sm:$0xff]
        %v3865 = vld [vmem:[%s3758 + $0x350] sm:$0xff]
        %v3866 = vld [vmem:[%s3758 + $0x358] sm:$0xff]
        %v3867 = vld [vmem:[%s3758 + $0x360] sm:$0xff]
        %v3868 = vld [vmem:[%s3758 + $0x368] sm:$0xff]
        %v3869 = vld [vmem:[%s3758 + $0x370] sm:$0xff]
        %v3870 = vld [vmem:[%s3758 + $0x378] sm:$0xff]
        %v3871 = vld [vmem:[%s3758 + $0x380] sm:$0xff]
        %v3872 = vld [vmem:[%s3758 + $0x388] sm:$0xff]
        %v3873 = vld [vmem:[%s3758 + $0x390] sm:$0xff]
        %v3874 = vld [vmem:[%s3758 + $0x398] sm:$0xff]
        %v3875 = vld [vmem:[%s3758 + $0x3a0] sm:$0xff]
        %v3876 = vld [vmem:[%s3758 + $0x3a8] sm:$0xff]
        %v3877 = vld [vmem:[%s3758 + $0x3b0] sm:$0xff]
        %v3878 = vld [vmem:[%s3758 + $0x3b8] sm:$0xff]
        %v3879 = vld [vmem:[%s3758 + $0x3c0] sm:$0xff]
        %v3880 = vld [vmem:[%s3758 + $0x3c8] sm:$0xff]
        %v3881 = vld [vmem:[%s3758 + $0x3d0] sm:$0xff]
        %v3882 = vld [vmem:[%s3758 + $0x3d8] sm:$0xff]
        %v3883 = vld [vmem:[%s3758 + $0x3e0] sm:$0xff]
        %v3884 = vld [vmem:[%s3758 + $0x3e8] sm:$0xff]
        %v3885 = vld [vmem:[%s3758 + $0x3f0] sm:$0xff]
        %v3886 = vld [vmem:[%s3758 + $0x3f8] sm:$0xff]
        %v3887 = vld [vmem:[%s3758 + $0x400] sm:$0xff]
        %v3888 = vld [vmem:[%s3758 + $0x408] sm:$0xff]
        %v3889 = vld [vmem:[%s3758 + $0x410] sm:$0xff]
        %v3890 = vld [vmem:[%s3758 + $0x418] sm:$0xff]
        %v3891 = vld [vmem:[%s3758 + $0x420] sm:$0xff]
        %v3892 = vld [vmem:[%s3758 + $0x428] sm:$0xff]
        %v3893 = vld [vmem:[%s3758 + $0x430] sm:$0xff]
        %v3894 = vld [vmem:[%s3758 + $0x438] sm:$0xff]
        %v3895 = vld [vmem:[%s3758 + $0x440] sm:$0xff]
        %v3896 = vld [vmem:[%s3758 + $0x448] sm:$0xff]
        %v3897 = vld [vmem:[%s3758 + $0x450] sm:$0xff]
        %v3898 = vld [vmem:[%s3758 + $0x458] sm:$0xff]
        %v3899 = vld [vmem:[%s3758 + $0x460] sm:$0xff]
        %v3900 = vld [vmem:[%s3758 + $0x468] sm:$0xff]
        %v3901 = vld [vmem:[%s3758 + $0x470] sm:$0xff]
        %v3902 = vld [vmem:[%s3758 + $0x478] sm:$0xff]
        %v3903 = vld [vmem:[%s3758 + $0x480] sm:$0xff]
        %v3904 = vld [vmem:[%s3758 + $0x488] sm:$0xff]
        %v3905 = vld [vmem:[%s3758 + $0x490] sm:$0xff]
        %v3906 = vld [vmem:[%s3758 + $0x498] sm:$0xff]
        %v3907 = vld [vmem:[%s3758 + $0x4a0] sm:$0xff]
        %v3908 = vld [vmem:[%s3758 + $0x4a8] sm:$0xff]
        %v3909 = vld [vmem:[%s3758 + $0x4b0] sm:$0xff]
        %v3910 = vld [vmem:[%s3758 + $0x4b8] sm:$0xff]
        %v3911 = vld [vmem:[%s3758 + $0x4c0] sm:$0xff]
        %v3912 = vld [vmem:[%s3758 + $0x4c8] sm:$0xff]
        %v3913 = vld [vmem:[%s3758 + $0x4d0] sm:$0xff]
        %v3914 = vld [vmem:[%s3758 + $0x4d8] sm:$0xff]
        %vm3923 = vcmask 1045504
        %v3924 = vrot.slane %v3750, 2
        %v3925 = vrot.slane %v3754, 2
        %v3926 = vsel %vm3923, %v3924, %v3925
        %v3927 = vrot.slane %v3751, 2
        %v3928 = vrot.slane %v3755, 2
        %v3929 = vsel %vm3923, %v3927, %v3928
        %v3930 = vrot.slane %v3752, 2
        %v3931 = vrot.slane %v3756, 2
        %v3932 = vsel %vm3923, %v3930, %v3931
        %v3933 = vrot.slane %v3753, 2
        %v3934 = vrot.slane %v3757, 2
        %v3935 = vsel %vm3923, %v3933, %v3934
        %v3942 = vsel %vm1960, %v3935, 0
        %v3944 = vsel %vm1960, %v3934, 0
        %3946 = vmatpush.msra.mxu0 %v3804
        %3947 = vmatpush.msra.mxu0 %v3801
        %3948 = vmatpush.msra.mxu0 %v3798
        %3949 = vmatpush.msra.mxu0 %v3795
        %3950 = vmatpush.msra.mxu0 %v3792
        %3951 = vmatpush.msra.mxu0 %v3789
        %3952 = vmatpush.msra.mxu0 %v3786
        %3953 = vmatpush.msra.mxu0 %v3783
        %3954 = vmatpush.msra.mxu0 %v3780
        %3955 = vmatpush.msra.mxu0 %v3777
        %3956 = vmatpush.msra.mxu0 %v3774
        %3957 = vmatpush.msra.mxu0 %v3771
        %3958 = vmatpush.msra.mxu0 %v3768
        %3959 = vmatpush.msra.mxu0 %v3765
        %3960 = vmatpush.msra.mxu0 %v3762
        %3961 = vmatpush.msra.mxu0 %v3759
        %3962 = vmatmul.f32.gmra.mxu0 %v3926
        %v3963 = vpop.f32.mrf.mxu0
        %v3964 = vadd.f32 0.0, %v3963
        %3965 = vmatmul.f32.gmra.mxu0 %v3925
        %v3966 = vpop.f32.mrf.mxu0
        %v3967 = vadd.f32 0.0, %v3966
        %3968 = vdwg.mxu0
        %3969 = vmatpush.msra.mxu0 %v3852
        %3970 = vmatpush.msra.mxu0 %v3849
        %3971 = vmatpush.msra.mxu0 %v3846
        %3972 = vmatpush.msra.mxu0 %v3843
        %3973 = vmatpush.msra.mxu0 %v3840
        %3974 = vmatpush.msra.mxu0 %v3837
        %3975 = vmatpush.msra.mxu0 %v3834
        %3976 = vmatpush.msra.mxu0 %v3831
        %3977 = vmatpush.msra.mxu0 %v3828
        %3978 = vmatpush.msra.mxu0 %v3825
        %3979 = vmatpush.msra.mxu0 %v3822
        %3980 = vmatpush.msra.mxu0 %v3819
        %3981 = vmatpush.msra.mxu0 %v3816
        %3982 = vmatpush.msra.mxu0 %v3813
        %3983 = vmatpush.msra.mxu0 %v3810
        %3984 = vmatpush.msra.mxu0 %v3807
        %3985 = vmatmul.f32.gmra.mxu0 %v3929
        %v3986 = vpop.f32.mrf.mxu0
        %v3987 = vadd.f32 %v3964, %v3986
        %3988 = vmatmul.f32.gmra.mxu0 %v3928
        %v3989 = vpop.f32.mrf.mxu0
        %v3990 = vadd.f32 %v3967, %v3989
        %3991 = vdwg.mxu0
        %3992 = vmatpush.msra.mxu0 %v3900
        %3993 = vmatpush.msra.mxu0 %v3897
        %3994 = vmatpush.msra.mxu0 %v3894
        %3995 = vmatpush.msra.mxu0 %v3891
        %3996 = vmatpush.msra.mxu0 %v3888
        %3997 = vmatpush.msra.mxu0 %v3885
        %3998 = vmatpush.msra.mxu0 %v3882
        %3999 = vmatpush.msra.mxu0 %v3879
        %4000 = vmatpush.msra.mxu0 %v3876
        %4001 = vmatpush.msra.mxu0 %v3873
        %4002 = vmatpush.msra.mxu0 %v3870
        %4003 = vmatpush.msra.mxu0 %v3867
        %4004 = vmatpush.msra.mxu0 %v3864
        %4005 = vmatpush.msra.mxu0 %v3861
        %4006 = vmatpush.msra.mxu0 %v3858
        %4007 = vmatpush.msra.mxu0 %v3855
        %4008 = vmatmul.f32.gmra.mxu0 %v3932
        %v4009 = vpop.f32.mrf.mxu0
        %v4010 = vadd.f32 %v3987, %v4009
        %4011 = vmatmul.f32.gmra.mxu0 %v3931
        %v4012 = vpop.f32.mrf.mxu0
        %v4013 = vadd.f32 %v3990, %v4012
        %4014 = vdwg.mxu0
        %4015 = vmatpush.msra.mxu0 0.0
        %4016 = vmatpush.msra.mxu0 0.0
        %4017 = vmatpush.msra.mxu0 0.0
        %4018 = vmatpush.msra.mxu0 0.0
        %4019 = vmatpush.msra.mxu0 0.0
        %4020 = vmatpush.msra.mxu0 0.0
        %4021 = vmatpush.msra.mxu0 0.0
        %4022 = vmatpush.msra.mxu0 0.0
        %4023 = vmatpush.msra.mxu0 0.0
        %4024 = vmatpush.msra.mxu0 0.0
        %4025 = vmatpush.msra.mxu0 0.0
        %4026 = vmatpush.msra.mxu0 0.0
        %4027 = vmatpush.msra.mxu0 %v3912
        %4028 = vmatpush.msra.mxu0 %v3909
        %4029 = vmatpush.msra.mxu0 %v3906
        %4030 = vmatpush.msra.mxu0 %v3903
        %4031 = vmatmul.f32.gmra.mxu0 %v3942
        %v4032 = vpop.f32.mrf.mxu0
        %v4033 = vadd.f32 %v4010, %v4032
        %4034 = vmatmul.f32.gmra.mxu0 %v3944
        %v4035 = vpop.f32.mrf.mxu0
        %v4036 = vadd.f32 %v4013, %v4035
        %4037 = vdwg.mxu0
        %4038 = vmatpush.msra.mxu0 %v3805
        %4039 = vmatpush.msra.mxu0 %v3802
        %4040 = vmatpush.msra.mxu0 %v3799
        %4041 = vmatpush.msra.mxu0 %v3796
        %4042 = vmatpush.msra.mxu0 %v3793
        %4043 = vmatpush.msra.mxu0 %v3790
        %4044 = vmatpush.msra.mxu0 %v3787
        %4045 = vmatpush.msra.mxu0 %v3784
        %4046 = vmatpush.msra.mxu0 %v3781
        %4047 = vmatpush.msra.mxu0 %v3778
        %4048 = vmatpush.msra.mxu0 %v3775
        %4049 = vmatpush.msra.mxu0 %v3772
        %4050 = vmatpush.msra.mxu0 %v3769
        %4051 = vmatpush.msra.mxu0 %v3766
        %4052 = vmatpush.msra.mxu0 %v3763
        %4053 = vmatpush.msra.mxu0 %v3760
        %4054 = vmatmul.f32.gmra.mxu0 %v3926
        %v4055 = vpop.f32.mrf.mxu0
        %v4056 = vadd.f32 0.0, %v4055
        %4057 = vmatmul.f32.gmra.mxu0 %v3925
        %v4058 = vpop.f32.mrf.mxu0
        %v4059 = vadd.f32 0.0, %v4058
        %4060 = vdwg.mxu0
        %4061 = vmatpush.msra.mxu0 %v3853
        %4062 = vmatpush.msra.mxu0 %v3850
        %4063 = vmatpush.msra.mxu0 %v3847
        %4064 = vmatpush.msra.mxu0 %v3844
        %4065 = vmatpush.msra.mxu0 %v3841
        %4066 = vmatpush.msra.mxu0 %v3838
        %4067 = vmatpush.msra.mxu0 %v3835
        %4068 = vmatpush.msra.mxu0 %v3832
        %4069 = vmatpush.msra.mxu0 %v3829
        %4070 = vmatpush.msra.mxu0 %v3826
        %4071 = vmatpush.msra.mxu0 %v3823
        %4072 = vmatpush.msra.mxu0 %v3820
        %4073 = vmatpush.msra.mxu0 %v3817
        %4074 = vmatpush.msra.mxu0 %v3814
        %4075 = vmatpush.msra.mxu0 %v3811
        %4076 = vmatpush.msra.mxu0 %v3808
        %4077 = vmatmul.f32.gmra.mxu0 %v3929
        %v4078 = vpop.f32.mrf.mxu0
        %v4079 = vadd.f32 %v4056, %v4078
        %4080 = vmatmul.f32.gmra.mxu0 %v3928
        %v4081 = vpop.f32.mrf.mxu0
        %v4082 = vadd.f32 %v4059, %v4081
        %4083 = vdwg.mxu0
        %4084 = vmatpush.msra.mxu0 %v3901
        %4085 = vmatpush.msra.mxu0 %v3898
        %4086 = vmatpush.msra.mxu0 %v3895
        %4087 = vmatpush.msra.mxu0 %v3892
        %4088 = vmatpush.msra.mxu0 %v3889
        %4089 = vmatpush.msra.mxu0 %v3886
        %4090 = vmatpush.msra.mxu0 %v3883
        %4091 = vmatpush.msra.mxu0 %v3880
        %4092 = vmatpush.msra.mxu0 %v3877
        %4093 = vmatpush.msra.mxu0 %v3874
        %4094 = vmatpush.msra.mxu0 %v3871
        %4095 = vmatpush.msra.mxu0 %v3868
        %4096 = vmatpush.msra.mxu0 %v3865
        %4097 = vmatpush.msra.mxu0 %v3862
        %4098 = vmatpush.msra.mxu0 %v3859
        %4099 = vmatpush.msra.mxu0 %v3856
        %4100 = vmatmul.f32.gmra.mxu0 %v3932
        %v4101 = vpop.f32.mrf.mxu0
        %v4102 = vadd.f32 %v4079, %v4101
        %4103 = vmatmul.f32.gmra.mxu0 %v3931
        %v4104 = vpop.f32.mrf.mxu0
        %v4105 = vadd.f32 %v4082, %v4104
        %4106 = vdwg.mxu0
        %4107 = vmatpush.msra.mxu0 0.0
        %4108 = vmatpush.msra.mxu0 0.0
        %4109 = vmatpush.msra.mxu0 0.0
        %4110 = vmatpush.msra.mxu0 0.0
        %4111 = vmatpush.msra.mxu0 0.0
        %4112 = vmatpush.msra.mxu0 0.0
        %4113 = vmatpush.msra.mxu0 0.0
        %4114 = vmatpush.msra.mxu0 0.0
        %4115 = vmatpush.msra.mxu0 0.0
        %4116 = vmatpush.msra.mxu0 0.0
        %4117 = vmatpush.msra.mxu0 0.0
        %4118 = vmatpush.msra.mxu0 0.0
        %4119 = vmatpush.msra.mxu0 %v3913
        %4120 = vmatpush.msra.mxu0 %v3910
        %4121 = vmatpush.msra.mxu0 %v3907
        %4122 = vmatpush.msra.mxu0 %v3904
        %4123 = vmatmul.f32.gmra.mxu0 %v3942
        %v4124 = vpop.f32.mrf.mxu0
        %v4125 = vadd.f32 %v4102, %v4124
        %4126 = vmatmul.f32.gmra.mxu0 %v3944
        %v4127 = vpop.f32.mrf.mxu0
        %v4128 = vadd.f32 %v4105, %v4127
        %4129 = vdwg.mxu0
        %4130 = vmatpush.msra.mxu0 %v3806
        %4131 = vmatpush.msra.mxu0 %v3803
        %4132 = vmatpush.msra.mxu0 %v3800
        %4133 = vmatpush.msra.mxu0 %v3797
        %4134 = vmatpush.msra.mxu0 %v3794
        %4135 = vmatpush.msra.mxu0 %v3791
        %4136 = vmatpush.msra.mxu0 %v3788
        %4137 = vmatpush.msra.mxu0 %v3785
        %4138 = vmatpush.msra.mxu0 %v3782
        %4139 = vmatpush.msra.mxu0 %v3779
        %4140 = vmatpush.msra.mxu0 %v3776
        %4141 = vmatpush.msra.mxu0 %v3773
        %4142 = vmatpush.msra.mxu0 %v3770
        %4143 = vmatpush.msra.mxu0 %v3767
        %4144 = vmatpush.msra.mxu0 %v3764
        %4145 = vmatpush.msra.mxu0 %v3761
        %4146 = vmatmul.f32.gmra.mxu0 %v3926
        %v4147 = vpop.f32.mrf.mxu0
        %v4148 = vadd.f32 0.0, %v4147
        %4149 = vmatmul.f32.gmra.mxu0 %v3925
        %v4150 = vpop.f32.mrf.mxu0
        %v4151 = vadd.f32 0.0, %v4150
        %4152 = vdwg.mxu0
        %4153 = vmatpush.msra.mxu0 %v3854
        %4154 = vmatpush.msra.mxu0 %v3851
        %4155 = vmatpush.msra.mxu0 %v3848
        %4156 = vmatpush.msra.mxu0 %v3845
        %4157 = vmatpush.msra.mxu0 %v3842
        %4158 = vmatpush.msra.mxu0 %v3839
        %4159 = vmatpush.msra.mxu0 %v3836
        %4160 = vmatpush.msra.mxu0 %v3833
        %4161 = vmatpush.msra.mxu0 %v3830
        %4162 = vmatpush.msra.mxu0 %v3827
        %4163 = vmatpush.msra.mxu0 %v3824
        %4164 = vmatpush.msra.mxu0 %v3821
        %4165 = vmatpush.msra.mxu0 %v3818
        %4166 = vmatpush.msra.mxu0 %v3815
        %4167 = vmatpush.msra.mxu0 %v3812
        %4168 = vmatpush.msra.mxu0 %v3809
        %4169 = vmatmul.f32.gmra.mxu0 %v3929
        %v4170 = vpop.f32.mrf.mxu0
        %v4171 = vadd.f32 %v4148, %v4170
        %4172 = vmatmul.f32.gmra.mxu0 %v3928
        %v4173 = vpop.f32.mrf.mxu0
        %v4174 = vadd.f32 %v4151, %v4173
        %4175 = vdwg.mxu0
        %4176 = vmatpush.msra.mxu0 %v3902
        %4177 = vmatpush.msra.mxu0 %v3899
        %4178 = vmatpush.msra.mxu0 %v3896
        %4179 = vmatpush.msra.mxu0 %v3893
        %4180 = vmatpush.msra.mxu0 %v3890
        %4181 = vmatpush.msra.mxu0 %v3887
        %4182 = vmatpush.msra.mxu0 %v3884
        %4183 = vmatpush.msra.mxu0 %v3881
        %4184 = vmatpush.msra.mxu0 %v3878
        %4185 = vmatpush.msra.mxu0 %v3875
        %4186 = vmatpush.msra.mxu0 %v3872
        %4187 = vmatpush.msra.mxu0 %v3869
        %4188 = vmatpush.msra.mxu0 %v3866
        %4189 = vmatpush.msra.mxu0 %v3863
        %4190 = vmatpush.msra.mxu0 %v3860
        %4191 = vmatpush.msra.mxu0 %v3857
        %4192 = vmatmul.f32.gmra.mxu0 %v3932
        %v4193 = vpop.f32.mrf.mxu0
        %v4194 = vadd.f32 %v4171, %v4193
        %4195 = vmatmul.f32.gmra.mxu0 %v3931
        %v4196 = vpop.f32.mrf.mxu0
        %v4197 = vadd.f32 %v4174, %v4196
        %4198 = vdwg.mxu0
        %4199 = vmatpush.msra.mxu0 0.0
        %4200 = vmatpush.msra.mxu0 0.0
        %4201 = vmatpush.msra.mxu0 0.0
        %4202 = vmatpush.msra.mxu0 0.0
        %4203 = vmatpush.msra.mxu0 0.0
        %4204 = vmatpush.msra.mxu0 0.0
        %4205 = vmatpush.msra.mxu0 0.0
        %4206 = vmatpush.msra.mxu0 0.0
        %4207 = vmatpush.msra.mxu0 0.0
        %4208 = vmatpush.msra.mxu0 0.0
        %4209 = vmatpush.msra.mxu0 0.0
        %4210 = vmatpush.msra.mxu0 0.0
        %4211 = vmatpush.msra.mxu0 %v3914
        %4212 = vmatpush.msra.mxu0 %v3911
        %4213 = vmatpush.msra.mxu0 %v3908
        %4214 = vmatpush.msra.mxu0 %v3905
        %4215 = vmatmul.f32.gmra.mxu0 %v3942
        %v4216 = vpop.f32.mrf.mxu0
        %v4217 = vadd.f32 %v4194, %v4216
        %4218 = vmatmul.f32.gmra.mxu0 %v3944
        %v4219 = vpop.f32.mrf.mxu0
        %v4220 = vadd.f32 %v4197, %v4219
        %4221 = vdwg.mxu0
        %v4222 = vadd.f32 %v2852, %v4033
        %v4223 = vadd.f32 %v2944, %v4125
        %v4224 = vadd.f32 %v3036, %v4217
        %v4225 = vadd.f32 %v2855, %v4036
        %v4226 = vadd.f32 %v2947, %v4128
        %v4227 = vadd.f32 %v3039, %v4220
        %s4228 = scalar_lea.vmem [#allocation15], 2496
        %v4229 = vld [vmem:[%s4228] sm:$0xff]
        %v4230 = vld [vmem:[%s4228 + $0x8] sm:$0xff]
        %v4231 = vld [vmem:[%s4228 + $0x10] sm:$0xff]
        %v4232 = vld [vmem:[%s4228 + $0x18] sm:$0xff]
        %v4233 = vld [vmem:[%s4228 + $0x20] sm:$0xff]
        %v4234 = vld [vmem:[%s4228 + $0x28] sm:$0xff]
        %v4235 = vld [vmem:[%s4228 + $0x30] sm:$0xff]
        %v4236 = vld [vmem:[%s4228 + $0x38] sm:$0xff]
        %v4237 = vld [vmem:[%s4228 + $0x40] sm:$0xff]
        %v4238 = vld [vmem:[%s4228 + $0x48] sm:$0xff]
        %v4239 = vld [vmem:[%s4228 + $0x50] sm:$0xff]
        %v4240 = vld [vmem:[%s4228 + $0x58] sm:$0xff]
        %v4241 = vld [vmem:[%s4228 + $0x60] sm:$0xff]
        %v4242 = vld [vmem:[%s4228 + $0x68] sm:$0xff]
        %v4243 = vld [vmem:[%s4228 + $0x70] sm:$0xff]
        %v4244 = vld [vmem:[%s4228 + $0x78] sm:$0xff]
        %v4245 = vld [vmem:[%s4228 + $0x80] sm:$0xff]
        %v4246 = vld [vmem:[%s4228 + $0x88] sm:$0xff]
        %v4247 = vld [vmem:[%s4228 + $0x90] sm:$0xff]
        %v4248 = vld [vmem:[%s4228 + $0x98] sm:$0xff]
        %v4249 = vld [vmem:[%s4228 + $0xa0] sm:$0xff]
        %v4250 = vld [vmem:[%s4228 + $0xa8] sm:$0xff]
        %v4251 = vld [vmem:[%s4228 + $0xb0] sm:$0xff]
        %v4252 = vld [vmem:[%s4228 + $0xb8] sm:$0xff]
        %v4253 = vld [vmem:[%s4228 + $0xc0] sm:$0xff]
        %v4254 = vld [vmem:[%s4228 + $0xc8] sm:$0xff]
        %v4255 = vld [vmem:[%s4228 + $0xd0] sm:$0xff]
        %v4256 = vld [vmem:[%s4228 + $0xd8] sm:$0xff]
        %v4257 = vld [vmem:[%s4228 + $0xe0] sm:$0xff]
        %v4258 = vld [vmem:[%s4228 + $0xe8] sm:$0xff]
        %v4259 = vld [vmem:[%s4228 + $0xf0] sm:$0xff]
        %v4260 = vld [vmem:[%s4228 + $0xf8] sm:$0xff]
        %v4261 = vld [vmem:[%s4228 + $0x100] sm:$0xff]
        %v4262 = vld [vmem:[%s4228 + $0x108] sm:$0xff]
        %v4263 = vld [vmem:[%s4228 + $0x110] sm:$0xff]
        %v4264 = vld [vmem:[%s4228 + $0x118] sm:$0xff]
        %v4265 = vld [vmem:[%s4228 + $0x120] sm:$0xff]
        %v4266 = vld [vmem:[%s4228 + $0x128] sm:$0xff]
        %v4267 = vld [vmem:[%s4228 + $0x130] sm:$0xff]
        %v4268 = vld [vmem:[%s4228 + $0x138] sm:$0xff]
        %v4269 = vld [vmem:[%s4228 + $0x140] sm:$0xff]
        %v4270 = vld [vmem:[%s4228 + $0x148] sm:$0xff]
        %v4271 = vld [vmem:[%s4228 + $0x150] sm:$0xff]
        %v4272 = vld [vmem:[%s4228 + $0x158] sm:$0xff]
        %v4273 = vld [vmem:[%s4228 + $0x160] sm:$0xff]
        %v4274 = vld [vmem:[%s4228 + $0x168] sm:$0xff]
        %v4275 = vld [vmem:[%s4228 + $0x170] sm:$0xff]
        %v4276 = vld [vmem:[%s4228 + $0x178] sm:$0xff]
        %v4277 = vld [vmem:[%s4228 + $0x180] sm:$0xff]
        %v4278 = vld [vmem:[%s4228 + $0x188] sm:$0xff]
        %v4279 = vld [vmem:[%s4228 + $0x190] sm:$0xff]
        %v4280 = vld [vmem:[%s4228 + $0x198] sm:$0xff]
        %v4281 = vld [vmem:[%s4228 + $0x1a0] sm:$0xff]
        %v4282 = vld [vmem:[%s4228 + $0x1a8] sm:$0xff]
        %v4283 = vld [vmem:[%s4228 + $0x1b0] sm:$0xff]
        %v4284 = vld [vmem:[%s4228 + $0x1b8] sm:$0xff]
        %v4285 = vld [vmem:[%s4228 + $0x1c0] sm:$0xff]
        %v4286 = vld [vmem:[%s4228 + $0x1c8] sm:$0xff]
        %v4287 = vld [vmem:[%s4228 + $0x1d0] sm:$0xff]
        %v4288 = vld [vmem:[%s4228 + $0x1d8] sm:$0xff]
        %v4289 = vld [vmem:[%s4228 + $0x1e0] sm:$0xff]
        %v4290 = vld [vmem:[%s4228 + $0x1e8] sm:$0xff]
        %v4291 = vld [vmem:[%s4228 + $0x1f0] sm:$0xff]
        %v4292 = vld [vmem:[%s4228 + $0x1f8] sm:$0xff]
        %v4293 = vld [vmem:[%s4228 + $0x200] sm:$0xff]
        %v4294 = vld [vmem:[%s4228 + $0x208] sm:$0xff]
        %v4295 = vld [vmem:[%s4228 + $0x210] sm:$0xff]
        %v4296 = vld [vmem:[%s4228 + $0x218] sm:$0xff]
        %v4297 = vld [vmem:[%s4228 + $0x220] sm:$0xff]
        %v4298 = vld [vmem:[%s4228 + $0x228] sm:$0xff]
        %v4299 = vld [vmem:[%s4228 + $0x230] sm:$0xff]
        %v4300 = vld [vmem:[%s4228 + $0x238] sm:$0xff]
        %v4301 = vld [vmem:[%s4228 + $0x240] sm:$0xff]
        %v4302 = vld [vmem:[%s4228 + $0x248] sm:$0xff]
        %v4303 = vld [vmem:[%s4228 + $0x250] sm:$0xff]
        %v4304 = vld [vmem:[%s4228 + $0x258] sm:$0xff]
        %v4305 = vld [vmem:[%s4228 + $0x260] sm:$0xff]
        %v4306 = vld [vmem:[%s4228 + $0x268] sm:$0xff]
        %v4307 = vld [vmem:[%s4228 + $0x270] sm:$0xff]
        %v4308 = vld [vmem:[%s4228 + $0x278] sm:$0xff]
        %v4309 = vld [vmem:[%s4228 + $0x280] sm:$0xff]
        %v4310 = vld [vmem:[%s4228 + $0x288] sm:$0xff]
        %v4311 = vld [vmem:[%s4228 + $0x290] sm:$0xff]
        %v4312 = vld [vmem:[%s4228 + $0x298] sm:$0xff]
        %v4313 = vld [vmem:[%s4228 + $0x2a0] sm:$0xff]
        %v4314 = vld [vmem:[%s4228 + $0x2a8] sm:$0xff]
        %v4315 = vld [vmem:[%s4228 + $0x2b0] sm:$0xff]
        %v4316 = vld [vmem:[%s4228 + $0x2b8] sm:$0xff]
        %v4317 = vld [vmem:[%s4228 + $0x2c0] sm:$0xff]
        %v4318 = vld [vmem:[%s4228 + $0x2c8] sm:$0xff]
        %v4319 = vld [vmem:[%s4228 + $0x2d0] sm:$0xff]
        %v4320 = vld [vmem:[%s4228 + $0x2d8] sm:$0xff]
        %v4321 = vld [vmem:[%s4228 + $0x2e0] sm:$0xff]
        %v4322 = vld [vmem:[%s4228 + $0x2e8] sm:$0xff]
        %v4323 = vld [vmem:[%s4228 + $0x2f0] sm:$0xff]
        %v4324 = vld [vmem:[%s4228 + $0x2f8] sm:$0xff]
        %v4325 = vld [vmem:[%s4228 + $0x300] sm:$0xff]
        %v4326 = vld [vmem:[%s4228 + $0x308] sm:$0xff]
        %v4327 = vld [vmem:[%s4228 + $0x310] sm:$0xff]
        %v4328 = vld [vmem:[%s4228 + $0x318] sm:$0xff]
        %v4329 = vld [vmem:[%s4228 + $0x320] sm:$0xff]
        %v4330 = vld [vmem:[%s4228 + $0x328] sm:$0xff]
        %v4331 = vld [vmem:[%s4228 + $0x330] sm:$0xff]
        %v4332 = vld [vmem:[%s4228 + $0x338] sm:$0xff]
        %v4333 = vld [vmem:[%s4228 + $0x340] sm:$0xff]
        %v4334 = vld [vmem:[%s4228 + $0x348] sm:$0xff]
        %v4335 = vld [vmem:[%s4228 + $0x350] sm:$0xff]
        %v4336 = vld [vmem:[%s4228 + $0x358] sm:$0xff]
        %v4337 = vld [vmem:[%s4228 + $0x360] sm:$0xff]
        %v4338 = vld [vmem:[%s4228 + $0x368] sm:$0xff]
        %v4339 = vld [vmem:[%s4228 + $0x370] sm:$0xff]
        %v4340 = vld [vmem:[%s4228 + $0x378] sm:$0xff]
        %v4341 = vld [vmem:[%s4228 + $0x380] sm:$0xff]
        %v4342 = vld [vmem:[%s4228 + $0x388] sm:$0xff]
        %v4343 = vld [vmem:[%s4228 + $0x390] sm:$0xff]
        %v4344 = vld [vmem:[%s4228 + $0x398] sm:$0xff]
        %v4345 = vld [vmem:[%s4228 + $0x3a0] sm:$0xff]
        %v4346 = vld [vmem:[%s4228 + $0x3a8] sm:$0xff]
        %v4347 = vld [vmem:[%s4228 + $0x3b0] sm:$0xff]
        %v4348 = vld [vmem:[%s4228 + $0x3b8] sm:$0xff]
        %v4349 = vld [vmem:[%s4228 + $0x3c0] sm:$0xff]
        %v4350 = vld [vmem:[%s4228 + $0x3c8] sm:$0xff]
        %v4351 = vld [vmem:[%s4228 + $0x3d0] sm:$0xff]
        %v4352 = vld [vmem:[%s4228 + $0x3d8] sm:$0xff]
        %v4353 = vld [vmem:[%s4228 + $0x3e0] sm:$0xff]
        %v4354 = vld [vmem:[%s4228 + $0x3e8] sm:$0xff]
        %v4355 = vld [vmem:[%s4228 + $0x3f0] sm:$0xff]
        %v4356 = vld [vmem:[%s4228 + $0x3f8] sm:$0xff]
        %v4357 = vld [vmem:[%s4228 + $0x400] sm:$0xff]
        %v4358 = vld [vmem:[%s4228 + $0x408] sm:$0xff]
        %v4359 = vld [vmem:[%s4228 + $0x410] sm:$0xff]
        %v4360 = vld [vmem:[%s4228 + $0x418] sm:$0xff]
        %v4361 = vld [vmem:[%s4228 + $0x420] sm:$0xff]
        %v4362 = vld [vmem:[%s4228 + $0x428] sm:$0xff]
        %v4363 = vld [vmem:[%s4228 + $0x430] sm:$0xff]
        %v4364 = vld [vmem:[%s4228 + $0x438] sm:$0xff]
        %v4365 = vld [vmem:[%s4228 + $0x440] sm:$0xff]
        %v4366 = vld [vmem:[%s4228 + $0x448] sm:$0xff]
        %v4367 = vld [vmem:[%s4228 + $0x450] sm:$0xff]
        %v4368 = vld [vmem:[%s4228 + $0x458] sm:$0xff]
        %v4369 = vld [vmem:[%s4228 + $0x460] sm:$0xff]
        %v4370 = vld [vmem:[%s4228 + $0x468] sm:$0xff]
        %v4371 = vld [vmem:[%s4228 + $0x470] sm:$0xff]
        %v4372 = vld [vmem:[%s4228 + $0x478] sm:$0xff]
        %v4373 = vld [vmem:[%s4228 + $0x480] sm:$0xff]
        %v4374 = vld [vmem:[%s4228 + $0x488] sm:$0xff]
        %v4375 = vld [vmem:[%s4228 + $0x490] sm:$0xff]
        %v4376 = vld [vmem:[%s4228 + $0x498] sm:$0xff]
        %v4377 = vld [vmem:[%s4228 + $0x4a0] sm:$0xff]
        %v4378 = vld [vmem:[%s4228 + $0x4a8] sm:$0xff]
        %v4379 = vld [vmem:[%s4228 + $0x4b0] sm:$0xff]
        %v4380 = vld [vmem:[%s4228 + $0x4b8] sm:$0xff]
        %v4381 = vld [vmem:[%s4228 + $0x4c0] sm:$0xff]
        %v4382 = vld [vmem:[%s4228 + $0x4c8] sm:$0xff]
        %v4383 = vld [vmem:[%s4228 + $0x4d0] sm:$0xff]
        %v4384 = vld [vmem:[%s4228 + $0x4d8] sm:$0xff]
        %4385 = vmatpush.msra.mxu0 %v4274
        %4386 = vmatpush.msra.mxu0 %v4271
        %4387 = vmatpush.msra.mxu0 %v4268
        %4388 = vmatpush.msra.mxu0 %v4265
        %4389 = vmatpush.msra.mxu0 %v4262
        %4390 = vmatpush.msra.mxu0 %v4259
        %4391 = vmatpush.msra.mxu0 %v4256
        %4392 = vmatpush.msra.mxu0 %v4253
        %4393 = vmatpush.msra.mxu0 %v4250
        %4394 = vmatpush.msra.mxu0 %v4247
        %4395 = vmatpush.msra.mxu0 %v4244
        %4396 = vmatpush.msra.mxu0 %v4241
        %4397 = vmatpush.msra.mxu0 %v4238
        %4398 = vmatpush.msra.mxu0 %v4235
        %4399 = vmatpush.msra.mxu0 %v4232
        %4400 = vmatpush.msra.mxu0 %v4229
        %4401 = vmatmul.f32.gmra.mxu0 %v3926
        %v4402 = vpop.f32.mrf.mxu0
        %v4403 = vadd.f32 0.0, %v4402
        %4404 = vmatmul.f32.gmra.mxu0 %v3925
        %v4405 = vpop.f32.mrf.mxu0
        %v4406 = vadd.f32 0.0, %v4405
        %4407 = vdwg.mxu0
        %4408 = vmatpush.msra.mxu0 %v4322
        %4409 = vmatpush.msra.mxu0 %v4319
        %4410 = vmatpush.msra.mxu0 %v4316
        %4411 = vmatpush.msra.mxu0 %v4313
        %4412 = vmatpush.msra.mxu0 %v4310
        %4413 = vmatpush.msra.mxu0 %v4307
        %4414 = vmatpush.msra.mxu0 %v4304
        %4415 = vmatpush.msra.mxu0 %v4301
        %4416 = vmatpush.msra.mxu0 %v4298
        %4417 = vmatpush.msra.mxu0 %v4295
        %4418 = vmatpush.msra.mxu0 %v4292
        %4419 = vmatpush.msra.mxu0 %v4289
        %4420 = vmatpush.msra.mxu0 %v4286
        %4421 = vmatpush.msra.mxu0 %v4283
        %4422 = vmatpush.msra.mxu0 %v4280
        %4423 = vmatpush.msra.mxu0 %v4277
        %4424 = vmatmul.f32.gmra.mxu0 %v3929
        %v4425 = vpop.f32.mrf.mxu0
        %v4426 = vadd.f32 %v4403, %v4425
        %4427 = vmatmul.f32.gmra.mxu0 %v3928
        %v4428 = vpop.f32.mrf.mxu0
        %v4429 = vadd.f32 %v4406, %v4428
        %4430 = vdwg.mxu0
        %4431 = vmatpush.msra.mxu0 %v4370
        %4432 = vmatpush.msra.mxu0 %v4367
        %4433 = vmatpush.msra.mxu0 %v4364
        %4434 = vmatpush.msra.mxu0 %v4361
        %4435 = vmatpush.msra.mxu0 %v4358
        %4436 = vmatpush.msra.mxu0 %v4355
        %4437 = vmatpush.msra.mxu0 %v4352
        %4438 = vmatpush.msra.mxu0 %v4349
        %4439 = vmatpush.msra.mxu0 %v4346
        %4440 = vmatpush.msra.mxu0 %v4343
        %4441 = vmatpush.msra.mxu0 %v4340
        %4442 = vmatpush.msra.mxu0 %v4337
        %4443 = vmatpush.msra.mxu0 %v4334
        %4444 = vmatpush.msra.mxu0 %v4331
        %4445 = vmatpush.msra.mxu0 %v4328
        %4446 = vmatpush.msra.mxu0 %v4325
        %4447 = vmatmul.f32.gmra.mxu0 %v3932
        %v4448 = vpop.f32.mrf.mxu0
        %v4449 = vadd.f32 %v4426, %v4448
        %4450 = vmatmul.f32.gmra.mxu0 %v3931
        %v4451 = vpop.f32.mrf.mxu0
        %v4452 = vadd.f32 %v4429, %v4451
        %4453 = vdwg.mxu0
        %4454 = vmatpush.msra.mxu0 0.0
        %4455 = vmatpush.msra.mxu0 0.0
        %4456 = vmatpush.msra.mxu0 0.0
        %4457 = vmatpush.msra.mxu0 0.0
        %4458 = vmatpush.msra.mxu0 0.0
        %4459 = vmatpush.msra.mxu0 0.0
        %4460 = vmatpush.msra.mxu0 0.0
        %4461 = vmatpush.msra.mxu0 0.0
        %4462 = vmatpush.msra.mxu0 0.0
        %4463 = vmatpush.msra.mxu0 0.0
        %4464 = vmatpush.msra.mxu0 0.0
        %4465 = vmatpush.msra.mxu0 0.0
        %4466 = vmatpush.msra.mxu0 %v4382
        %4467 = vmatpush.msra.mxu0 %v4379
        %4468 = vmatpush.msra.mxu0 %v4376
        %4469 = vmatpush.msra.mxu0 %v4373
        %4470 = vmatmul.f32.gmra.mxu0 %v3942
        %v4471 = vpop.f32.mrf.mxu0
        %v4472 = vadd.f32 %v4449, %v4471
        %4473 = vmatmul.f32.gmra.mxu0 %v3944
        %v4474 = vpop.f32.mrf.mxu0
        %v4475 = vadd.f32 %v4452, %v4474
        %4476 = vdwg.mxu0
        %4477 = vmatpush.msra.mxu0 %v4275
        %4478 = vmatpush.msra.mxu0 %v4272
        %4479 = vmatpush.msra.mxu0 %v4269
        %4480 = vmatpush.msra.mxu0 %v4266
        %4481 = vmatpush.msra.mxu0 %v4263
        %4482 = vmatpush.msra.mxu0 %v4260
        %4483 = vmatpush.msra.mxu0 %v4257
        %4484 = vmatpush.msra.mxu0 %v4254
        %4485 = vmatpush.msra.mxu0 %v4251
        %4486 = vmatpush.msra.mxu0 %v4248
        %4487 = vmatpush.msra.mxu0 %v4245
        %4488 = vmatpush.msra.mxu0 %v4242
        %4489 = vmatpush.msra.mxu0 %v4239
        %4490 = vmatpush.msra.mxu0 %v4236
        %4491 = vmatpush.msra.mxu0 %v4233
        %4492 = vmatpush.msra.mxu0 %v4230
        %4493 = vmatmul.f32.gmra.mxu0 %v3926
        %v4494 = vpop.f32.mrf.mxu0
        %v4495 = vadd.f32 0.0, %v4494
        %4496 = vmatmul.f32.gmra.mxu0 %v3925
        %v4497 = vpop.f32.mrf.mxu0
        %v4498 = vadd.f32 0.0, %v4497
        %4499 = vdwg.mxu0
        %4500 = vmatpush.msra.mxu0 %v4323
        %4501 = vmatpush.msra.mxu0 %v4320
        %4502 = vmatpush.msra.mxu0 %v4317
        %4503 = vmatpush.msra.mxu0 %v4314
        %4504 = vmatpush.msra.mxu0 %v4311
        %4505 = vmatpush.msra.mxu0 %v4308
        %4506 = vmatpush.msra.mxu0 %v4305
        %4507 = vmatpush.msra.mxu0 %v4302
        %4508 = vmatpush.msra.mxu0 %v4299
        %4509 = vmatpush.msra.mxu0 %v4296
        %4510 = vmatpush.msra.mxu0 %v4293
        %4511 = vmatpush.msra.mxu0 %v4290
        %4512 = vmatpush.msra.mxu0 %v4287
        %4513 = vmatpush.msra.mxu0 %v4284
        %4514 = vmatpush.msra.mxu0 %v4281
        %4515 = vmatpush.msra.mxu0 %v4278
        %4516 = vmatmul.f32.gmra.mxu0 %v3929
        %v4517 = vpop.f32.mrf.mxu0
        %v4518 = vadd.f32 %v4495, %v4517
        %4519 = vmatmul.f32.gmra.mxu0 %v3928
        %v4520 = vpop.f32.mrf.mxu0
        %v4521 = vadd.f32 %v4498, %v4520
        %4522 = vdwg.mxu0
        %4523 = vmatpush.msra.mxu0 %v4371
        %4524 = vmatpush.msra.mxu0 %v4368
        %4525 = vmatpush.msra.mxu0 %v4365
        %4526 = vmatpush.msra.mxu0 %v4362
        %4527 = vmatpush.msra.mxu0 %v4359
        %4528 = vmatpush.msra.mxu0 %v4356
        %4529 = vmatpush.msra.mxu0 %v4353
        %4530 = vmatpush.msra.mxu0 %v4350
        %4531 = vmatpush.msra.mxu0 %v4347
        %4532 = vmatpush.msra.mxu0 %v4344
        %4533 = vmatpush.msra.mxu0 %v4341
        %4534 = vmatpush.msra.mxu0 %v4338
        %4535 = vmatpush.msra.mxu0 %v4335
        %4536 = vmatpush.msra.mxu0 %v4332
        %4537 = vmatpush.msra.mxu0 %v4329
        %4538 = vmatpush.msra.mxu0 %v4326
        %4539 = vmatmul.f32.gmra.mxu0 %v3932
        %v4540 = vpop.f32.mrf.mxu0
        %v4541 = vadd.f32 %v4518, %v4540
        %4542 = vmatmul.f32.gmra.mxu0 %v3931
        %v4543 = vpop.f32.mrf.mxu0
        %v4544 = vadd.f32 %v4521, %v4543
        %4545 = vdwg.mxu0
        %4546 = vmatpush.msra.mxu0 0.0
        %4547 = vmatpush.msra.mxu0 0.0
        %4548 = vmatpush.msra.mxu0 0.0
        %4549 = vmatpush.msra.mxu0 0.0
        %4550 = vmatpush.msra.mxu0 0.0
        %4551 = vmatpush.msra.mxu0 0.0
        %4552 = vmatpush.msra.mxu0 0.0
        %4553 = vmatpush.msra.mxu0 0.0
        %4554 = vmatpush.msra.mxu0 0.0
        %4555 = vmatpush.msra.mxu0 0.0
        %4556 = vmatpush.msra.mxu0 0.0
        %4557 = vmatpush.msra.mxu0 0.0
        %4558 = vmatpush.msra.mxu0 %v4383
        %4559 = vmatpush.msra.mxu0 %v4380
        %4560 = vmatpush.msra.mxu0 %v4377
        %4561 = vmatpush.msra.mxu0 %v4374
        %4562 = vmatmul.f32.gmra.mxu0 %v3942
        %v4563 = vpop.f32.mrf.mxu0
        %v4564 = vadd.f32 %v4541, %v4563
        %4565 = vmatmul.f32.gmra.mxu0 %v3944
        %v4566 = vpop.f32.mrf.mxu0
        %v4567 = vadd.f32 %v4544, %v4566
        %4568 = vdwg.mxu0
        %4569 = vmatpush.msra.mxu0 %v4276
        %4570 = vmatpush.msra.mxu0 %v4273
        %4571 = vmatpush.msra.mxu0 %v4270
        %4572 = vmatpush.msra.mxu0 %v4267
        %4573 = vmatpush.msra.mxu0 %v4264
        %4574 = vmatpush.msra.mxu0 %v4261
        %4575 = vmatpush.msra.mxu0 %v4258
        %4576 = vmatpush.msra.mxu0 %v4255
        %4577 = vmatpush.msra.mxu0 %v4252
        %4578 = vmatpush.msra.mxu0 %v4249
        %4579 = vmatpush.msra.mxu0 %v4246
        %4580 = vmatpush.msra.mxu0 %v4243
        %4581 = vmatpush.msra.mxu0 %v4240
        %4582 = vmatpush.msra.mxu0 %v4237
        %4583 = vmatpush.msra.mxu0 %v4234
        %4584 = vmatpush.msra.mxu0 %v4231
        %4585 = vmatmul.f32.gmra.mxu0 %v3926
        %v4586 = vpop.f32.mrf.mxu0
        %v4587 = vadd.f32 0.0, %v4586
        %4588 = vmatmul.f32.gmra.mxu0 %v3925
        %v4589 = vpop.f32.mrf.mxu0
        %v4590 = vadd.f32 0.0, %v4589
        %4591 = vdwg.mxu0
        %4592 = vmatpush.msra.mxu0 %v4324
        %4593 = vmatpush.msra.mxu0 %v4321
        %4594 = vmatpush.msra.mxu0 %v4318
        %4595 = vmatpush.msra.mxu0 %v4315
        %4596 = vmatpush.msra.mxu0 %v4312
        %4597 = vmatpush.msra.mxu0 %v4309
        %4598 = vmatpush.msra.mxu0 %v4306
        %4599 = vmatpush.msra.mxu0 %v4303
        %4600 = vmatpush.msra.mxu0 %v4300
        %4601 = vmatpush.msra.mxu0 %v4297
        %4602 = vmatpush.msra.mxu0 %v4294
        %4603 = vmatpush.msra.mxu0 %v4291
        %4604 = vmatpush.msra.mxu0 %v4288
        %4605 = vmatpush.msra.mxu0 %v4285
        %4606 = vmatpush.msra.mxu0 %v4282
        %4607 = vmatpush.msra.mxu0 %v4279
        %4608 = vmatmul.f32.gmra.mxu0 %v3929
        %v4609 = vpop.f32.mrf.mxu0
        %v4610 = vadd.f32 %v4587, %v4609
        %4611 = vmatmul.f32.gmra.mxu0 %v3928
        %v4612 = vpop.f32.mrf.mxu0
        %v4613 = vadd.f32 %v4590, %v4612
        %4614 = vdwg.mxu0
        %4615 = vmatpush.msra.mxu0 %v4372
        %4616 = vmatpush.msra.mxu0 %v4369
        %4617 = vmatpush.msra.mxu0 %v4366
        %4618 = vmatpush.msra.mxu0 %v4363
        %4619 = vmatpush.msra.mxu0 %v4360
        %4620 = vmatpush.msra.mxu0 %v4357
        %4621 = vmatpush.msra.mxu0 %v4354
        %4622 = vmatpush.msra.mxu0 %v4351
        %4623 = vmatpush.msra.mxu0 %v4348
        %4624 = vmatpush.msra.mxu0 %v4345
        %4625 = vmatpush.msra.mxu0 %v4342
        %4626 = vmatpush.msra.mxu0 %v4339
        %4627 = vmatpush.msra.mxu0 %v4336
        %4628 = vmatpush.msra.mxu0 %v4333
        %4629 = vmatpush.msra.mxu0 %v4330
        %4630 = vmatpush.msra.mxu0 %v4327
        %4631 = vmatmul.f32.gmra.mxu0 %v3932
        %v4632 = vpop.f32.mrf.mxu0
        %v4633 = vadd.f32 %v4610, %v4632
        %4634 = vmatmul.f32.gmra.mxu0 %v3931
        %v4635 = vpop.f32.mrf.mxu0
        %v4636 = vadd.f32 %v4613, %v4635
        %4637 = vdwg.mxu0
        %4638 = vmatpush.msra.mxu0 0.0
        %4639 = vmatpush.msra.mxu0 0.0
        %4640 = vmatpush.msra.mxu0 0.0
        %4641 = vmatpush.msra.mxu0 0.0
        %4642 = vmatpush.msra.mxu0 0.0
        %4643 = vmatpush.msra.mxu0 0.0
        %4644 = vmatpush.msra.mxu0 0.0
        %4645 = vmatpush.msra.mxu0 0.0
        %4646 = vmatpush.msra.mxu0 0.0
        %4647 = vmatpush.msra.mxu0 0.0
        %4648 = vmatpush.msra.mxu0 0.0
        %4649 = vmatpush.msra.mxu0 0.0
        %4650 = vmatpush.msra.mxu0 %v4384
        %4651 = vmatpush.msra.mxu0 %v4381
        %4652 = vmatpush.msra.mxu0 %v4378
        %4653 = vmatpush.msra.mxu0 %v4375
        %4654 = vmatmul.f32.gmra.mxu0 %v3942
        %v4655 = vpop.f32.mrf.mxu0
        %v4656 = vadd.f32 %v4633, %v4655
        %4657 = vmatmul.f32.gmra.mxu0 %v3944
        %v4658 = vpop.f32.mrf.mxu0
        %v4659 = vadd.f32 %v4636, %v4658
        %4660 = vdwg.mxu0
        %v4661 = vadd.f32 %v3561, %v4472
        %v4662 = vadd.f32 %v3653, %v4564
        %v4663 = vadd.f32 %v3745, %v4656
        %v4664 = vadd.f32 %v3564, %v4475
        %v4665 = vadd.f32 %v3656, %v4567
        %v4666 = vadd.f32 %v3748, %v4659
        %v4667 = vld [vmem:[#allocation16] sm:$0x7]
        %v4669 = vperm.slane %v4667, 0
        %v4670 = vperm.slane %v4667, 1
        %v4671 = vperm.slane %v4667, 2
        %v4675 = vadd.f32 %v4222, %v4669
        %v4676 = vadd.f32 %v4223, %v4670
        %v4677 = vadd.f32 %v4224, %v4671
        %v4678 = vadd.f32 %v4225, %v4669
        %v4679 = vadd.f32 %v4226, %v4670
        %v4680 = vadd.f32 %v4227, %v4671
        %v4681 = vmax.f32 %v4675, 0.0
        %v4682 = vmax.f32 %v4676, 0.0
        %v4683 = vmax.f32 %v4677, 0.0
        %v4684 = vmax.f32 %v4678, 0.0
        %v4685 = vmax.f32 %v4679, 0.0
        %v4686 = vmax.f32 %v4680, 0.0
        %v4687 = vadd.f32 %v4661, %v4669
        %v4688 = vadd.f32 %v4662, %v4670
        %v4689 = vadd.f32 %v4663, %v4671
        %v4690 = vadd.f32 %v4664, %v4669
        %v4691 = vadd.f32 %v4665, %v4670
        %v4692 = vadd.f32 %v4666, %v4671
        %v4693 = vmax.f32 %v4687, 0.0
        %v4694 = vmax.f32 %v4688, 0.0
        %v4695 = vmax.f32 %v4689, 0.0
        %v4696 = vmax.f32 %v4690, 0.0
        %v4697 = vmax.f32 %v4691, 0.0
        %v4698 = vmax.f32 %v4692, 0.0
        %v4699 = vmax.f32 %v4681, %v4693
        %v4700 = vmax.f32 %v4682, %v4694
        %v4701 = vmax.f32 %v4683, %v4695
        %v4702 = vmax.f32 %v4684, %v4696
        %v4703 = vmax.f32 %v4685, %v4697
        %v4704 = vmax.f32 %v4686, %v4698
        %v4705 = vld [vmem:[#allocation18] sm:$0x1f]
        %vm4706 = vcmask 89088
        %v4708 = vsel %vm4706, %v4705, 0
        %vm4710 = vcmask 1042432
        %v4712 = vsel %vm4710, %v4702, 0
        %v4715 = vsel %vm4710, %v4703, 0
        %v4718 = vsel %vm4710, %v4704, 0
        %4720 = vmatpush.msra.mxu0 0.0
        %4721 = vmatpush.msra.mxu0 0.0
        %4722 = vmatpush.msra.mxu0 0.0
        %4723 = vmatpush.msra.mxu0 0.0
        %4724 = vmatpush.msra.mxu0 0.0
        %4725 = vmatpush.msra.mxu0 0.0
        %4726 = vmatpush.msra.mxu0 0.0
        %4727 = vmatpush.msra.mxu0 0.0
        %4728 = vmatpush.msra.mxu0 0.0
        %4729 = vmatpush.msra.mxu0 0.0
        %4730 = vmatpush.msra.mxu0 0.0
        %4731 = vmatpush.msra.mxu0 0.0
        %4732 = vmatpush.msra.mxu0 0.0
        %4733 = vmatpush.msra.mxu0 0.0
        %4734 = vmatpush.msra.mxu0 %v4712
        %4735 = vmatpush.msra.mxu0 %v4699
        %4736 = vmatmul.f32.gmra.mxu0 %v4708
        %v4737 = vpop.f32.mrf.mxu0
        %v4738 = vadd.f32 0.0, %v4737
        %4739 = vdwg.mxu0
        %4740 = vmatpush.msra.mxu0 0.0
        %4741 = vmatpush.msra.mxu0 0.0
        %4742 = vmatpush.msra.mxu0 0.0
        %4743 = vmatpush.msra.mxu0 0.0
        %4744 = vmatpush.msra.mxu0 0.0
        %4745 = vmatpush.msra.mxu0 0.0
        %4746 = vmatpush.msra.mxu0 0.0
        %4747 = vmatpush.msra.mxu0 0.0
        %4748 = vmatpush.msra.mxu0 0.0
        %4749 = vmatpush.msra.mxu0 0.0
        %4750 = vmatpush.msra.mxu0 0.0
        %4751 = vmatpush.msra.mxu0 0.0
        %4752 = vmatpush.msra.mxu0 0.0
        %4753 = vmatpush.msra.mxu0 0.0
        %4754 = vmatpush.msra.mxu0 %v4715
        %4755 = vmatpush.msra.mxu0 %v4700
        %4756 = vmatmul.f32.gmra.mxu0 %v4708
        %v4757 = vpop.f32.mrf.mxu0
        %v4758 = vadd.f32 0.0, %v4757
        %4759 = vdwg.mxu0
        %4760 = vmatpush.msra.mxu0 0.0
        %4761 = vmatpush.msra.mxu0 0.0
        %4762 = vmatpush.msra.mxu0 0.0
        %4763 = vmatpush.msra.mxu0 0.0
        %4764 = vmatpush.msra.mxu0 0.0
        %4765 = vmatpush.msra.mxu0 0.0
        %4766 = vmatpush.msra.mxu0 0.0
        %4767 = vmatpush.msra.mxu0 0.0
        %4768 = vmatpush.msra.mxu0 0.0
        %4769 = vmatpush.msra.mxu0 0.0
        %4770 = vmatpush.msra.mxu0 0.0
        %4771 = vmatpush.msra.mxu0 0.0
        %4772 = vmatpush.msra.mxu0 0.0
        %4773 = vmatpush.msra.mxu0 0.0
        %4774 = vmatpush.msra.mxu0 %v4718
        %4775 = vmatpush.msra.mxu0 %v4701
        %4776 = vmatmul.f32.gmra.mxu0 %v4708
        %v4777 = vpop.f32.mrf.mxu0
        %v4778 = vadd.f32 0.0, %v4777
        %4779 = vdwg.mxu0
        %v4780 = vld [vmem:[#allocation19] sm:$0x1f]
        %v4782 = vsel %vm4706, %v4780, 0
        %4784 = vmatpush.msra.mxu0 0.0
        %4785 = vmatpush.msra.mxu0 0.0
        %4786 = vmatpush.msra.mxu0 0.0
        %4787 = vmatpush.msra.mxu0 0.0
        %4788 = vmatpush.msra.mxu0 0.0
        %4789 = vmatpush.msra.mxu0 0.0
        %4790 = vmatpush.msra.mxu0 0.0
        %4791 = vmatpush.msra.mxu0 0.0
        %4792 = vmatpush.msra.mxu0 0.0
        %4793 = vmatpush.msra.mxu0 0.0
        %4794 = vmatpush.msra.mxu0 0.0
        %4795 = vmatpush.msra.mxu0 0.0
        %4796 = vmatpush.msra.mxu0 0.0
        %4797 = vmatpush.msra.mxu0 0.0
        %4798 = vmatpush.msra.mxu0 %v4712
        %4799 = vmatpush.msra.mxu0 %v4699
        %4800 = vmatmul.f32.gmra.mxu0 %v4782
        %v4801 = vpop.f32.mrf.mxu0
        %v4802 = vadd.f32 0.0, %v4801
        %4803 = vdwg.mxu0
        %4804 = vmatpush.msra.mxu0 0.0
        %4805 = vmatpush.msra.mxu0 0.0
        %4806 = vmatpush.msra.mxu0 0.0
        %4807 = vmatpush.msra.mxu0 0.0
        %4808 = vmatpush.msra.mxu0 0.0
        %4809 = vmatpush.msra.mxu0 0.0
        %4810 = vmatpush.msra.mxu0 0.0
        %4811 = vmatpush.msra.mxu0 0.0
        %4812 = vmatpush.msra.mxu0 0.0
        %4813 = vmatpush.msra.mxu0 0.0
        %4814 = vmatpush.msra.mxu0 0.0
        %4815 = vmatpush.msra.mxu0 0.0
        %4816 = vmatpush.msra.mxu0 0.0
        %4817 = vmatpush.msra.mxu0 0.0
        %4818 = vmatpush.msra.mxu0 %v4715
        %4819 = vmatpush.msra.mxu0 %v4700
        %4820 = vmatmul.f32.gmra.mxu0 %v4782
        %v4821 = vpop.f32.mrf.mxu0
        %v4822 = vadd.f32 0.0, %v4821
        %4823 = vdwg.mxu0
        %4824 = vmatpush.msra.mxu0 0.0
        %4825 = vmatpush.msra.mxu0 0.0
        %4826 = vmatpush.msra.mxu0 0.0
        %4827 = vmatpush.msra.mxu0 0.0
        %4828 = vmatpush.msra.mxu0 0.0
        %4829 = vmatpush.msra.mxu0 0.0
        %4830 = vmatpush.msra.mxu0 0.0
        %4831 = vmatpush.msra.mxu0 0.0
        %4832 = vmatpush.msra.mxu0 0.0
        %4833 = vmatpush.msra.mxu0 0.0
        %4834 = vmatpush.msra.mxu0 0.0
        %4835 = vmatpush.msra.mxu0 0.0
        %4836 = vmatpush.msra.mxu0 0.0
        %4837 = vmatpush.msra.mxu0 0.0
        %4838 = vmatpush.msra.mxu0 %v4718
        %4839 = vmatpush.msra.mxu0 %v4701
        %4840 = vmatmul.f32.gmra.mxu0 %v4782
        %v4841 = vpop.f32.mrf.mxu0
        %v4842 = vadd.f32 0.0, %v4841
        %4843 = vdwg.mxu0
        %v4844 = vmax.f32 %v4738, %v4802
        %v4845 = vmax.f32 %v4758, %v4822
        %v4846 = vmax.f32 %v4778, %v4842
        %4847 = vst [vmem:[#allocation3] sm:$0x1f] %v4844
        %4848 = vst [vmem:[#allocation3 + $0x8] sm:$0x1f] %v4845
        %vm4849 = vcmask 520192
        %4850 = vst.msk [vmem:[#allocation3 + $0x10] sm:$0x1f] %vm4849, %v4846
        %v4851 = vld [vmem:[#allocation22] sm:$0x1]
        %v4852 = vld [vmem:[#allocation3] ss:$8 sm:$0x7]
        %v4853 = vld [vmem:[#allocation21] sm:$0xff]
        %v4854 = vld [vmem:[#allocation21 + $0x8] sm:$0xff]
        %v4855 = vld [vmem:[#allocation21 + $0x10] sm:$0xff]
        %v4856 = vld [vmem:[#allocation21 + $0x18] sm:$0xff]
        %v4857 = vld [vmem:[#allocation21 + $0x20] sm:$0xff]
        %v4858 = vld [vmem:[#allocation21 + $0x28] sm:$0xff]
        %v4859 = vld [vmem:[#allocation21 + $0x30] sm:$0xff]
        %v4860 = vld [vmem:[#allocation21 + $0x38] sm:$0xff]
        %v4861 = vld [vmem:[#allocation21 + $0x40] sm:$0xff]
        %v4862 = vld [vmem:[#allocation21 + $0x48] sm:$0xff]
        %v4863 = vld [vmem:[#allocation21 + $0x50] sm:$0xff]
        %v4864 = vld [vmem:[#allocation21 + $0x58] sm:$0xff]
        %v4865 = vld [vmem:[#allocation21 + $0x60] sm:$0xff]
        %v4866 = vld [vmem:[#allocation21 + $0x68] sm:$0xff]
        %v4867 = vld [vmem:[#allocation21 + $0x70] sm:$0xff]
        %v4868 = vld [vmem:[#allocation21 + $0x78] sm:$0xff]
        %v4869 = vld [vmem:[#allocation21 + $0x80] sm:$0xff]
        %v4870 = vld [vmem:[#allocation21 + $0x88] sm:$0xff]
        %v4871 = vld [vmem:[#allocation21 + $0x90] sm:$0xff]
        %v4872 = vld [vmem:[#allocation21 + $0x98] sm:$0xff]
        %v4873 = vld [vmem:[#allocation21 + $0xa0] sm:$0xff]
        %v4874 = vld [vmem:[#allocation21 + $0xa8] sm:$0xff]
        %v4875 = vld [vmem:[#allocation21 + $0xb0] sm:$0xff]
        %v4876 = vld [vmem:[#allocation21 + $0xb8] sm:$0xff]
        %v4877 = vld [vmem:[#allocation21 + $0xc0] sm:$0xff]
        %v4878 = vld [vmem:[#allocation21 + $0xc8] sm:$0xff]
        %v4879 = vld [vmem:[#allocation21 + $0xd0] sm:$0xff]
        %v4880 = vld [vmem:[#allocation21 + $0xd8] sm:$0xff]
        %v4881 = vld [vmem:[#allocation21 + $0xe0] sm:$0xff]
        %v4882 = vld [vmem:[#allocation21 + $0xe8] sm:$0xff]
        %v4883 = vld [vmem:[#allocation21 + $0xf0] sm:$0xff]
        %v4884 = vld [vmem:[#allocation21 + $0xf8] sm:$0xff]
        %v4885 = vld [vmem:[#allocation21 + $0x100] sm:$0xff]
        %v4886 = vld [vmem:[#allocation21 + $0x108] sm:$0xff]
        %v4887 = vld [vmem:[#allocation21 + $0x110] sm:$0xff]
        %v4888 = vld [vmem:[#allocation21 + $0x118] sm:$0xff]
        %v4889 = vld [vmem:[#allocation21 + $0x120] sm:$0xff]
        %v4890 = vld [vmem:[#allocation21 + $0x128] sm:$0xff]
        %v4891 = vld [vmem:[#allocation21 + $0x130] sm:$0xff]
        %v4892 = vld [vmem:[#allocation21 + $0x138] sm:$0xff]
        %v4894 = vperm.slane %v4852, 0
        %v4895 = vperm.slane %v4852, 1
        %v4896 = vperm.slane %v4852, 2
        %vm4899 = vcmask 523264
        %v4900 = vsel %vm4899, %v4896, 0
        %4902 = vmatpush.msra.mxu0 %v4868
        %4903 = vmatpush.msra.mxu0 %v4867
        %4904 = vmatpush.msra.mxu0 %v4866
        %4905 = vmatpush.msra.mxu0 %v4865
        %4906 = vmatpush.msra.mxu0 %v4864
        %4907 = vmatpush.msra.mxu0 %v4863
        %4908 = vmatpush.msra.mxu0 %v4862
        %4909 = vmatpush.msra.mxu0 %v4861
        %4910 = vmatpush.msra.mxu0 %v4860
        %4911 = vmatpush.msra.mxu0 %v4859
        %4912 = vmatpush.msra.mxu0 %v4858
        %4913 = vmatpush.msra.mxu0 %v4857
        %4914 = vmatpush.msra.mxu0 %v4856
        %4915 = vmatpush.msra.mxu0 %v4855
        %4916 = vmatpush.msra.mxu0 %v4854
        %4917 = vmatpush.msra.mxu0 %v4853
        %4918 = vmatmul.f32.gmra.mxu0 %v4894
        %v4919 = vpop.f32.mrf.mxu0
        %v4920 = vadd.f32 0.0, %v4919
        %4921 = vdwg.mxu0
        %4922 = vmatpush.msra.mxu0 %v4884
        %4923 = vmatpush.msra.mxu0 %v4883
        %4924 = vmatpush.msra.mxu0 %v4882
        %4925 = vmatpush.msra.mxu0 %v4881
        %4926 = vmatpush.msra.mxu0 %v4880
        %4927 = vmatpush.msra.mxu0 %v4879
        %4928 = vmatpush.msra.mxu0 %v4878
        %4929 = vmatpush.msra.mxu0 %v4877
        %4930 = vmatpush.msra.mxu0 %v4876
        %4931 = vmatpush.msra.mxu0 %v4875
        %4932 = vmatpush.msra.mxu0 %v4874
        %4933 = vmatpush.msra.mxu0 %v4873
        %4934 = vmatpush.msra.mxu0 %v4872
        %4935 = vmatpush.msra.mxu0 %v4871
        %4936 = vmatpush.msra.mxu0 %v4870
        %4937 = vmatpush.msra.mxu0 %v4869
        %4938 = vmatmul.f32.gmra.mxu0 %v4895
        %v4939 = vpop.f32.mrf.mxu0
        %v4940 = vadd.f32 %v4920, %v4939
        %4941 = vdwg.mxu0
        %4942 = vmatpush.msra.mxu0 0.0
        %4943 = vmatpush.msra.mxu0 0.0
        %4944 = vmatpush.msra.mxu0 0.0
        %4945 = vmatpush.msra.mxu0 0.0
        %4946 = vmatpush.msra.mxu0 0.0
        %4947 = vmatpush.msra.mxu0 0.0
        %4948 = vmatpush.msra.mxu0 0.0
        %4949 = vmatpush.msra.mxu0 0.0
        %4950 = vmatpush.msra.mxu0 %v4892
        %4951 = vmatpush.msra.mxu0 %v4891
        %4952 = vmatpush.msra.mxu0 %v4890
        %4953 = vmatpush.msra.mxu0 %v4889
        %4954 = vmatpush.msra.mxu0 %v4888
        %4955 = vmatpush.msra.mxu0 %v4887
        %4956 = vmatpush.msra.mxu0 %v4886
        %4957 = vmatpush.msra.mxu0 %v4885
        %4958 = vmatmul.f32.gmra.mxu0 %v4900
        %v4959 = vpop.f32.mrf.mxu0
        %v4960 = vadd.f32 %v4940, %v4959
        %4961 = vdwg.mxu0
        %v4962 = vadd.f32 %v4851, %v4960
        %s4963 = scalar_lea.vmem [#allocation3], 1
        %v4964 = vld [vmem:[%s4963] ss:$8 sm:$0x7]
        %s4965 = scalar_lea.vmem [#allocation21], 320
        %v4966 = vld [vmem:[%s4965] sm:$0xff]
        %v4967 = vld [vmem:[%s4965 + $0x8] sm:$0xff]
        %v4968 = vld [vmem:[%s4965 + $0x10] sm:$0xff]
        %v4969 = vld [vmem:[%s4965 + $0x18] sm:$0xff]
        %v4970 = vld [vmem:[%s4965 + $0x20] sm:$0xff]
        %v4971 = vld [vmem:[%s4965 + $0x28] sm:$0xff]
        %v4972 = vld [vmem:[%s4965 + $0x30] sm:$0xff]
        %v4973 = vld [vmem:[%s4965 + $0x38] sm:$0xff]
        %v4974 = vld [vmem:[%s4965 + $0x40] sm:$0xff]
        %v4975 = vld [vmem:[%s4965 + $0x48] sm:$0xff]
        %v4976 = vld [vmem:[%s4965 + $0x50] sm:$0xff]
        %v4977 = vld [vmem:[%s4965 + $0x58] sm:$0xff]
        %v4978 = vld [vmem:[%s4965 + $0x60] sm:$0xff]
        %v4979 = vld [vmem:[%s4965 + $0x68] sm:$0xff]
        %v4980 = vld [vmem:[%s4965 + $0x70] sm:$0xff]
        %v4981 = vld [vmem:[%s4965 + $0x78] sm:$0xff]
        %v4982 = vld [vmem:[%s4965 + $0x80] sm:$0xff]
        %v4983 = vld [vmem:[%s4965 + $0x88] sm:$0xff]
        %v4984 = vld [vmem:[%s4965 + $0x90] sm:$0xff]
        %v4985 = vld [vmem:[%s4965 + $0x98] sm:$0xff]
        %v4986 = vld [vmem:[%s4965 + $0xa0] sm:$0xff]
        %v4987 = vld [vmem:[%s4965 + $0xa8] sm:$0xff]
        %v4988 = vld [vmem:[%s4965 + $0xb0] sm:$0xff]
        %v4989 = vld [vmem:[%s4965 + $0xb8] sm:$0xff]
        %v4990 = vld [vmem:[%s4965 + $0xc0] sm:$0xff]
        %v4991 = vld [vmem:[%s4965 + $0xc8] sm:$0xff]
        %v4992 = vld [vmem:[%s4965 + $0xd0] sm:$0xff]
        %v4993 = vld [vmem:[%s4965 + $0xd8] sm:$0xff]
        %v4994 = vld [vmem:[%s4965 + $0xe0] sm:$0xff]
        %v4995 = vld [vmem:[%s4965 + $0xe8] sm:$0xff]
        %v4996 = vld [vmem:[%s4965 + $0xf0] sm:$0xff]
        %v4997 = vld [vmem:[%s4965 + $0xf8] sm:$0xff]
        %v4998 = vld [vmem:[%s4965 + $0x100] sm:$0xff]
        %v4999 = vld [vmem:[%s4965 + $0x108] sm:$0xff]
        %v5000 = vld [vmem:[%s4965 + $0x110] sm:$0xff]
        %v5001 = vld [vmem:[%s4965 + $0x118] sm:$0xff]
        %v5002 = vld [vmem:[%s4965 + $0x120] sm:$0xff]
        %v5003 = vld [vmem:[%s4965 + $0x128] sm:$0xff]
        %v5004 = vld [vmem:[%s4965 + $0x130] sm:$0xff]
        %v5005 = vld [vmem:[%s4965 + $0x138] sm:$0xff]
        %v5007 = vperm.slane %v4964, 0
        %v5008 = vperm.slane %v4964, 1
        %v5009 = vperm.slane %v4964, 2
        %v5012 = vsel %vm4899, %v5009, 0
        %5014 = vmatpush.msra.mxu0 %v4981
        %5015 = vmatpush.msra.mxu0 %v4980
        %5016 = vmatpush.msra.mxu0 %v4979
        %5017 = vmatpush.msra.mxu0 %v4978
        %5018 = vmatpush.msra.mxu0 %v4977
        %5019 = vmatpush.msra.mxu0 %v4976
        %5020 = vmatpush.msra.mxu0 %v4975
        %5021 = vmatpush.msra.mxu0 %v4974
        %5022 = vmatpush.msra.mxu0 %v4973
        %5023 = vmatpush.msra.mxu0 %v4972
        %5024 = vmatpush.msra.mxu0 %v4971
        %5025 = vmatpush.msra.mxu0 %v4970
        %5026 = vmatpush.msra.mxu0 %v4969
        %5027 = vmatpush.msra.mxu0 %v4968
        %5028 = vmatpush.msra.mxu0 %v4967
        %5029 = vmatpush.msra.mxu0 %v4966
        %5030 = vmatmul.f32.gmra.mxu0 %v5007
        %v5031 = vpop.f32.mrf.mxu0
        %v5032 = vadd.f32 0.0, %v5031
        %5033 = vdwg.mxu0
        %5034 = vmatpush.msra.mxu0 %v4997
        %5035 = vmatpush.msra.mxu0 %v4996
        %5036 = vmatpush.msra.mxu0 %v4995
        %5037 = vmatpush.msra.mxu0 %v4994
        %5038 = vmatpush.msra.mxu0 %v4993
        %5039 = vmatpush.msra.mxu0 %v4992
        %5040 = vmatpush.msra.mxu0 %v4991
        %5041 = vmatpush.msra.mxu0 %v4990
        %5042 = vmatpush.msra.mxu0 %v4989
        %5043 = vmatpush.msra.mxu0 %v4988
        %5044 = vmatpush.msra.mxu0 %v4987
        %5045 = vmatpush.msra.mxu0 %v4986
        %5046 = vmatpush.msra.mxu0 %v4985
        %5047 = vmatpush.msra.mxu0 %v4984
        %5048 = vmatpush.msra.mxu0 %v4983
        %5049 = vmatpush.msra.mxu0 %v4982
        %5050 = vmatmul.f32.gmra.mxu0 %v5008
        %v5051 = vpop.f32.mrf.mxu0
        %v5052 = vadd.f32 %v5032, %v5051
        %5053 = vdwg.mxu0
        %5054 = vmatpush.msra.mxu0 0.0
        %5055 = vmatpush.msra.mxu0 0.0
        %5056 = vmatpush.msra.mxu0 0.0
        %5057 = vmatpush.msra.mxu0 0.0
        %5058 = vmatpush.msra.mxu0 0.0
        %5059 = vmatpush.msra.mxu0 0.0
        %5060 = vmatpush.msra.mxu0 0.0
        %5061 = vmatpush.msra.mxu0 0.0
        %5062 = vmatpush.msra.mxu0 %v5005
        %5063 = vmatpush.msra.mxu0 %v5004
        %5064 = vmatpush.msra.mxu0 %v5003
        %5065 = vmatpush.msra.mxu0 %v5002
        %5066 = vmatpush.msra.mxu0 %v5001
        %5067 = vmatpush.msra.mxu0 %v5000
        %5068 = vmatpush.msra.mxu0 %v4999
        %5069 = vmatpush.msra.mxu0 %v4998
        %5070 = vmatmul.f32.gmra.mxu0 %v5012
        %v5071 = vpop.f32.mrf.mxu0
        %v5072 = vadd.f32 %v5052, %v5071
        %5073 = vdwg.mxu0
        %v5074 = vadd.f32 %v4962, %v5072
        %s5075 = scalar_lea.vmem [#allocation3], 2
        %v5076 = vld [vmem:[%s5075] ss:$8 sm:$0x7]
        %s5077 = scalar_lea.vmem [#allocation21], 640
        %v5078 = vld [vmem:[%s5077] sm:$0xff]
        %v5079 = vld [vmem:[%s5077 + $0x8] sm:$0xff]
        %v5080 = vld [vmem:[%s5077 + $0x10] sm:$0xff]
        %v5081 = vld [vmem:[%s5077 + $0x18] sm:$0xff]
        %v5082 = vld [vmem:[%s5077 + $0x20] sm:$0xff]
        %v5083 = vld [vmem:[%s5077 + $0x28] sm:$0xff]
        %v5084 = vld [vmem:[%s5077 + $0x30] sm:$0xff]
        %v5085 = vld [vmem:[%s5077 + $0x38] sm:$0xff]
        %v5086 = vld [vmem:[%s5077 + $0x40] sm:$0xff]
        %v5087 = vld [vmem:[%s5077 + $0x48] sm:$0xff]
        %v5088 = vld [vmem:[%s5077 + $0x50] sm:$0xff]
        %v5089 = vld [vmem:[%s5077 + $0x58] sm:$0xff]
        %v5090 = vld [vmem:[%s5077 + $0x60] sm:$0xff]
        %v5091 = vld [vmem:[%s5077 + $0x68] sm:$0xff]
        %v5092 = vld [vmem:[%s5077 + $0x70] sm:$0xff]
        %v5093 = vld [vmem:[%s5077 + $0x78] sm:$0xff]
        %v5094 = vld [vmem:[%s5077 + $0x80] sm:$0xff]
        %v5095 = vld [vmem:[%s5077 + $0x88] sm:$0xff]
        %v5096 = vld [vmem:[%s5077 + $0x90] sm:$0xff]
        %v5097 = vld [vmem:[%s5077 + $0x98] sm:$0xff]
        %v5098 = vld [vmem:[%s5077 + $0xa0] sm:$0xff]
        %v5099 = vld [vmem:[%s5077 + $0xa8] sm:$0xff]
        %v5100 = vld [vmem:[%s5077 + $0xb0] sm:$0xff]
        %v5101 = vld [vmem:[%s5077 + $0xb8] sm:$0xff]
        %v5102 = vld [vmem:[%s5077 + $0xc0] sm:$0xff]
        %v5103 = vld [vmem:[%s5077 + $0xc8] sm:$0xff]
        %v5104 = vld [vmem:[%s5077 + $0xd0] sm:$0xff]
        %v5105 = vld [vmem:[%s5077 + $0xd8] sm:$0xff]
        %v5106 = vld [vmem:[%s5077 + $0xe0] sm:$0xff]
        %v5107 = vld [vmem:[%s5077 + $0xe8] sm:$0xff]
        %v5108 = vld [vmem:[%s5077 + $0xf0] sm:$0xff]
        %v5109 = vld [vmem:[%s5077 + $0xf8] sm:$0xff]
        %v5110 = vld [vmem:[%s5077 + $0x100] sm:$0xff]
        %v5111 = vld [vmem:[%s5077 + $0x108] sm:$0xff]
        %v5112 = vld [vmem:[%s5077 + $0x110] sm:$0xff]
        %v5113 = vld [vmem:[%s5077 + $0x118] sm:$0xff]
        %v5114 = vld [vmem:[%s5077 + $0x120] sm:$0xff]
        %v5115 = vld [vmem:[%s5077 + $0x128] sm:$0xff]
        %v5116 = vld [vmem:[%s5077 + $0x130] sm:$0xff]
        %v5117 = vld [vmem:[%s5077 + $0x138] sm:$0xff]
        %v5119 = vperm.slane %v5076, 0
        %v5120 = vperm.slane %v5076, 1
        %v5121 = vperm.slane %v5076, 2
        %v5124 = vsel %vm4899, %v5121, 0
        %5126 = vmatpush.msra.mxu0 %v5093
        %5127 = vmatpush.msra.mxu0 %v5092
        %5128 = vmatpush.msra.mxu0 %v5091
        %5129 = vmatpush.msra.mxu0 %v5090
        %5130 = vmatpush.msra.mxu0 %v5089
        %5131 = vmatpush.msra.mxu0 %v5088
        %5132 = vmatpush.msra.mxu0 %v5087
        %5133 = vmatpush.msra.mxu0 %v5086
        %5134 = vmatpush.msra.mxu0 %v5085
        %5135 = vmatpush.msra.mxu0 %v5084
        %5136 = vmatpush.msra.mxu0 %v5083
        %5137 = vmatpush.msra.mxu0 %v5082
        %5138 = vmatpush.msra.mxu0 %v5081
        %5139 = vmatpush.msra.mxu0 %v5080
        %5140 = vmatpush.msra.mxu0 %v5079
        %5141 = vmatpush.msra.mxu0 %v5078
        %5142 = vmatmul.f32.gmra.mxu0 %v5119
        %v5143 = vpop.f32.mrf.mxu0
        %v5144 = vadd.f32 0.0, %v5143
        %5145 = vdwg.mxu0
        %5146 = vmatpush.msra.mxu0 %v5109
        %5147 = vmatpush.msra.mxu0 %v5108
        %5148 = vmatpush.msra.mxu0 %v5107
        %5149 = vmatpush.msra.mxu0 %v5106
        %5150 = vmatpush.msra.mxu0 %v5105
        %5151 = vmatpush.msra.mxu0 %v5104
        %5152 = vmatpush.msra.mxu0 %v5103
        %5153 = vmatpush.msra.mxu0 %v5102
        %5154 = vmatpush.msra.mxu0 %v5101
        %5155 = vmatpush.msra.mxu0 %v5100
        %5156 = vmatpush.msra.mxu0 %v5099
        %5157 = vmatpush.msra.mxu0 %v5098
        %5158 = vmatpush.msra.mxu0 %v5097
        %5159 = vmatpush.msra.mxu0 %v5096
        %5160 = vmatpush.msra.mxu0 %v5095
        %5161 = vmatpush.msra.mxu0 %v5094
        %5162 = vmatmul.f32.gmra.mxu0 %v5120
        %v5163 = vpop.f32.mrf.mxu0
        %v5164 = vadd.f32 %v5144, %v5163
        %5165 = vdwg.mxu0
        %5166 = vmatpush.msra.mxu0 0.0
        %5167 = vmatpush.msra.mxu0 0.0
        %5168 = vmatpush.msra.mxu0 0.0
        %5169 = vmatpush.msra.mxu0 0.0
        %5170 = vmatpush.msra.mxu0 0.0
        %5171 = vmatpush.msra.mxu0 0.0
        %5172 = vmatpush.msra.mxu0 0.0
        %5173 = vmatpush.msra.mxu0 0.0
        %5174 = vmatpush.msra.mxu0 %v5117
        %5175 = vmatpush.msra.mxu0 %v5116
        %5176 = vmatpush.msra.mxu0 %v5115
        %5177 = vmatpush.msra.mxu0 %v5114
        %5178 = vmatpush.msra.mxu0 %v5113
        %5179 = vmatpush.msra.mxu0 %v5112
        %5180 = vmatpush.msra.mxu0 %v5111
        %5181 = vmatpush.msra.mxu0 %v5110
        %5182 = vmatmul.f32.gmra.mxu0 %v5124
        %v5183 = vpop.f32.mrf.mxu0
        %v5184 = vadd.f32 %v5164, %v5183
        %5185 = vdwg.mxu0
        %v5186 = vadd.f32 %v5074, %v5184
        %s5187 = scalar_lea.vmem [#allocation3], 3
        %v5188 = vld [vmem:[%s5187] ss:$8 sm:$0x7]
        %s5189 = scalar_lea.vmem [#allocation21], 960
        %v5190 = vld [vmem:[%s5189] sm:$0xff]
        %v5191 = vld [vmem:[%s5189 + $0x8] sm:$0xff]
        %v5192 = vld [vmem:[%s5189 + $0x10] sm:$0xff]
        %v5193 = vld [vmem:[%s5189 + $0x18] sm:$0xff]
        %v5194 = vld [vmem:[%s5189 + $0x20] sm:$0xff]
        %v5195 = vld [vmem:[%s5189 + $0x28] sm:$0xff]
        %v5196 = vld [vmem:[%s5189 + $0x30] sm:$0xff]
        %v5197 = vld [vmem:[%s5189 + $0x38] sm:$0xff]
        %v5198 = vld [vmem:[%s5189 + $0x40] sm:$0xff]
        %v5199 = vld [vmem:[%s5189 + $0x48] sm:$0xff]
        %v5200 = vld [vmem:[%s5189 + $0x50] sm:$0xff]
        %v5201 = vld [vmem:[%s5189 + $0x58] sm:$0xff]
        %v5202 = vld [vmem:[%s5189 + $0x60] sm:$0xff]
        %v5203 = vld [vmem:[%s5189 + $0x68] sm:$0xff]
        %v5204 = vld [vmem:[%s5189 + $0x70] sm:$0xff]
        %v5205 = vld [vmem:[%s5189 + $0x78] sm:$0xff]
        %v5206 = vld [vmem:[%s5189 + $0x80] sm:$0xff]
        %v5207 = vld [vmem:[%s5189 + $0x88] sm:$0xff]
        %v5208 = vld [vmem:[%s5189 + $0x90] sm:$0xff]
        %v5209 = vld [vmem:[%s5189 + $0x98] sm:$0xff]
        %v5210 = vld [vmem:[%s5189 + $0xa0] sm:$0xff]
        %v5211 = vld [vmem:[%s5189 + $0xa8] sm:$0xff]
        %v5212 = vld [vmem:[%s5189 + $0xb0] sm:$0xff]
        %v5213 = vld [vmem:[%s5189 + $0xb8] sm:$0xff]
        %v5214 = vld [vmem:[%s5189 + $0xc0] sm:$0xff]
        %v5215 = vld [vmem:[%s5189 + $0xc8] sm:$0xff]
        %v5216 = vld [vmem:[%s5189 + $0xd0] sm:$0xff]
        %v5217 = vld [vmem:[%s5189 + $0xd8] sm:$0xff]
        %v5218 = vld [vmem:[%s5189 + $0xe0] sm:$0xff]
        %v5219 = vld [vmem:[%s5189 + $0xe8] sm:$0xff]
        %v5220 = vld [vmem:[%s5189 + $0xf0] sm:$0xff]
        %v5221 = vld [vmem:[%s5189 + $0xf8] sm:$0xff]
        %v5222 = vld [vmem:[%s5189 + $0x100] sm:$0xff]
        %v5223 = vld [vmem:[%s5189 + $0x108] sm:$0xff]
        %v5224 = vld [vmem:[%s5189 + $0x110] sm:$0xff]
        %v5225 = vld [vmem:[%s5189 + $0x118] sm:$0xff]
        %v5226 = vld [vmem:[%s5189 + $0x120] sm:$0xff]
        %v5227 = vld [vmem:[%s5189 + $0x128] sm:$0xff]
        %v5228 = vld [vmem:[%s5189 + $0x130] sm:$0xff]
        %v5229 = vld [vmem:[%s5189 + $0x138] sm:$0xff]
        %v5231 = vperm.slane %v5188, 0
        %v5232 = vperm.slane %v5188, 1
        %v5233 = vperm.slane %v5188, 2
        %v5236 = vsel %vm4899, %v5233, 0
        %5238 = vmatpush.msra.mxu0 %v5205
        %5239 = vmatpush.msra.mxu0 %v5204
        %5240 = vmatpush.msra.mxu0 %v5203
        %5241 = vmatpush.msra.mxu0 %v5202
        %5242 = vmatpush.msra.mxu0 %v5201
        %5243 = vmatpush.msra.mxu0 %v5200
        %5244 = vmatpush.msra.mxu0 %v5199
        %5245 = vmatpush.msra.mxu0 %v5198
        %5246 = vmatpush.msra.mxu0 %v5197
        %5247 = vmatpush.msra.mxu0 %v5196
        %5248 = vmatpush.msra.mxu0 %v5195
        %5249 = vmatpush.msra.mxu0 %v5194
        %5250 = vmatpush.msra.mxu0 %v5193
        %5251 = vmatpush.msra.mxu0 %v5192
        %5252 = vmatpush.msra.mxu0 %v5191
        %5253 = vmatpush.msra.mxu0 %v5190
        %5254 = vmatmul.f32.gmra.mxu0 %v5231
        %v5255 = vpop.f32.mrf.mxu0
        %v5256 = vadd.f32 0.0, %v5255
        %5257 = vdwg.mxu0
        %5258 = vmatpush.msra.mxu0 %v5221
        %5259 = vmatpush.msra.mxu0 %v5220
        %5260 = vmatpush.msra.mxu0 %v5219
        %5261 = vmatpush.msra.mxu0 %v5218
        %5262 = vmatpush.msra.mxu0 %v5217
        %5263 = vmatpush.msra.mxu0 %v5216
        %5264 = vmatpush.msra.mxu0 %v5215
        %5265 = vmatpush.msra.mxu0 %v5214
        %5266 = vmatpush.msra.mxu0 %v5213
        %5267 = vmatpush.msra.mxu0 %v5212
        %5268 = vmatpush.msra.mxu0 %v5211
        %5269 = vmatpush.msra.mxu0 %v5210
        %5270 = vmatpush.msra.mxu0 %v5209
        %5271 = vmatpush.msra.mxu0 %v5208
        %5272 = vmatpush.msra.mxu0 %v5207
        %5273 = vmatpush.msra.mxu0 %v5206
        %5274 = vmatmul.f32.gmra.mxu0 %v5232
        %v5275 = vpop.f32.mrf.mxu0
        %v5276 = vadd.f32 %v5256, %v5275
        %5277 = vdwg.mxu0
        %5278 = vmatpush.msra.mxu0 0.0
        %5279 = vmatpush.msra.mxu0 0.0
        %5280 = vmatpush.msra.mxu0 0.0
        %5281 = vmatpush.msra.mxu0 0.0
        %5282 = vmatpush.msra.mxu0 0.0
        %5283 = vmatpush.msra.mxu0 0.0
        %5284 = vmatpush.msra.mxu0 0.0
        %5285 = vmatpush.msra.mxu0 0.0
        %5286 = vmatpush.msra.mxu0 %v5229
        %5287 = vmatpush.msra.mxu0 %v5228
        %5288 = vmatpush.msra.mxu0 %v5227
        %5289 = vmatpush.msra.mxu0 %v5226
        %5290 = vmatpush.msra.mxu0 %v5225
        %5291 = vmatpush.msra.mxu0 %v5224
        %5292 = vmatpush.msra.mxu0 %v5223
        %5293 = vmatpush.msra.mxu0 %v5222
        %5294 = vmatmul.f32.gmra.mxu0 %v5236
        %v5295 = vpop.f32.mrf.mxu0
        %v5296 = vadd.f32 %v5276, %v5295
        %5297 = vdwg.mxu0
        %v5298 = vadd.f32 %v5186, %v5296
        %s5299 = scalar_lea.vmem [#allocation3], 4
        %v5300 = vld [vmem:[%s5299] ss:$8 sm:$0x7]
        %s5301 = scalar_lea.vmem [#allocation21], 1280
        %v5302 = vld [vmem:[%s5301] sm:$0xff]
        %v5303 = vld [vmem:[%s5301 + $0x8] sm:$0xff]
        %v5304 = vld [vmem:[%s5301 + $0x10] sm:$0xff]
        %v5305 = vld [vmem:[%s5301 + $0x18] sm:$0xff]
        %v5306 = vld [vmem:[%s5301 + $0x20] sm:$0xff]
        %v5307 = vld [vmem:[%s5301 + $0x28] sm:$0xff]
        %v5308 = vld [vmem:[%s5301 + $0x30] sm:$0xff]
        %v5309 = vld [vmem:[%s5301 + $0x38] sm:$0xff]
        %v5310 = vld [vmem:[%s5301 + $0x40] sm:$0xff]
        %v5311 = vld [vmem:[%s5301 + $0x48] sm:$0xff]
        %v5312 = vld [vmem:[%s5301 + $0x50] sm:$0xff]
        %v5313 = vld [vmem:[%s5301 + $0x58] sm:$0xff]
        %v5314 = vld [vmem:[%s5301 + $0x60] sm:$0xff]
        %v5315 = vld [vmem:[%s5301 + $0x68] sm:$0xff]
        %v5316 = vld [vmem:[%s5301 + $0x70] sm:$0xff]
        %v5317 = vld [vmem:[%s5301 + $0x78] sm:$0xff]
        %v5318 = vld [vmem:[%s5301 + $0x80] sm:$0xff]
        %v5319 = vld [vmem:[%s5301 + $0x88] sm:$0xff]
        %v5320 = vld [vmem:[%s5301 + $0x90] sm:$0xff]
        %v5321 = vld [vmem:[%s5301 + $0x98] sm:$0xff]
        %v5322 = vld [vmem:[%s5301 + $0xa0] sm:$0xff]
        %v5323 = vld [vmem:[%s5301 + $0xa8] sm:$0xff]
        %v5324 = vld [vmem:[%s5301 + $0xb0] sm:$0xff]
        %v5325 = vld [vmem:[%s5301 + $0xb8] sm:$0xff]
        %v5326 = vld [vmem:[%s5301 + $0xc0] sm:$0xff]
        %v5327 = vld [vmem:[%s5301 + $0xc8] sm:$0xff]
        %v5328 = vld [vmem:[%s5301 + $0xd0] sm:$0xff]
        %v5329 = vld [vmem:[%s5301 + $0xd8] sm:$0xff]
        %v5330 = vld [vmem:[%s5301 + $0xe0] sm:$0xff]
        %v5331 = vld [vmem:[%s5301 + $0xe8] sm:$0xff]
        %v5332 = vld [vmem:[%s5301 + $0xf0] sm:$0xff]
        %v5333 = vld [vmem:[%s5301 + $0xf8] sm:$0xff]
        %v5334 = vld [vmem:[%s5301 + $0x100] sm:$0xff]
        %v5335 = vld [vmem:[%s5301 + $0x108] sm:$0xff]
        %v5336 = vld [vmem:[%s5301 + $0x110] sm:$0xff]
        %v5337 = vld [vmem:[%s5301 + $0x118] sm:$0xff]
        %v5338 = vld [vmem:[%s5301 + $0x120] sm:$0xff]
        %v5339 = vld [vmem:[%s5301 + $0x128] sm:$0xff]
        %v5340 = vld [vmem:[%s5301 + $0x130] sm:$0xff]
        %v5341 = vld [vmem:[%s5301 + $0x138] sm:$0xff]
        %v5343 = vperm.slane %v5300, 0
        %v5344 = vperm.slane %v5300, 1
        %v5345 = vperm.slane %v5300, 2
        %v5348 = vsel %vm4899, %v5345, 0
        %5350 = vmatpush.msra.mxu0 %v5317
        %5351 = vmatpush.msra.mxu0 %v5316
        %5352 = vmatpush.msra.mxu0 %v5315
        %5353 = vmatpush.msra.mxu0 %v5314
        %5354 = vmatpush.msra.mxu0 %v5313
        %5355 = vmatpush.msra.mxu0 %v5312
        %5356 = vmatpush.msra.mxu0 %v5311
        %5357 = vmatpush.msra.mxu0 %v5310
        %5358 = vmatpush.msra.mxu0 %v5309
        %5359 = vmatpush.msra.mxu0 %v5308
        %5360 = vmatpush.msra.mxu0 %v5307
        %5361 = vmatpush.msra.mxu0 %v5306
        %5362 = vmatpush.msra.mxu0 %v5305
        %5363 = vmatpush.msra.mxu0 %v5304
        %5364 = vmatpush.msra.mxu0 %v5303
        %5365 = vmatpush.msra.mxu0 %v5302
        %5366 = vmatmul.f32.gmra.mxu0 %v5343
        %v5367 = vpop.f32.mrf.mxu0
        %v5368 = vadd.f32 0.0, %v5367
        %5369 = vdwg.mxu0
        %5370 = vmatpush.msra.mxu0 %v5333
        %5371 = vmatpush.msra.mxu0 %v5332
        %5372 = vmatpush.msra.mxu0 %v5331
        %5373 = vmatpush.msra.mxu0 %v5330
        %5374 = vmatpush.msra.mxu0 %v5329
        %5375 = vmatpush.msra.mxu0 %v5328
        %5376 = vmatpush.msra.mxu0 %v5327
        %5377 = vmatpush.msra.mxu0 %v5326
        %5378 = vmatpush.msra.mxu0 %v5325
        %5379 = vmatpush.msra.mxu0 %v5324
        %5380 = vmatpush.msra.mxu0 %v5323
        %5381 = vmatpush.msra.mxu0 %v5322
        %5382 = vmatpush.msra.mxu0 %v5321
        %5383 = vmatpush.msra.mxu0 %v5320
        %5384 = vmatpush.msra.mxu0 %v5319
        %5385 = vmatpush.msra.mxu0 %v5318
        %5386 = vmatmul.f32.gmra.mxu0 %v5344
        %v5387 = vpop.f32.mrf.mxu0
        %v5388 = vadd.f32 %v5368, %v5387
        %5389 = vdwg.mxu0
        %5390 = vmatpush.msra.mxu0 0.0
        %5391 = vmatpush.msra.mxu0 0.0
        %5392 = vmatpush.msra.mxu0 0.0
        %5393 = vmatpush.msra.mxu0 0.0
        %5394 = vmatpush.msra.mxu0 0.0
        %5395 = vmatpush.msra.mxu0 0.0
        %5396 = vmatpush.msra.mxu0 0.0
        %5397 = vmatpush.msra.mxu0 0.0
        %5398 = vmatpush.msra.mxu0 %v5341
        %5399 = vmatpush.msra.mxu0 %v5340
        %5400 = vmatpush.msra.mxu0 %v5339
        %5401 = vmatpush.msra.mxu0 %v5338
        %5402 = vmatpush.msra.mxu0 %v5337
        %5403 = vmatpush.msra.mxu0 %v5336
        %5404 = vmatpush.msra.mxu0 %v5335
        %5405 = vmatpush.msra.mxu0 %v5334
        %5406 = vmatmul.f32.gmra.mxu0 %v5348
        %v5407 = vpop.f32.mrf.mxu0
        %v5408 = vadd.f32 %v5388, %v5407
        %5409 = vdwg.mxu0
        %v5410 = vadd.f32 %v5298, %v5408
        %v5411 = vmax.f32 %v5410, 0.0
        %v5412 = vld [vmem:[%s13] sm:$0xff]
        %v5413 = vld [vmem:[%s13 + $0x8] sm:$0xff]
        %v5414 = vld [vmem:[%s13 + $0x10] sm:$0xff]
        %v5415 = vld [vmem:[%s13 + $0x18] sm:$0xff]
        %v5416 = vld [vmem:[%s13 + $0x20] sm:$0xff]
        %v5417 = vld [vmem:[%s13 + $0x28] sm:$0xff]
        %v5418 = vld [vmem:[%s13 + $0x30] sm:$0xff]
        %v5419 = vld [vmem:[%s13 + $0x38] sm:$0xff]
        %v5420 = vld [vmem:[%s13 + $0x40] sm:$0xff]
        %v5421 = vld [vmem:[%s13 + $0x48] sm:$0xff]
        %v5422 = vld [vmem:[%s13 + $0x50] sm:$0xff]
        %v5423 = vld [vmem:[%s13 + $0x58] sm:$0xff]
        %v5424 = vld [vmem:[%s13 + $0x60] sm:$0xff]
        %v5425 = vld [vmem:[%s13 + $0x68] sm:$0xff]
        %v5426 = vld [vmem:[%s13 + $0x70] sm:$0xff]
        %v5427 = vld [vmem:[%s13 + $0x78] sm:$0xff]
        %v5428 = vld [vmem:[#allocation24] sm:$0x1]
        %5429 = vmatpush.msra.mxu0 %v5427
        %5430 = vmatpush.msra.mxu0 %v5426
        %5431 = vmatpush.msra.mxu0 %v5425
        %5432 = vmatpush.msra.mxu0 %v5424
        %5433 = vmatpush.msra.mxu0 %v5423
        %5434 = vmatpush.msra.mxu0 %v5422
        %5435 = vmatpush.msra.mxu0 %v5421
        %5436 = vmatpush.msra.mxu0 %v5420
        %5437 = vmatpush.msra.mxu0 %v5419
        %5438 = vmatpush.msra.mxu0 %v5418
        %5439 = vmatpush.msra.mxu0 %v5417
        %5440 = vmatpush.msra.mxu0 %v5416
        %5441 = vmatpush.msra.mxu0 %v5415
        %5442 = vmatpush.msra.mxu0 %v5414
        %5443 = vmatpush.msra.mxu0 %v5413
        %5444 = vmatpush.msra.mxu0 %v5412
        %5445 = vmatmul.f32.gmra.mxu0 %v5411
        %v5446 = vpop.f32.mrf.mxu0
        %v5447 = vadd.f32 %v5428, %v5446
        %5448 = vdwg.mxu0
        %vm5449 = vcmask 73728
        %5450 = vst.msk [vmem:[%s689] sm:$0x1] %vm5449, %v5447
        %s5451 = sand.u32 %s364, 1
        %s5452 = scalar_lea.sflag [#allocation6], %s5451
        %s5453 = sand.u32 %s364, 1
        %s5454 = scalar_lea.vmem [#allocation25], %s5453
        // Predicated region
        $region133: #{mnist_net_forward.1} parent=79 // pred_check
          %p5455 = pneg %p374
        $region134: #{mnist_net_forward.1} parent=79 // pred_check_branch
          %5457 = sbr.rel (%p5455) target = $region136
        $region135: #{mnist_net_forward.1} parent=79 // pred_region
          %5459 = vsyncadd %s5452, 0
          %s5460 = scalar_lea.hbm %s15, %s36
          %s5462 = sshll.u32 %s5454, 4
          %s5463 = int_to_ptr.vmem [resolvable:$true] %s5462
          %s5464 = sshll.u32 %s5460, 4
          %s5465 = int_to_ptr.hbm [resolvable:$true] %s5464
          %5467 = dma.vmem_to_hbm [thread:$0]  %s5463, 16, %s5465, %s5452
        $region136: #{mnist_net_forward.1} parent=79 // pred_fallthru
          _
      $region80: #{mnist_net_forward.1} parent=5 // pred_fallthru
        _
      %p5468 = scmp.le.s32.totalorder 2, %s31
      // Predicated region
      $region137: #{mnist_net_forward.1} parent=5 // pred_check
        %p5469 = pneg %p5468
      $region138: #{mnist_net_forward.1} parent=5 // pred_check_branch
        %5471 = sbr.rel (%p5469) target = $region140
      $region139: #{mnist_net_forward.1} parent=5 // pred_region
        %s5472 = ssub.s32 %s31, 2
        // Predicated region
        $region141: #{mnist_net_forward.1} parent=139 // pred_check
          %p5473 = pneg %p380
        $region142: #{mnist_net_forward.1} parent=139 // pred_check_branch
          %5475 = sbr.rel (%p5473) target = $region144
        $region143: #{mnist_net_forward.1} parent=139 // pred_region
          %s5476 = sand.u32 %s365, 1
          %s5477 = scalar_lea.sflag [#allocation6], %s5476
          %s5478 = sand.u32 %s365, 1
          %s5479 = scalar_lea.vmem [#allocation25], %s5478
          %5481 = dma.done %s5477, 16
        $region144: #{mnist_net_forward.1} parent=139 // pred_fallthru
          _
      $region140: #{mnist_net_forward.1} parent=5 // pred_fallthru
        _
    $region6: #{mnist_net_forward.1} parent=1 // loop_footer
      %s35 = sadd.s32 1, %s31
    $region7: #{mnist_net_forward.1} parent=1 // loop_footer_branch
      %30 = sbr.rel target = $region3
    $region8: #{mnist_net_forward.1} parent=1 // loop_exit
      _
    %5482 = vsyncpa [#allocation5], 1
    %s5483 = scalar_lea.sflag [#allocation5], 1
    %5484 = vsyncpa %s5483, 1
    %5485 = vsyncpa [#allocation8], 1
    %5486 = vsyncpa [#allocation11], 1
    %5487 = vsyncpa [#allocation14], 1
    %5488 = vsyncpa [#allocation17], 1
    %5489 = vsyncpa [#allocation20], 1
    %5490 = vsyncpa [#allocation23], 1
    %5491 = vsyncpa [#allocation6], 1
    %s5492 = scalar_lea.sflag [#allocation6], 1
    %5493 = vsyncpa %s5492, 1

</llo_original>
